<compile_context>
chip_gen: v7x
topology: tpu7x:2x2x1
jax: 0.10.0
libtpu: 0.0.40
codegen_flags: <defaults>
</compile_context>

<pallas_src>
import jax
import jax.numpy as jnp
import numpy as np
from jax.experimental import pallas as pl
from jax.experimental.pallas import tpu as pltpu

EPS = 1e-5
MXU_DTYPE = jnp.bfloat16      # MXU operand dtype (f32 accumulation via preferred_element_type)
ACT_DTYPE = jnp.bfloat16      # inter-stage activation slabs in HBM
VMEM_LIMIT = 40 * 1024 * 1024 # leaves headroom on v7x's 64 MiB VMEM per TC


def _round_up(x, m):
    return (x + m - 1) // m * m


def _pick_row_tile(nhw, max_tile=2048):
    """Largest multiple-of-8 divisor of nhw that is <= max_tile."""
    if nhw % 8 != 0:
        # TODO(synk): pad NHW and mask padded rows out of the BN statistics.
        return nhw
    best = 8
    d = 8
    lim = min(nhw, max_tile)
    while d <= lim:
        if nhw % d == 0:
            best = d
        d += 8
    return best


def _compiler_params():
    return pltpu.CompilerParams(
        dimension_semantics=("parallel",),
        vmem_limit_bytes=VMEM_LIMIT)


# ----------------------------------------------------------------------------
# Kernels
# ----------------------------------------------------------------------------
def _conv1_kernel(x_ref, w_ref, y_ref, st_ref):
    """conv1 (1x1 == channel matmul, bf16 MXU operands) + bn1 partial stats."""
    y = jnp.dot(x_ref[...].astype(MXU_DTYPE), w_ref[...],
                preferred_element_type=jnp.float32)
    y_ref[...] = y.astype(y_ref.dtype)
    st_ref[...] = jnp.concatenate(
        [jnp.sum(y, axis=0, keepdims=True),
         jnp.sum(y * y, axis=0, keepdims=True)], axis=0)


def _bn_conv1x1_kernel(y_in_ref, scale_ref, bias_ref, w_ref, y_ref, st_ref):
    """Folded BN (f32) + ReLU, 1x1 conv (bf16 MXU operands), + partial stats."""
    a = jnp.maximum(
        y_in_ref[...].astype(jnp.float32) * scale_ref[...] + bias_ref[...], 0.0)
    y = jnp.dot(a.astype(MXU_DTYPE), w_ref[...],
                preferred_element_type=jnp.float32)
    y_ref[...] = y.astype(y_ref.dtype)
    st_ref[...] = jnp.concatenate(
        [jnp.sum(y, axis=0, keepdims=True),
         jnp.sum(y * y, axis=0, keepdims=True)], axis=0)


def _make_conv2_kernel(H, W, C):
    """bn1(fold)+relu, 3x3 conv via im2col-lite scratch + 3 fat matmuls, bn2 stats."""
    HW = H * W

    def kernel(y1_ref, scale_ref, bias_ref, w2_ref, y2_ref, st_ref, cols_ref):
        # Folded bn1 + relu in f32 (rsqrt folded outside the kernel).
        a = jnp.maximum(
            y1_ref[...].astype(jnp.float32) * scale_ref[...] + bias_ref[...], 0.0)
        a = a.astype(cols_ref.dtype)                      # (H, W, C) bf16

        # Zero only the 1-wide halo border (interior fully overwritten below).
        zrow = jnp.zeros((1, W, 3 * C), cols_ref.dtype)
        zcol = jnp.zeros((H, 1, C), cols_ref.dtype)
        cols_ref[0:1, :, :] = zrow
        cols_ref[H + 1:H + 2, :, :] = zrow
        cols_ref[1:H + 1, 0:1, 0:C] = zcol
        cols_ref[1:H + 1, W - 1:W, 2 * C:3 * C] = zcol

        # im2col-lite: lane block kw holds `a` shifted by (kw-1) along W; rows
        # are shifted down by 1 so rows 0 / H+1 act as the zero padding.
        cols_ref[1:H + 1, 1:W,     0:C]         = a[:, 0:W - 1, :]
        cols_ref[1:H + 1, :,       C:2 * C]     = a
        cols_ref[1:H + 1, 0:W - 1, 2 * C:3 * C] = a[:, 1:W, :]

        # 3x3 conv = 3 fat matmuls with K = 3*C; kh slices only the leading
        # (non-tiled) dim of the scratch -- no rolls, no masks, no concatenate.
        acc = jnp.zeros((HW, C), jnp.float32)
        for kh in range(3):
            cat = cols_ref[kh:kh + H, :, :].reshape(HW, 3 * C)
            acc = acc + jnp.dot(cat, w2_ref[kh],
                                preferred_element_type=jnp.float32)

        y2_ref[...] = acc.reshape(H, W, C).astype(y2_ref.dtype)
        st_ref[...] = jnp.concatenate(
            [jnp.sum(acc, axis=0, keepdims=True),
             jnp.sum(acc * acc, axis=0, keepdims=True)], axis=0)

    return kernel


def _residual_kernel(y3_ref, x_ref, scale_ref, bias_ref, o_ref):
    """Folded bn3 (f32) + identity residual + final ReLU."""
    o_ref[...] = jnp.maximum(
        y3_ref[...].astype(jnp.float32) * scale_ref[...] + bias_ref[...]
        + x_ref[...], 0.0)


# ----------------------------------------------------------------------------
# Wrapper
# ----------------------------------------------------------------------------
def _fold_bn(stats, gamma, beta, count):
    """Per-channel scale/bias from grid-accumulated (sum, sumsq) partials."""
    s = jnp.sum(stats[:, 0, :], axis=0)
    sq = jnp.sum(stats[:, 1, :], axis=0)
    mean = s / count
    var = jnp.maximum(sq / count - mean * mean, 0.0)
    scale = gamma * jax.lax.rsqrt(var + EPS)
    bias = beta - mean * scale
    return scale.reshape(1, -1), bias.reshape(1, -1)


def bottleneck_forward(x_nchw, params):
    N, Cin, H, W = x_nchw.shape
    P = params["w1"].shape[0]
    Cout = params["w3"].shape[0]
    assert Cout == Cin, "downsample=None requires in_planes == expansion*planes"

    Cp = _round_up(Cin, 128)          # lane-dense channel padding
    Pp = _round_up(P, 128)
    NHW = N * H * W
    TR = _pick_row_tile(NHW)
    nt = NHW // TR
    f32 = jnp.float32

    # NCHW -> NHWC -> [NHW, Cp] (channels on the lane axis); residual path f32.
    x2d = jnp.transpose(x_nchw, (0, 2, 3, 1)).reshape(NHW, Cin).astype(f32)
    x2d = jnp.pad(x2d, ((0, 0), (0, Cp - Cin)))

    # PyTorch OIHW conv weights -> matmul layout, channel-padded, bf16.
    w1 = jnp.pad(jnp.transpose(params["w1"][:, :, 0, 0]),
                 ((0, Cp - Cin), (0, Pp - P))).astype(MXU_DTYPE)      # [Cp, Pp]
    w2 = jnp.transpose(params["w2"], (2, 3, 1, 0))                    # [kh,kw,I,O]
    w2 = jnp.pad(w2, ((0, 0), (0, 0), (0, Pp - P), (0, Pp - P)))
    w2 = w2.reshape(3, 3 * Pp, Pp).astype(MXU_DTYPE)                  # [3, 3Pp, Pp]
    w3 = jnp.pad(jnp.transpose(params["w3"][:, :, 0, 0]),
                 ((0, Pp - P), (0, Cp - Cout))).astype(MXU_DTYPE)     # [Pp, Cp]

    def pad_gb(g, b, cpad):
        return (jnp.pad(g, (0, cpad - g.shape[0]), constant_values=1.0),
                jnp.pad(b, (0, cpad - b.shape[0])))

    g1, b1 = pad_gb(params["g1"], params["b1"], Pp)
    g2, b2 = pad_gb(params["g2"], params["b2"], Pp)
    g3, b3 = pad_gb(params["g3"], params["b3"], Cp)

    cp = _compiler_params()

    # ---- stage 1: conv1 (1x1) + bn1 partial statistics ----------------------
    y1, st1 = pl.pallas_call(
        _conv1_kernel,
        grid=(nt,),
        in_specs=[pl.BlockSpec((TR, Cp), lambda i: (i, 0)),
                  pl.BlockSpec((Cp, Pp), lambda i: (0, 0))],
        out_specs=[pl.BlockSpec((TR, Pp), lambda i: (i, 0)),
                   pl.BlockSpec((None, 2, Pp), lambda i: (i, 0, 0))],
        out_shape=[jax.ShapeDtypeStruct((NHW, Pp), ACT_DTYPE),
                   jax.ShapeDtypeStruct((nt, 2, Pp), f32)],
        compiler_params=cp,
        cost_estimate=pl.CostEstimate(
            flops=2 * NHW * Cp * Pp, transcendentals=0,
            bytes_accessed=4 * NHW * Cp + 2 * NHW * Pp + 2 * Cp * Pp),
    )(x2d, w1)
    s1, o1 = _fold_bn(st1, g1, b1, NHW)

    # ---- stage 2: bn1+relu, conv2 (3x3 im2col-lite + fat matmuls), bn2 stats -
    y2, st2 = pl.pallas_call(
        _make_conv2_kernel(H, W, Pp),
        grid=(N,),
        in_specs=[pl.BlockSpec((None, H, W, Pp), lambda n: (n, 0, 0, 0)),
                  pl.BlockSpec((1, Pp), lambda n: (0, 0)),
                  pl.BlockSpec((1, Pp), lambda n: (0, 0)),
                  pl.BlockSpec((3, 3 * Pp, Pp), lambda n: (0, 0, 0))],
        out_specs=[pl.BlockSpec((None, H, W, Pp), lambda n: (n, 0, 0, 0)),
                   pl.BlockSpec((None, 2, Pp), lambda n: (n, 0, 0))],
        out_shape=[jax.ShapeDtypeStruct((N, H, W, Pp), ACT_DTYPE),
                   jax.ShapeDtypeStruct((N, 2, Pp), f32)],
        scratch_shapes=[pltpu.VMEM((H + 2, W, 3 * Pp), MXU_DTYPE)],
        compiler_params=cp,
        cost_estimate=pl.CostEstimate(
            flops=2 * NHW * 9 * Pp * Pp, transcendentals=0,
            bytes_accessed=2 * 2 * NHW * Pp + 2 * 9 * Pp * Pp),
    )(y1.reshape(N, H, W, Pp), s1, o1, w2)
    s2, o2 = _fold_bn(st2, g2, b2, NHW)

    # ---- stage 3: bn2+relu, conv3 (1x1 expansion), bn3 stats ----------------
    y3, st3 = pl.pallas_call(
        _bn_conv1x1_kernel,
        grid=(nt,),
        in_specs=[pl.BlockSpec((TR, Pp), lambda i: (i, 0)),
                  pl.BlockSpec((1, Pp), lambda i: (0, 0)),
                  pl.BlockSpec((1, Pp), lambda i: (0, 0)),
                  pl.BlockSpec((Pp, Cp), lambda i: (0, 0))],
        out_specs=[pl.BlockSpec((TR, Cp), lambda i: (i, 0)),
                   pl.BlockSpec((None, 2, Cp), lambda i: (i, 0, 0))],
        out_shape=[jax.ShapeDtypeStruct((NHW, Cp), ACT_DTYPE),
                   jax.ShapeDtypeStruct((nt, 2, Cp), f32)],
        compiler_params=cp,
        cost_estimate=pl.CostEstimate(
            flops=2 * NHW * Pp * Cp, transcendentals=0,
            bytes_accessed=2 * NHW * Pp + 2 * NHW * Cp + 2 * Pp * Cp),
    )(y2.reshape(NHW, Pp), s2, o2, w3)
    s3, o3 = _fold_bn(st3, g3, b3, NHW)

    # ---- stage 4: bn3, identity residual, final relu (aliased onto x slab) --
    out2d = pl.pallas_call(
        _residual_kernel,
        grid=(nt,),
        in_specs=[pl.BlockSpec((TR, Cp), lambda i: (i, 0)),
                  pl.BlockSpec((TR, Cp), lambda i: (i, 0)),
                  pl.BlockSpec((1, Cp), lambda i: (0, 0)),
                  pl.BlockSpec((1, Cp), lambda i: (0, 0))],
        out_specs=pl.BlockSpec((TR, Cp), lambda i: (i, 0)),
        out_shape=jax.ShapeDtypeStruct((NHW, Cp), f32),
        input_output_aliases={1: 0},     # reuse the padded f32 x slab
        compiler_params=cp,
        cost_estimate=pl.CostEstimate(
            flops=4 * NHW * Cp, transcendentals=0,
            bytes_accessed=2 * NHW * Cp + 4 * 2 * NHW * Cp),
    )(y3, x2d, s3, o3)

    out = out2d[:, :Cout].reshape(N, H, W, Cout)
    return jnp.transpose(out, (0, 3, 1, 2))


# ----------------------------------------------------------------------------
# Pure-JAX reference (NCHW), mirrors the PyTorch forward in train() mode.
# ----------------------------------------------------------------------------
def bottleneck_ref(x, params):
    def bn(y, g, b):
        mean = jnp.mean(y, axis=(0, 2, 3), keepdims=True)
        var = jnp.mean((y - mean) ** 2, axis=(0, 2, 3), keepdims=True)
        return ((y - mean) / jnp.sqrt(var + EPS) * g.reshape(1, -1, 1, 1)
                + b.reshape(1, -1, 1, 1))

    def conv(x, w, pad):
        return jax.lax.conv_general_dilated(
            x, w, (1, 1), pad, dimension_numbers=("NCHW", "OIHW", "NCHW"))

    y = jax.nn.relu(bn(conv(x, params["w1"], "VALID"), params["g1"], params["b1"]))
    y = jax.nn.relu(bn(conv(y, params["w2"], [(1, 1), (1, 1)]), params["g2"], params["b2"]))
    y = bn(conv(y, params["w3"], "VALID"), params["g3"], params["b3"])
    return jax.nn.relu(y + x)


if __name__ == "__main__":
    # Small shapes consistent with the module: in_planes=16, planes=4,
    # expansion=4 -> out channels = 16 == in_planes (identity residual works).
    N, Cin, H, W = 2, 16, 16, 16
    planes = 4
    Cout = 4 * planes

    key = jax.random.PRNGKey(0)
    ks = jax.random.split(key, 10)
    params = {
        "w1": 0.2 * jax.random.normal(ks[0], (planes, Cin, 1, 1), jnp.float32),
        "w2": 0.2 * jax.random.normal(ks[1], (planes, planes, 3, 3), jnp.float32),
        "w3": 0.2 * jax.random.normal(ks[2], (Cout, planes, 1, 1), jnp.float32),
        "g1": 1.0 + 0.1 * jax.random.normal(ks[3], (planes,), jnp.float32),
        "b1": 0.1 * jax.random.normal(ks[4], (planes,), jnp.float32),
        "g2": 1.0 + 0.1 * jax.random.normal(ks[5], (planes,), jnp.float32),
        "b2": 0.1 * jax.random.normal(ks[6], (planes,), jnp.float32),
        "g3": 1.0 + 0.1 * jax.random.normal(ks[7], (Cout,), jnp.float32),
        "b3": 0.1 * jax.random.normal(ks[8], (Cout,), jnp.float32),
    }
    x = jax.random.normal(ks[9], (N, Cin, H, W), jnp.float32)

    out = jax.block_until_ready(jax.jit(bottleneck_forward)(x, params))
    ref = jax.block_until_ready(bottleneck_ref(x, params))

    assert out.shape == (N, Cout, H, W)
    # bf16 MXU operands + bf16 inter-stage activations -> looser tolerance than
    # the all-f32 pipeline.
    np.testing.assert_allclose(np.asarray(out), np.asarray(ref),
                               rtol=5e-2, atol=5e-2)
    print("KERNEL_OK")
</pallas_src>

<mosaic_0001>
module attributes {stable_mosaic.version = 11 : i64} {
  func.func @kernel(%arg0: i32, %arg1: memref<1x16x16x128xbf16, #tpu.memory_space<vmem>>, %arg2: memref<1x128xf32, #tpu.memory_space<vmem>>, %arg3: memref<1x128xf32, #tpu.memory_space<vmem>>, %arg4: memref<3x384x128xbf16, #tpu.memory_space<vmem>>, %arg5: memref<1x16x16x128xbf16, #tpu.memory_space<vmem>>, %arg6: memref<1x2x128xf32, #tpu.memory_space<vmem>>, %arg7: memref<18x16x384xbf16, #tpu.memory_space<vmem>>) attributes {dimension_semantics = [#tpu.dimension_semantics<parallel>], iteration_bounds = array<i64: 2>, scalar_prefetch = 0 : i64, scratch_operands = 1 : i64, tpu.core_type = #tpu.core_type<tc>, window_params = [{transform_indices = @transform_0, window_bounds = array<i64: 1, 16, 16, 128>}, {pipeline_mode = #tpu.pipeline_mode<synchronous>, transform_indices = @transform_1, window_bounds = array<i64: 1, 128>}, {pipeline_mode = #tpu.pipeline_mode<synchronous>, transform_indices = @transform_2, window_bounds = array<i64: 1, 128>}, {pipeline_mode = #tpu.pipeline_mode<synchronous>, transform_indices = @transform_3, window_bounds = array<i64: 3, 384, 128>}, {transform_indices = @transform_4, window_bounds = array<i64: 1, 16, 16, 128>}, {transform_indices = @transform_5, window_bounds = array<i64: 1, 2, 128>}]} {
    %c0 = arith.constant 0 : index
    %c0_0 = arith.constant 0 : index
    %c0_1 = arith.constant 0 : index
    %c0_2 = arith.constant 0 : index
    %0 = vector.load %arg1[%c0, %c0_0, %c0_1, %c0_2] : memref<1x16x16x128xbf16, #tpu.memory_space<vmem>>, vector<1x16x16x128xbf16>
    %1 = vector.shape_cast %0 : vector<1x16x16x128xbf16> to vector<16x16x128xbf16>
    %2 = arith.extf %1 : vector<16x16x128xbf16> to vector<16x16x128xf32>
    %c0_3 = arith.constant 0 : index
    %c0_4 = arith.constant 0 : index
    %3 = vector.load %arg2[%c0_3, %c0_4] : memref<1x128xf32, #tpu.memory_space<vmem>>, vector<1x128xf32>
    %4 = vector.shape_cast %3 : vector<1x128xf32> to vector<1x1x128xf32>
    %5 = vector.broadcast %4 : vector<1x1x128xf32> to vector<16x16x128xf32>
    %6 = arith.mulf %2, %5 : vector<16x16x128xf32>
    %c0_5 = arith.constant 0 : index
    %c0_6 = arith.constant 0 : index
    %7 = vector.load %arg3[%c0_5, %c0_6] : memref<1x128xf32, #tpu.memory_space<vmem>>, vector<1x128xf32>
    %8 = vector.shape_cast %7 : vector<1x128xf32> to vector<1x1x128xf32>
    %9 = vector.broadcast %8 : vector<1x1x128xf32> to vector<16x16x128xf32>
    %10 = arith.addf %6, %9 : vector<16x16x128xf32>
    %cst = arith.constant 0.000000e+00 : f32
    %11 = vector.broadcast %cst : f32 to vector<16x16x128xf32>
    %12 = arith.maximumf %10, %11 : vector<16x16x128xf32>
    %13 = arith.truncf %12 : vector<16x16x128xf32> to vector<16x16x128xbf16>
    %cst_7 = arith.constant 0.000000e+00 : bf16
    %14 = vector.broadcast %cst_7 : bf16 to vector<1x16x384xbf16>
    %cst_8 = arith.constant 0.000000e+00 : bf16
    %15 = vector.broadcast %cst_8 : bf16 to vector<16x1x128xbf16>
    %c0_9 = arith.constant 0 : index
    %c0_10 = arith.constant 0 : index
    %c0_11 = arith.constant 0 : index
    %16 = vector.load %arg7[%c0_9, %c0_10, %c0_11] : memref<18x16x384xbf16, #tpu.memory_space<vmem>>, vector<1x16x384xbf16>
    tpu.vector_store %arg7[%c0_9, %c0_10, %c0_11], %14 {strides = array<i32>} : memref<18x16x384xbf16, #tpu.memory_space<vmem>>, vector<1x16x384xbf16>,
    %c17 = arith.constant 17 : index
    %c0_12 = arith.constant 0 : index
    %c0_13 = arith.constant 0 : index
    %17 = vector.load %arg7[%c17, %c0_12, %c0_13] : memref<18x16x384xbf16, #tpu.memory_space<vmem>>, vector<1x16x384xbf16>
    tpu.vector_store %arg7[%c17, %c0_12, %c0_13], %14 {strides = array<i32>} : memref<18x16x384xbf16, #tpu.memory_space<vmem>>, vector<1x16x384xbf16>,
    %c1 = arith.constant 1 : index
    %c0_14 = arith.constant 0 : index
    %c0_15 = arith.constant 0 : index
    %18 = vector.load %arg7[%c1, %c0_14, %c0_15] : memref<18x16x384xbf16, #tpu.memory_space<vmem>>, vector<16x1x128xbf16>
    tpu.vector_store %arg7[%c1, %c0_14, %c0_15], %15 {strides = array<i32>} : memref<18x16x384xbf16, #tpu.memory_space<vmem>>, vector<16x1x128xbf16>,
    %c1_16 = arith.constant 1 : index
    %c15 = arith.constant 15 : index
    %c256 = arith.constant 256 : index
    %19 = vector.load %arg7[%c1_16, %c15, %c256] : memref<18x16x384xbf16, #tpu.memory_space<vmem>>, vector<16x1x128xbf16>
    tpu.vector_store %arg7[%c1_16, %c15, %c256], %15 {strides = array<i32>} : memref<18x16x384xbf16, #tpu.memory_space<vmem>>, vector<16x1x128xbf16>,
    %20 = vector.extract_strided_slice %13 {offsets = [0, 0, 0], sizes = [16, 15, 128], strides = [1, 1, 1]} : vector<16x16x128xbf16> to vector<16x15x128xbf16>
    %c1_17 = arith.constant 1 : index
    %c1_18 = arith.constant 1 : index
    %c0_19 = arith.constant 0 : index
    %21 = vector.load %arg7[%c1_17, %c1_18, %c0_19] : memref<18x16x384xbf16, #tpu.memory_space<vmem>>, vector<16x15x128xbf16>
    tpu.vector_store %arg7[%c1_17, %c1_18, %c0_19], %20 {strides = array<i32>} : memref<18x16x384xbf16, #tpu.memory_space<vmem>>, vector<16x15x128xbf16>,
    %c1_20 = arith.constant 1 : index
    %c0_21 = arith.constant 0 : index
    %c128 = arith.constant 128 : index
    %22 = vector.load %arg7[%c1_20, %c0_21, %c128] : memref<18x16x384xbf16, #tpu.memory_space<vmem>>, vector<16x16x128xbf16>
    tpu.vector_store %arg7[%c1_20, %c0_21, %c128], %13 {strides = array<i32>} : memref<18x16x384xbf16, #tpu.memory_space<vmem>>, vector<16x16x128xbf16>,
    %23 = vector.extract_strided_slice %13 {offsets = [0, 1, 0], sizes = [16, 15, 128], strides = [1, 1, 1]} : vector<16x16x128xbf16> to vector<16x15x128xbf16>
    %c1_22 = arith.constant 1 : index
    %c0_23 = arith.constant 0 : index
    %c256_24 = arith.constant 256 : index
    %24 = vector.load %arg7[%c1_22, %c0_23, %c256_24] : memref<18x16x384xbf16, #tpu.memory_space<vmem>>, vector<16x15x128xbf16>
    tpu.vector_store %arg7[%c1_22, %c0_23, %c256_24], %23 {strides = array<i32>} : memref<18x16x384xbf16, #tpu.memory_space<vmem>>, vector<16x15x128xbf16>,
    %cst_25 = arith.constant 0.000000e+00 : f32
    %25 = vector.broadcast %cst_25 : f32 to vector<256x128xf32>
    %c0_26 = arith.constant 0 : index
    %c0_27 = arith.constant 0 : index
    %c0_28 = arith.constant 0 : index
    %26 = vector.load %arg7[%c0_26, %c0_27, %c0_28] : memref<18x16x384xbf16, #tpu.memory_space<vmem>>, vector<16x16x384xbf16>
    %27 = vector.shape_cast %26 : vector<16x16x384xbf16> to vector<256x384xbf16>
    %c0_29 = arith.constant 0 : index
    %c0_30 = arith.constant 0 : index
    %c0_31 = arith.constant 0 : index
    %28 = vector.load %arg4[%c0_29, %c0_30, %c0_31] : memref<3x384x128xbf16, #tpu.memory_space<vmem>>, vector<1x384x128xbf16>
    %29 = vector.shape_cast %28 : vector<1x384x128xbf16> to vector<384x128xbf16>
    %cst_32 = arith.constant dense<0.000000e+00> : vector<256x128xf32>
    %30 = tpu.matmul %27, %29, %cst_32 {dimension_numbers = #tpu.dot_dimension_numbers<[1], [0], [0], [1], [0, 0, 1, 1], [], []>} : vector<256x384xbf16>, vector<384x128xbf16>, vector<256x128xf32> -> vector<256x128xf32>
    %31 = arith.addf %25, %30 : vector<256x128xf32>
    %c1_33 = arith.constant 1 : index
    %c0_34 = arith.constant 0 : index
    %c0_35 = arith.constant 0 : index
    %32 = vector.load %arg7[%c1_33, %c0_34, %c0_35] : memref<18x16x384xbf16, #tpu.memory_space<vmem>>, vector<16x16x384xbf16>
    %33 = vector.shape_cast %32 : vector<16x16x384xbf16> to vector<256x384xbf16>
    %c1_36 = arith.constant 1 : index
    %c0_37 = arith.constant 0 : index
    %c0_38 = arith.constant 0 : index
    %34 = vector.load %arg4[%c1_36, %c0_37, %c0_38] : memref<3x384x128xbf16, #tpu.memory_space<vmem>>, vector<1x384x128xbf16>
    %35 = vector.shape_cast %34 : vector<1x384x128xbf16> to vector<384x128xbf16>
    %cst_39 = arith.constant dense<0.000000e+00> : vector<256x128xf32>
    %36 = tpu.matmul %33, %35, %cst_39 {dimension_numbers = #tpu.dot_dimension_numbers<[1], [0], [0], [1], [0, 0, 1, 1], [], []>} : vector<256x384xbf16>, vector<384x128xbf16>, vector<256x128xf32> -> vector<256x128xf32>
    %37 = arith.addf %31, %36 : vector<256x128xf32>
    %c2 = arith.constant 2 : index
    %c0_40 = arith.constant 0 : index
    %c0_41 = arith.constant 0 : index
    %38 = vector.load %arg7[%c2, %c0_40, %c0_41] : memref<18x16x384xbf16, #tpu.memory_space<vmem>>, vector<16x16x384xbf16>
    %39 = vector.shape_cast %38 : vector<16x16x384xbf16> to vector<256x384xbf16>
    %c2_42 = arith.constant 2 : index
    %c0_43 = arith.constant 0 : index
    %c0_44 = arith.constant 0 : index
    %40 = vector.load %arg4[%c2_42, %c0_43, %c0_44] : memref<3x384x128xbf16, #tpu.memory_space<vmem>>, vector<1x384x128xbf16>
    %41 = vector.shape_cast %40 : vector<1x384x128xbf16> to vector<384x128xbf16>
    %cst_45 = arith.constant dense<0.000000e+00> : vector<256x128xf32>
    %42 = tpu.matmul %39, %41, %cst_45 {dimension_numbers = #tpu.dot_dimension_numbers<[1], [0], [0], [1], [0, 0, 1, 1], [], []>} : vector<256x384xbf16>, vector<384x128xbf16>, vector<256x128xf32> -> vector<256x128xf32>
    %43 = arith.addf %37, %42 : vector<256x128xf32>
    %44 = vector.shape_cast %43 : vector<256x128xf32> to vector<16x16x128xf32>
    %45 = arith.truncf %44 : vector<16x16x128xf32> to vector<16x16x128xbf16>
    %c0_46 = arith.constant 0 : index
    %c0_47 = arith.constant 0 : index
    %c0_48 = arith.constant 0 : index
    %c0_49 = arith.constant 0 : index
    %46 = vector.load %arg5[%c0_46, %c0_47, %c0_48, %c0_49] : memref<1x16x16x128xbf16, #tpu.memory_space<vmem>>, vector<1x16x16x128xbf16>
    %47 = vector.shape_cast %46 : vector<1x16x16x128xbf16> to vector<16x16x128xbf16>
    %48 = vector.shape_cast %45 : vector<16x16x128xbf16> to vector<1x16x16x128xbf16>
    tpu.vector_store %arg5[%c0_46, %c0_47, %c0_48, %c0_49], %48 {strides = array<i32>} : memref<1x16x16x128xbf16, #tpu.memory_space<vmem>>, vector<1x16x16x128xbf16>,
    %cst_50 = arith.constant dense<0.000000e+00> : vector<128xf32>
    %49 = vector.multi_reduction <add>, %43, %cst_50 [0] : vector<256x128xf32> to vector<128xf32>
    %50 = vector.shape_cast %49 : vector<128xf32> to vector<1x128xf32>
    %51 = arith.mulf %43, %43 : vector<256x128xf32>
    %cst_51 = arith.constant dense<0.000000e+00> : vector<128xf32>
    %52 = vector.multi_reduction <add>, %51, %cst_51 [0] : vector<256x128xf32> to vector<128xf32>
    %53 = vector.shape_cast %52 : vector<128xf32> to vector<1x128xf32>
    %54 = tpu.concatenate %50, %53 in 0 : vector<1x128xf32>, vector<1x128xf32> -> vector<2x128xf32>
    %c0_52 = arith.constant 0 : index
    %c0_53 = arith.constant 0 : index
    %c0_54 = arith.constant 0 : index
    %55 = vector.load %arg6[%c0_52, %c0_53, %c0_54] : memref<1x2x128xf32, #tpu.memory_space<vmem>>, vector<1x2x128xf32>
    %56 = vector.shape_cast %55 : vector<1x2x128xf32> to vector<2x128xf32>
    %57 = vector.shape_cast %54 : vector<2x128xf32> to vector<1x2x128xf32>
    tpu.vector_store %arg6[%c0_52, %c0_53, %c0_54], %57 {strides = array<i32>} : memref<1x2x128xf32, #tpu.memory_space<vmem>>, vector<1x2x128xf32>,
    return
  }
  func.func @transform_0(%arg0: i32) -> (i32, i32, i32, i32) {
    %c0_i32 = arith.constant 0 : i32
    %c0_i32_0 = arith.constant 0 : i32
    %c0_i32_1 = arith.constant 0 : i32
    %c0_i32_2 = arith.constant 0 : i32
    return %arg0, %c0_i32, %c0_i32_0, %c0_i32_1 : i32, i32, i32, i32
  }
  func.func @transform_1(%arg0: i32) -> (i32, i32) {
    %c0_i32 = arith.constant 0 : i32
    %c0_i32_0 = arith.constant 0 : i32
    %c0_i32_1 = arith.constant 0 : i32
    return %c0_i32, %c0_i32_0 : i32, i32
  }
  func.func @transform_2(%arg0: i32) -> (i32, i32) {
    %c0_i32 = arith.constant 0 : i32
    %c0_i32_0 = arith.constant 0 : i32
    %c0_i32_1 = arith.constant 0 : i32
    return %c0_i32, %c0_i32_0 : i32, i32
  }
  func.func @transform_3(%arg0: i32) -> (i32, i32, i32) {
    %c0_i32 = arith.constant 0 : i32
    %c0_i32_0 = arith.constant 0 : i32
    %c0_i32_1 = arith.constant 0 : i32
    %c0_i32_2 = arith.constant 0 : i32
    return %c0_i32, %c0_i32_0, %c0_i32_1 : i32, i32, i32
  }
  func.func @transform_4(%arg0: i32) -> (i32, i32, i32, i32) {
    %c0_i32 = arith.constant 0 : i32
    %c0_i32_0 = arith.constant 0 : i32
    %c0_i32_1 = arith.constant 0 : i32
    %c0_i32_2 = arith.constant 0 : i32
    return %arg0, %c0_i32, %c0_i32_0, %c0_i32_1 : i32, i32, i32, i32
  }
  func.func @transform_5(%arg0: i32) -> (i32, i32, i32) {
    %c0_i32 = arith.constant 0 : i32
    %c0_i32_0 = arith.constant 0 : i32
    %c0_i32_1 = arith.constant 0 : i32
    return %arg0, %c0_i32, %c0_i32_0 : i32, i32, i32
  }
}

module attributes {stable_mosaic.version = 11 : i64} {
  func.func @_conv1_kernel(%arg0: i32, %arg1: memref<512x128xf32, #tpu.memory_space<vmem>>, %arg2: memref<128x128xbf16, #tpu.memory_space<vmem>>, %arg3: memref<512x128xbf16, #tpu.memory_space<vmem>>, %arg4: memref<1x2x128xf32, #tpu.memory_space<vmem>>) attributes {dimension_semantics = [#tpu.dimension_semantics<parallel>], iteration_bounds = array<i64: 1>, scalar_prefetch = 0 : i64, scratch_operands = 0 : i64, tpu.core_type = #tpu.core_type<tc>, window_params = [{transform_indices = @transform_0, window_bounds = array<i64: 512, 128>}, {pipeline_mode = #tpu.pipeline_mode<synchronous>, transform_indices = @transform_1, window_bounds = array<i64: 128, 128>}, {transform_indices = @transform_2, window_bounds = array<i64: 512, 128>}, {transform_indices = @transform_3, window_bounds = array<i64: 1, 2, 128>}]} {
    %c0 = arith.constant 0 : index
    %c0_0 = arith.constant 0 : index
    %0 = vector.load %arg1[%c0, %c0_0] : memref<512x128xf32, #tpu.memory_space<vmem>>, vector<512x128xf32>
    %1 = arith.truncf %0 : vector<512x128xf32> to vector<512x128xbf16>
    %c0_1 = arith.constant 0 : index
    %c0_2 = arith.constant 0 : index
    %2 = vector.load %arg2[%c0_1, %c0_2] : memref<128x128xbf16, #tpu.memory_space<vmem>>, vector<128x128xbf16>
    %cst = arith.constant dense<0.000000e+00> : vector<512x128xf32>
    %3 = tpu.matmul %1, %2, %cst {dimension_numbers = #tpu.dot_dimension_numbers<[1], [0], [0], [1], [0, 0, 1, 1], [], []>} : vector<512x128xbf16>, vector<128x128xbf16>, vector<512x128xf32> -> vector<512x128xf32>
    %4 = arith.truncf %3 : vector<512x128xf32> to vector<512x128xbf16>
    %c0_3 = arith.constant 0 : index
    %c0_4 = arith.constant 0 : index
    %5 = vector.load %arg3[%c0_3, %c0_4] : memref<512x128xbf16, #tpu.memory_space<vmem>>, vector<512x128xbf16>
    tpu.vector_store %arg3[%c0_3, %c0_4], %4 {strides = array<i32>} : memref<512x128xbf16, #tpu.memory_space<vmem>>, vector<512x128xbf16>,
    %cst_5 = arith.constant dense<0.000000e+00> : vector<128xf32>
    %6 = vector.multi_reduction <add>, %3, %cst_5 [0] : vector<512x128xf32> to vector<128xf32>
    %7 = vector.shape_cast %6 : vector<128xf32> to vector<1x128xf32>
    %8 = arith.mulf %3, %3 : vector<512x128xf32>
    %cst_6 = arith.constant dense<0.000000e+00> : vector<128xf32>
    %9 = vector.multi_reduction <add>, %8, %cst_6 [0] : vector<512x128xf32> to vector<128xf32>
    %10 = vector.shape_cast %9 : vector<128xf32> to vector<1x128xf32>
    %11 = tpu.concatenate %7, %10 in 0 : vector<1x128xf32>, vector<1x128xf32> -> vector<2x128xf32>
    %c0_7 = arith.constant 0 : index
    %c0_8 = arith.constant 0 : index
    %c0_9 = arith.constant 0 : index
    %12 = vector.load %arg4[%c0_7, %c0_8, %c0_9] : memref<1x2x128xf32, #tpu.memory_space<vmem>>, vector<1x2x128xf32>
    %13 = vector.shape_cast %12 : vector<1x2x128xf32> to vector<2x128xf32>
    %14 = vector.shape_cast %11 : vector<2x128xf32> to vector<1x2x128xf32>
    tpu.vector_store %arg4[%c0_7, %c0_8, %c0_9], %14 {strides = array<i32>} : memref<1x2x128xf32, #tpu.memory_space<vmem>>, vector<1x2x128xf32>,
    return
  }
  func.func @transform_0(%arg0: i32) -> (i32, i32) {
    %c0_i32 = arith.constant 0 : i32
    %c0_i32_0 = arith.constant 0 : i32
    return %arg0, %c0_i32 : i32, i32
  }
  func.func @transform_1(%arg0: i32) -> (i32, i32) {
    %c0_i32 = arith.constant 0 : i32
    %c0_i32_0 = arith.constant 0 : i32
    %c0_i32_1 = arith.constant 0 : i32
    return %c0_i32, %c0_i32_0 : i32, i32
  }
  func.func @transform_2(%arg0: i32) -> (i32, i32) {
    %c0_i32 = arith.constant 0 : i32
    %c0_i32_0 = arith.constant 0 : i32
    return %arg0, %c0_i32 : i32, i32
  }
  func.func @transform_3(%arg0: i32) -> (i32, i32, i32) {
    %c0_i32 = arith.constant 0 : i32
    %c0_i32_0 = arith.constant 0 : i32
    %c0_i32_1 = arith.constant 0 : i32
    return %arg0, %c0_i32, %c0_i32_0 : i32, i32, i32
  }
}

module attributes {stable_mosaic.version = 11 : i64} {
  func.func @_bn_conv1x1_kernel(%arg0: i32, %arg1: memref<512x128xbf16, #tpu.memory_space<vmem>>, %arg2: memref<1x128xf32, #tpu.memory_space<vmem>>, %arg3: memref<1x128xf32, #tpu.memory_space<vmem>>, %arg4: memref<128x128xbf16, #tpu.memory_space<vmem>>, %arg5: memref<512x128xbf16, #tpu.memory_space<vmem>>, %arg6: memref<1x2x128xf32, #tpu.memory_space<vmem>>) attributes {dimension_semantics = [#tpu.dimension_semantics<parallel>], iteration_bounds = array<i64: 1>, scalar_prefetch = 0 : i64, scratch_operands = 0 : i64, tpu.core_type = #tpu.core_type<tc>, window_params = [{transform_indices = @transform_0, window_bounds = array<i64: 512, 128>}, {pipeline_mode = #tpu.pipeline_mode<synchronous>, transform_indices = @transform_1, window_bounds = array<i64: 1, 128>}, {pipeline_mode = #tpu.pipeline_mode<synchronous>, transform_indices = @transform_2, window_bounds = array<i64: 1, 128>}, {pipeline_mode = #tpu.pipeline_mode<synchronous>, transform_indices = @transform_3, window_bounds = array<i64: 128, 128>}, {transform_indices = @transform_4, window_bounds = array<i64: 512, 128>}, {transform_indices = @transform_5, window_bounds = array<i64: 1, 2, 128>}]} {
    %c0 = arith.constant 0 : index
    %c0_0 = arith.constant 0 : index
    %0 = vector.load %arg1[%c0, %c0_0] : memref<512x128xbf16, #tpu.memory_space<vmem>>, vector<512x128xbf16>
    %1 = arith.extf %0 : vector<512x128xbf16> to vector<512x128xf32>
    %c0_1 = arith.constant 0 : index
    %c0_2 = arith.constant 0 : index
    %2 = vector.load %arg2[%c0_1, %c0_2] : memref<1x128xf32, #tpu.memory_space<vmem>>, vector<1x128xf32>
    %3 = vector.broadcast %2 : vector<1x128xf32> to vector<512x128xf32>
    %4 = arith.mulf %1, %3 : vector<512x128xf32>
    %c0_3 = arith.constant 0 : index
    %c0_4 = arith.constant 0 : index
    %5 = vector.load %arg3[%c0_3, %c0_4] : memref<1x128xf32, #tpu.memory_space<vmem>>, vector<1x128xf32>
    %6 = vector.broadcast %5 : vector<1x128xf32> to vector<512x128xf32>
    %7 = arith.addf %4, %6 : vector<512x128xf32>
    %cst = arith.constant 0.000000e+00 : f32
    %8 = vector.broadcast %cst : f32 to vector<512x128xf32>
    %9 = arith.maximumf %7, %8 : vector<512x128xf32>
    %10 = arith.truncf %9 : vector<512x128xf32> to vector<512x128xbf16>
    %c0_5 = arith.constant 0 : index
    %c0_6 = arith.constant 0 : index
    %11 = vector.load %arg4[%c0_5, %c0_6] : memref<128x128xbf16, #tpu.memory_space<vmem>>, vector<128x128xbf16>
    %cst_7 = arith.constant dense<0.000000e+00> : vector<512x128xf32>
    %12 = tpu.matmul %10, %11, %cst_7 {dimension_numbers = #tpu.dot_dimension_numbers<[1], [0], [0], [1], [0, 0, 1, 1], [], []>} : vector<512x128xbf16>, vector<128x128xbf16>, vector<512x128xf32> -> vector<512x128xf32>
    %13 = arith.truncf %12 : vector<512x128xf32> to vector<512x128xbf16>
    %c0_8 = arith.constant 0 : index
    %c0_9 = arith.constant 0 : index
    %14 = vector.load %arg5[%c0_8, %c0_9] : memref<512x128xbf16, #tpu.memory_space<vmem>>, vector<512x128xbf16>
    tpu.vector_store %arg5[%c0_8, %c0_9], %13 {strides = array<i32>} : memref<512x128xbf16, #tpu.memory_space<vmem>>, vector<512x128xbf16>,
    %cst_10 = arith.constant dense<0.000000e+00> : vector<128xf32>
    %15 = vector.multi_reduction <add>, %12, %cst_10 [0] : vector<512x128xf32> to vector<128xf32>
    %16 = vector.shape_cast %15 : vector<128xf32> to vector<1x128xf32>
    %17 = arith.mulf %12, %12 : vector<512x128xf32>
    %cst_11 = arith.constant dense<0.000000e+00> : vector<128xf32>
    %18 = vector.multi_reduction <add>, %17, %cst_11 [0] : vector<512x128xf32> to vector<128xf32>
    %19 = vector.shape_cast %18 : vector<128xf32> to vector<1x128xf32>
    %20 = tpu.concatenate %16, %19 in 0 : vector<1x128xf32>, vector<1x128xf32> -> vector<2x128xf32>
    %c0_12 = arith.constant 0 : index
    %c0_13 = arith.constant 0 : index
    %c0_14 = arith.constant 0 : index
    %21 = vector.load %arg6[%c0_12, %c0_13, %c0_14] : memref<1x2x128xf32, #tpu.memory_space<vmem>>, vector<1x2x128xf32>
    %22 = vector.shape_cast %21 : vector<1x2x128xf32> to vector<2x128xf32>
    %23 = vector.shape_cast %20 : vector<2x128xf32> to vector<1x2x128xf32>
    tpu.vector_store %arg6[%c0_12, %c0_13, %c0_14], %23 {strides = array<i32>} : memref<1x2x128xf32, #tpu.memory_space<vmem>>, vector<1x2x128xf32>,
    return
  }
  func.func @transform_0(%arg0: i32) -> (i32, i32) {
    %c0_i32 = arith.constant 0 : i32
    %c0_i32_0 = arith.constant 0 : i32
    return %arg0, %c0_i32 : i32, i32
  }
  func.func @transform_1(%arg0: i32) -> (i32, i32) {
    %c0_i32 = arith.constant 0 : i32
    %c0_i32_0 = arith.constant 0 : i32
    %c0_i32_1 = arith.constant 0 : i32
    return %c0_i32, %c0_i32_0 : i32, i32
  }
  func.func @transform_2(%arg0: i32) -> (i32, i32) {
    %c0_i32 = arith.constant 0 : i32
    %c0_i32_0 = arith.constant 0 : i32
    %c0_i32_1 = arith.constant 0 : i32
    return %c0_i32, %c0_i32_0 : i32, i32
  }
  func.func @transform_3(%arg0: i32) -> (i32, i32) {
    %c0_i32 = arith.constant 0 : i32
    %c0_i32_0 = arith.constant 0 : i32
    %c0_i32_1 = arith.constant 0 : i32
    return %c0_i32, %c0_i32_0 : i32, i32
  }
  func.func @transform_4(%arg0: i32) -> (i32, i32) {
    %c0_i32 = arith.constant 0 : i32
    %c0_i32_0 = arith.constant 0 : i32
    return %arg0, %c0_i32 : i32, i32
  }
  func.func @transform_5(%arg0: i32) -> (i32, i32, i32) {
    %c0_i32 = arith.constant 0 : i32
    %c0_i32_0 = arith.constant 0 : i32
    %c0_i32_1 = arith.constant 0 : i32
    return %arg0, %c0_i32, %c0_i32_0 : i32, i32, i32
  }
}

module attributes {stable_mosaic.version = 11 : i64} {
  func.func @_residual_kernel(%arg0: i32, %arg1: memref<512x128xbf16, #tpu.memory_space<vmem>>, %arg2: memref<512x128xf32, #tpu.memory_space<vmem>>, %arg3: memref<1x128xf32, #tpu.memory_space<vmem>>, %arg4: memref<1x128xf32, #tpu.memory_space<vmem>>, %arg5: memref<512x128xf32, #tpu.memory_space<vmem>>) attributes {dimension_semantics = [#tpu.dimension_semantics<parallel>], iteration_bounds = array<i64: 1>, scalar_prefetch = 0 : i64, scratch_operands = 0 : i64, tpu.core_type = #tpu.core_type<tc>, window_params = [{transform_indices = @transform_0, window_bounds = array<i64: 512, 128>}, {transform_indices = @transform_1, window_bounds = array<i64: 512, 128>}, {pipeline_mode = #tpu.pipeline_mode<synchronous>, transform_indices = @transform_2, window_bounds = array<i64: 1, 128>}, {pipeline_mode = #tpu.pipeline_mode<synchronous>, transform_indices = @transform_3, window_bounds = array<i64: 1, 128>}, {transform_indices = @transform_4, window_bounds = array<i64: 512, 128>}]} {
    %c0 = arith.constant 0 : index
    %c0_0 = arith.constant 0 : index
    %0 = vector.load %arg1[%c0, %c0_0] : memref<512x128xbf16, #tpu.memory_space<vmem>>, vector<512x128xbf16>
    %1 = arith.extf %0 : vector<512x128xbf16> to vector<512x128xf32>
    %c0_1 = arith.constant 0 : index
    %c0_2 = arith.constant 0 : index
    %2 = vector.load %arg3[%c0_1, %c0_2] : memref<1x128xf32, #tpu.memory_space<vmem>>, vector<1x128xf32>
    %3 = vector.broadcast %2 : vector<1x128xf32> to vector<512x128xf32>
    %4 = arith.mulf %1, %3 : vector<512x128xf32>
    %c0_3 = arith.constant 0 : index
    %c0_4 = arith.constant 0 : index
    %5 = vector.load %arg4[%c0_3, %c0_4] : memref<1x128xf32, #tpu.memory_space<vmem>>, vector<1x128xf32>
    %6 = vector.broadcast %5 : vector<1x128xf32> to vector<512x128xf32>
    %7 = arith.addf %4, %6 : vector<512x128xf32>
    %c0_5 = arith.constant 0 : index
    %c0_6 = arith.constant 0 : index
    %8 = vector.load %arg2[%c0_5, %c0_6] : memref<512x128xf32, #tpu.memory_space<vmem>>, vector<512x128xf32>
    %9 = arith.addf %7, %8 : vector<512x128xf32>
    %cst = arith.constant 0.000000e+00 : f32
    %10 = vector.broadcast %cst : f32 to vector<512x128xf32>
    %11 = arith.maximumf %9, %10 : vector<512x128xf32>
    %c0_7 = arith.constant 0 : index
    %c0_8 = arith.constant 0 : index
    %12 = vector.load %arg5[%c0_7, %c0_8] : memref<512x128xf32, #tpu.memory_space<vmem>>, vector<512x128xf32>
    tpu.vector_store %arg5[%c0_7, %c0_8], %11 {strides = array<i32>} : memref<512x128xf32, #tpu.memory_space<vmem>>, vector<512x128xf32>,
    return
  }
  func.func @transform_0(%arg0: i32) -> (i32, i32) {
    %c0_i32 = arith.constant 0 : i32
    %c0_i32_0 = arith.constant 0 : i32
    return %arg0, %c0_i32 : i32, i32
  }
  func.func @transform_1(%arg0: i32) -> (i32, i32) {
    %c0_i32 = arith.constant 0 : i32
    %c0_i32_0 = arith.constant 0 : i32
    return %arg0, %c0_i32 : i32, i32
  }
  func.func @transform_2(%arg0: i32) -> (i32, i32) {
    %c0_i32 = arith.constant 0 : i32
    %c0_i32_0 = arith.constant 0 : i32
    %c0_i32_1 = arith.constant 0 : i32
    return %c0_i32, %c0_i32_0 : i32, i32
  }
  func.func @transform_3(%arg0: i32) -> (i32, i32) {
    %c0_i32 = arith.constant 0 : i32
    %c0_i32_0 = arith.constant 0 : i32
    %c0_i32_1 = arith.constant 0 : i32
    return %c0_i32, %c0_i32_0 : i32, i32
  }
  func.func @transform_4(%arg0: i32) -> (i32, i32) {
    %c0_i32 = arith.constant 0 : i32
    %c0_i32_0 = arith.constant 0 : i32
    return %arg0, %c0_i32 : i32, i32
  }
}

</mosaic_0001>

<llo_original>
// kernel: bottleneck_forward.4
$region0: #{bottleneck_forward.4}
  #allocation0 [shape = 'u32[]', space=smem, size = 0x4, offset = 0x4, fixed_abs, tag = 'smem constant byte address 0x4 - core index']
  #allocation1 [shape = 'u32[144,128]{1,0:T(1,128)}', space=vmem, size = 0x12000, scoped, tag = 'internal scratch']
  %s0 = inlined_call_operand.vmem [shape: f32[512,128], index: 0, kind: input, shape index: {}]
  %s1 = inlined_call_operand.vmem [shape: bf16[128,128], index: 1, kind: input, shape index: {}]
  %s2 = inlined_call_operand.vmem [shape: bf16[512,128], index: 2, kind: output, shape index: {0}]
  %s3 = inlined_call_operand.vmem [shape: f32[1,2,128], index: 3, kind: output, shape index: {1}]
  %4 = xla_tuple %s2, %s3
  %s5 = sld [smem:[#allocation0]]
  $region26: #{bottleneck_forward.4} parent=0
    _
  %s7 = ssub.s32 1, %s5
  %s8 = scalar_select 0, %s7, %s5
  // Predicated region
  $region2: #{bottleneck_forward.4} parent=0 // pred_check
    _
  $region3: #{bottleneck_forward.4} parent=0 // pred_check_branch
    %10 = sbr.rel (0) target = $region5
  $region4: #{bottleneck_forward.4} parent=0 // pred_region
    _
  $region5: #{bottleneck_forward.4} parent=0 // pred_fallthru
    _
  // Predicated region
  $region6: #{bottleneck_forward.4} parent=0 // pred_check
    _
  $region7: #{bottleneck_forward.4} parent=0 // pred_check_branch
    %12 = sbr.rel (0) target = $region9
  $region8: #{bottleneck_forward.4} parent=0 // pred_region
    _
  $region9: #{bottleneck_forward.4} parent=0 // pred_fallthru
    _
  %v14 = vld [vmem:[%s0] sm:$0xff]
  %v15 = vld [vmem:[%s0 + $0x8] sm:$0xff]
  %v16 = vld [vmem:[%s0 + $0x10] sm:$0xff]
  %v17 = vld [vmem:[%s0 + $0x18] sm:$0xff]
  %v18 = vld [vmem:[%s0 + $0x20] sm:$0xff]
  %v19 = vld [vmem:[%s0 + $0x28] sm:$0xff]
  %v20 = vld [vmem:[%s0 + $0x30] sm:$0xff]
  %v21 = vld [vmem:[%s0 + $0x38] sm:$0xff]
  %v22 = vld [vmem:[%s0 + $0x40] sm:$0xff]
  %v23 = vld [vmem:[%s0 + $0x48] sm:$0xff]
  %v24 = vld [vmem:[%s0 + $0x50] sm:$0xff]
  %v25 = vld [vmem:[%s0 + $0x58] sm:$0xff]
  %v26 = vld [vmem:[%s0 + $0x60] sm:$0xff]
  %v27 = vld [vmem:[%s0 + $0x68] sm:$0xff]
  %v28 = vld [vmem:[%s0 + $0x70] sm:$0xff]
  %v29 = vld [vmem:[%s0 + $0x78] sm:$0xff]
  %v30 = vld [vmem:[%s0 + $0x80] sm:$0xff]
  %v31 = vld [vmem:[%s0 + $0x88] sm:$0xff]
  %v32 = vld [vmem:[%s0 + $0x90] sm:$0xff]
  %v33 = vld [vmem:[%s0 + $0x98] sm:$0xff]
  %v34 = vld [vmem:[%s0 + $0xa0] sm:$0xff]
  %v35 = vld [vmem:[%s0 + $0xa8] sm:$0xff]
  %v36 = vld [vmem:[%s0 + $0xb0] sm:$0xff]
  %v37 = vld [vmem:[%s0 + $0xb8] sm:$0xff]
  %v38 = vld [vmem:[%s0 + $0xc0] sm:$0xff]
  %v39 = vld [vmem:[%s0 + $0xc8] sm:$0xff]
  %v40 = vld [vmem:[%s0 + $0xd0] sm:$0xff]
  %v41 = vld [vmem:[%s0 + $0xd8] sm:$0xff]
  %v42 = vld [vmem:[%s0 + $0xe0] sm:$0xff]
  %v43 = vld [vmem:[%s0 + $0xe8] sm:$0xff]
  %v44 = vld [vmem:[%s0 + $0xf0] sm:$0xff]
  %v45 = vld [vmem:[%s0 + $0xf8] sm:$0xff]
  %v46 = vld [vmem:[%s0 + $0x100] sm:$0xff]
  %v47 = vld [vmem:[%s0 + $0x108] sm:$0xff]
  %v48 = vld [vmem:[%s0 + $0x110] sm:$0xff]
  %v49 = vld [vmem:[%s0 + $0x118] sm:$0xff]
  %v50 = vld [vmem:[%s0 + $0x120] sm:$0xff]
  %v51 = vld [vmem:[%s0 + $0x128] sm:$0xff]
  %v52 = vld [vmem:[%s0 + $0x130] sm:$0xff]
  %v53 = vld [vmem:[%s0 + $0x138] sm:$0xff]
  %v54 = vld [vmem:[%s0 + $0x140] sm:$0xff]
  %v55 = vld [vmem:[%s0 + $0x148] sm:$0xff]
  %v56 = vld [vmem:[%s0 + $0x150] sm:$0xff]
  %v57 = vld [vmem:[%s0 + $0x158] sm:$0xff]
  %v58 = vld [vmem:[%s0 + $0x160] sm:$0xff]
  %v59 = vld [vmem:[%s0 + $0x168] sm:$0xff]
  %v60 = vld [vmem:[%s0 + $0x170] sm:$0xff]
  %v61 = vld [vmem:[%s0 + $0x178] sm:$0xff]
  %v62 = vld [vmem:[%s0 + $0x180] sm:$0xff]
  %v63 = vld [vmem:[%s0 + $0x188] sm:$0xff]
  %v64 = vld [vmem:[%s0 + $0x190] sm:$0xff]
  %v65 = vld [vmem:[%s0 + $0x198] sm:$0xff]
  %v66 = vld [vmem:[%s0 + $0x1a0] sm:$0xff]
  %v67 = vld [vmem:[%s0 + $0x1a8] sm:$0xff]
  %v68 = vld [vmem:[%s0 + $0x1b0] sm:$0xff]
  %v69 = vld [vmem:[%s0 + $0x1b8] sm:$0xff]
  %v70 = vld [vmem:[%s0 + $0x1c0] sm:$0xff]
  %v71 = vld [vmem:[%s0 + $0x1c8] sm:$0xff]
  %v72 = vld [vmem:[%s0 + $0x1d0] sm:$0xff]
  %v73 = vld [vmem:[%s0 + $0x1d8] sm:$0xff]
  %v74 = vld [vmem:[%s0 + $0x1e0] sm:$0xff]
  %v75 = vld [vmem:[%s0 + $0x1e8] sm:$0xff]
  %v76 = vld [vmem:[%s0 + $0x1f0] sm:$0xff]
  %v77 = vld [vmem:[%s0 + $0x1f8] sm:$0xff]
  %v78 = vpack.c.bf16 %v15, %v14
  %v79 = vpack.c.bf16 %v17, %v16
  %v80 = vpack.c.bf16 %v19, %v18
  %v81 = vpack.c.bf16 %v21, %v20
  %v82 = vpack.c.bf16 %v23, %v22
  %v83 = vpack.c.bf16 %v25, %v24
  %v84 = vpack.c.bf16 %v27, %v26
  %v85 = vpack.c.bf16 %v29, %v28
  %v86 = vpack.c.bf16 %v31, %v30
  %v87 = vpack.c.bf16 %v33, %v32
  %v88 = vpack.c.bf16 %v35, %v34
  %v89 = vpack.c.bf16 %v37, %v36
  %v90 = vpack.c.bf16 %v39, %v38
  %v91 = vpack.c.bf16 %v41, %v40
  %v92 = vpack.c.bf16 %v43, %v42
  %v93 = vpack.c.bf16 %v45, %v44
  %v94 = vpack.c.bf16 %v47, %v46
  %v95 = vpack.c.bf16 %v49, %v48
  %v96 = vpack.c.bf16 %v51, %v50
  %v97 = vpack.c.bf16 %v53, %v52
  %v98 = vpack.c.bf16 %v55, %v54
  %v99 = vpack.c.bf16 %v57, %v56
  %v100 = vpack.c.bf16 %v59, %v58
  %v101 = vpack.c.bf16 %v61, %v60
  %v102 = vpack.c.bf16 %v63, %v62
  %v103 = vpack.c.bf16 %v65, %v64
  %v104 = vpack.c.bf16 %v67, %v66
  %v105 = vpack.c.bf16 %v69, %v68
  %v106 = vpack.c.bf16 %v71, %v70
  %v107 = vpack.c.bf16 %v73, %v72
  %v108 = vpack.c.bf16 %v75, %v74
  %v109 = vpack.c.bf16 %v77, %v76
  %v110 = vld [vmem:[%s1] sm:$0xf]
  %v111 = vld [vmem:[%s1 + $0x4] sm:$0xf]
  %v112 = vld [vmem:[%s1 + $0x8] sm:$0xf]
  %v113 = vld [vmem:[%s1 + $0xc] sm:$0xf]
  %v114 = vld [vmem:[%s1 + $0x10] sm:$0xf]
  %v115 = vld [vmem:[%s1 + $0x14] sm:$0xf]
  %v116 = vld [vmem:[%s1 + $0x18] sm:$0xf]
  %v117 = vld [vmem:[%s1 + $0x1c] sm:$0xf]
  %v118 = vld [vmem:[%s1 + $0x20] sm:$0xf]
  %v119 = vld [vmem:[%s1 + $0x24] sm:$0xf]
  %v120 = vld [vmem:[%s1 + $0x28] sm:$0xf]
  %v121 = vld [vmem:[%s1 + $0x2c] sm:$0xf]
  %v122 = vld [vmem:[%s1 + $0x30] sm:$0xf]
  %v123 = vld [vmem:[%s1 + $0x34] sm:$0xf]
  %v124 = vld [vmem:[%s1 + $0x38] sm:$0xf]
  %v125 = vld [vmem:[%s1 + $0x3c] sm:$0xf]
  %v142 = vunpack.c.l.b16 %v110
  %v143 = vunpack.c.l.b16 %v111
  %v144 = vunpack.c.l.b16 %v112
  %v145 = vunpack.c.l.b16 %v113
  %v146 = vunpack.c.l.b16 %v114
  %v147 = vunpack.c.l.b16 %v115
  %v148 = vunpack.c.l.b16 %v116
  %v149 = vunpack.c.l.b16 %v117
  %v150 = vunpack.c.l.b16 %v118
  %v151 = vunpack.c.l.b16 %v119
  %v152 = vunpack.c.l.b16 %v120
  %v153 = vunpack.c.l.b16 %v121
  %v154 = vunpack.c.l.b16 %v122
  %v155 = vunpack.c.l.b16 %v123
  %v156 = vunpack.c.l.b16 %v124
  %v157 = vunpack.c.l.b16 %v125
  %v158 = vpack.c.b16 %v143, %v142
  %v159 = vpack.c.b16 %v145, %v144
  %v160 = vpack.c.b16 %v147, %v146
  %v161 = vpack.c.b16 %v149, %v148
  %v162 = vpack.c.b16 %v151, %v150
  %v163 = vpack.c.b16 %v153, %v152
  %v164 = vpack.c.b16 %v155, %v154
  %v165 = vpack.c.b16 %v157, %v156
  %174 = vmatprep.subr.bf16.mxu0 0
  %175 = vmatpush1.bf16.msra.mxu0 %v158
  %176 = vmatprep.subr.bf16.mxu0 0
  %177 = vmatpush1.bf16.msra.mxu0 %v159
  %178 = vmatprep.subr.bf16.mxu0 0
  %179 = vmatpush1.bf16.msra.mxu0 %v160
  %180 = vmatprep.subr.bf16.mxu0 0
  %181 = vmatpush1.bf16.msra.mxu0 %v161
  %182 = vmatprep.subr.bf16.mxu0 0
  %183 = vmatpush1.bf16.msra.mxu0 %v162
  %184 = vmatprep.subr.bf16.mxu0 0
  %185 = vmatpush1.bf16.msra.mxu0 %v163
  %186 = vmatprep.subr.bf16.mxu0 0
  %187 = vmatpush1.bf16.msra.mxu0 %v164
  %188 = vmatprep.subr.bf16.mxu0 0
  %189 = vmatpush1.bf16.msra.mxu0 %v165
  %190 = vmatprep.subr.bf16.mxu0 0
  %191 = vmatpush1.bf16.msra.mxu0 0
  %192 = vmatprep.subr.bf16.mxu0 0
  %193 = vmatpush1.bf16.msra.mxu0 0
  %194 = vmatprep.subr.bf16.mxu0 0
  %195 = vmatpush1.bf16.msra.mxu0 0
  %196 = vmatprep.subr.bf16.mxu0 0
  %197 = vmatpush1.bf16.msra.mxu0 0
  %198 = vmatprep.subr.bf16.mxu0 0
  %199 = vmatpush1.bf16.msra.mxu0 0
  %200 = vmatprep.subr.bf16.mxu0 0
  %201 = vmatpush1.bf16.msra.mxu0 0
  %202 = vmatprep.subr.bf16.mxu0 0
  %203 = vmatpush1.bf16.msra.mxu0 0
  %204 = vmatprep.subr.bf16.mxu0 0
  %205 = vmatpush1.bf16.msra.mxu0 0
  %206 = vmatprep.mubr.bf16.mxu0 0
  %207 = vmatmul.mubr.bf16.gmra.mrb[0].mxu0 %v78
  %v208 = vpop.f32.mrb[0].mxu0
  %v209 = vadd.f32 0.0, %v208
  %v210 = vpop.f32.mrb[0].mxu0
  %v211 = vpop.f32.mrb[0].mxu0
  %v212 = vadd.f32 0.0, %v211
  %v213 = vpop.f32.mrb[0].mxu0
  %214 = vmatprep.mubr.bf16.mxu0 0
  %215 = vmatmul.mubr.bf16.gmra.mrb[0].mxu0 %v79
  %v216 = vpop.f32.mrb[0].mxu0
  %v217 = vadd.f32 0.0, %v216
  %v218 = vpop.f32.mrb[0].mxu0
  %v219 = vpop.f32.mrb[0].mxu0
  %v220 = vadd.f32 0.0, %v219
  %v221 = vpop.f32.mrb[0].mxu0
  %222 = vmatprep.mubr.bf16.mxu0 0
  %223 = vmatmul.mubr.bf16.gmra.mrb[0].mxu0 %v80
  %v224 = vpop.f32.mrb[0].mxu0
  %v225 = vadd.f32 0.0, %v224
  %v226 = vpop.f32.mrb[0].mxu0
  %v227 = vpop.f32.mrb[0].mxu0
  %v228 = vadd.f32 0.0, %v227
  %v229 = vpop.f32.mrb[0].mxu0
  %230 = vmatprep.mubr.bf16.mxu0 0
  %231 = vmatmul.mubr.bf16.gmra.mrb[0].mxu0 %v81
  %v232 = vpop.f32.mrb[0].mxu0
  %v233 = vadd.f32 0.0, %v232
  %v234 = vpop.f32.mrb[0].mxu0
  %v235 = vpop.f32.mrb[0].mxu0
  %v236 = vadd.f32 0.0, %v235
  %v237 = vpop.f32.mrb[0].mxu0
  %238 = vmatprep.mubr.bf16.mxu0 0
  %239 = vmatmul.mubr.bf16.gmra.mrb[0].mxu0 %v82
  %v240 = vpop.f32.mrb[0].mxu0
  %v241 = vadd.f32 0.0, %v240
  %v242 = vpop.f32.mrb[0].mxu0
  %v243 = vpop.f32.mrb[0].mxu0
  %v244 = vadd.f32 0.0, %v243
  %v245 = vpop.f32.mrb[0].mxu0
  %246 = vmatprep.mubr.bf16.mxu0 0
  %247 = vmatmul.mubr.bf16.gmra.mrb[0].mxu0 %v83
  %v248 = vpop.f32.mrb[0].mxu0
  %v249 = vadd.f32 0.0, %v248
  %v250 = vpop.f32.mrb[0].mxu0
  %v251 = vpop.f32.mrb[0].mxu0
  %v252 = vadd.f32 0.0, %v251
  %v253 = vpop.f32.mrb[0].mxu0
  %254 = vmatprep.mubr.bf16.mxu0 0
  %255 = vmatmul.mubr.bf16.gmra.mrb[0].mxu0 %v84
  %v256 = vpop.f32.mrb[0].mxu0
  %v257 = vadd.f32 0.0, %v256
  %v258 = vpop.f32.mrb[0].mxu0
  %v259 = vpop.f32.mrb[0].mxu0
  %v260 = vadd.f32 0.0, %v259
  %v261 = vpop.f32.mrb[0].mxu0
  %262 = vmatprep.mubr.bf16.mxu0 0
  %263 = vmatmul.mubr.bf16.gmra.mrb[0].mxu0 %v85
  %v264 = vpop.f32.mrb[0].mxu0
  %v265 = vadd.f32 0.0, %v264
  %v266 = vpop.f32.mrb[0].mxu0
  %v267 = vpop.f32.mrb[0].mxu0
  %v268 = vadd.f32 0.0, %v267
  %v269 = vpop.f32.mrb[0].mxu0
  %270 = vmatprep.mubr.bf16.mxu0 0
  %271 = vmatmul.mubr.bf16.gmra.mrb[0].mxu0 %v86
  %v272 = vpop.f32.mrb[0].mxu0
  %v273 = vadd.f32 0.0, %v272
  %v274 = vpop.f32.mrb[0].mxu0
  %v275 = vpop.f32.mrb[0].mxu0
  %v276 = vadd.f32 0.0, %v275
  %v277 = vpop.f32.mrb[0].mxu0
  %278 = vmatprep.mubr.bf16.mxu0 0
  %279 = vmatmul.mubr.bf16.gmra.mrb[0].mxu0 %v87
  %v280 = vpop.f32.mrb[0].mxu0
  %v281 = vadd.f32 0.0, %v280
  %v282 = vpop.f32.mrb[0].mxu0
  %v283 = vpop.f32.mrb[0].mxu0
  %v284 = vadd.f32 0.0, %v283
  %v285 = vpop.f32.mrb[0].mxu0
  %286 = vmatprep.mubr.bf16.mxu0 0
  %287 = vmatmul.mubr.bf16.gmra.mrb[0].mxu0 %v88
  %v288 = vpop.f32.mrb[0].mxu0
  %v289 = vadd.f32 0.0, %v288
  %v290 = vpop.f32.mrb[0].mxu0
  %v291 = vpop.f32.mrb[0].mxu0
  %v292 = vadd.f32 0.0, %v291
  %v293 = vpop.f32.mrb[0].mxu0
  %294 = vmatprep.mubr.bf16.mxu0 0
  %295 = vmatmul.mubr.bf16.gmra.mrb[0].mxu0 %v89
  %v296 = vpop.f32.mrb[0].mxu0
  %v297 = vadd.f32 0.0, %v296
  %v298 = vpop.f32.mrb[0].mxu0
  %v299 = vpop.f32.mrb[0].mxu0
  %v300 = vadd.f32 0.0, %v299
  %v301 = vpop.f32.mrb[0].mxu0
  %302 = vmatprep.mubr.bf16.mxu0 0
  %303 = vmatmul.mubr.bf16.gmra.mrb[0].mxu0 %v90
  %v304 = vpop.f32.mrb[0].mxu0
  %v305 = vadd.f32 0.0, %v304
  %v306 = vpop.f32.mrb[0].mxu0
  %v307 = vpop.f32.mrb[0].mxu0
  %v308 = vadd.f32 0.0, %v307
  %v309 = vpop.f32.mrb[0].mxu0
  %310 = vmatprep.mubr.bf16.mxu0 0
  %311 = vmatmul.mubr.bf16.gmra.mrb[0].mxu0 %v91
  %v312 = vpop.f32.mrb[0].mxu0
  %v313 = vadd.f32 0.0, %v312
  %v314 = vpop.f32.mrb[0].mxu0
  %v315 = vpop.f32.mrb[0].mxu0
  %v316 = vadd.f32 0.0, %v315
  %v317 = vpop.f32.mrb[0].mxu0
  %318 = vmatprep.mubr.bf16.mxu0 0
  %319 = vmatmul.mubr.bf16.gmra.mrb[0].mxu0 %v92
  %v320 = vpop.f32.mrb[0].mxu0
  %v321 = vadd.f32 0.0, %v320
  %v322 = vpop.f32.mrb[0].mxu0
  %v323 = vpop.f32.mrb[0].mxu0
  %v324 = vadd.f32 0.0, %v323
  %v325 = vpop.f32.mrb[0].mxu0
  %326 = vmatprep.mubr.bf16.mxu0 0
  %327 = vmatmul.mubr.bf16.gmra.mrb[0].mxu0 %v93
  %v328 = vpop.f32.mrb[0].mxu0
  %v329 = vadd.f32 0.0, %v328
  %v330 = vpop.f32.mrb[0].mxu0
  %v331 = vpop.f32.mrb[0].mxu0
  %v332 = vadd.f32 0.0, %v331
  %v333 = vpop.f32.mrb[0].mxu0
  %334 = vmatprep.mubr.bf16.mxu0 0
  %335 = vmatmul.mubr.bf16.gmra.mrb[0].mxu0 %v94
  %v336 = vpop.f32.mrb[0].mxu0
  %v337 = vadd.f32 0.0, %v336
  %v338 = vpop.f32.mrb[0].mxu0
  %v339 = vpop.f32.mrb[0].mxu0
  %v340 = vadd.f32 0.0, %v339
  %v341 = vpop.f32.mrb[0].mxu0
  %342 = vmatprep.mubr.bf16.mxu0 0
  %343 = vmatmul.mubr.bf16.gmra.mrb[0].mxu0 %v95
  %v344 = vpop.f32.mrb[0].mxu0
  %v345 = vadd.f32 0.0, %v344
  %v346 = vpop.f32.mrb[0].mxu0
  %v347 = vpop.f32.mrb[0].mxu0
  %v348 = vadd.f32 0.0, %v347
  %v349 = vpop.f32.mrb[0].mxu0
  %350 = vmatprep.mubr.bf16.mxu0 0
  %351 = vmatmul.mubr.bf16.gmra.mrb[0].mxu0 %v96
  %v352 = vpop.f32.mrb[0].mxu0
  %v353 = vadd.f32 0.0, %v352
  %v354 = vpop.f32.mrb[0].mxu0
  %v355 = vpop.f32.mrb[0].mxu0
  %v356 = vadd.f32 0.0, %v355
  %v357 = vpop.f32.mrb[0].mxu0
  %358 = vmatprep.mubr.bf16.mxu0 0
  %359 = vmatmul.mubr.bf16.gmra.mrb[0].mxu0 %v97
  %v360 = vpop.f32.mrb[0].mxu0
  %v361 = vadd.f32 0.0, %v360
  %v362 = vpop.f32.mrb[0].mxu0
  %v363 = vpop.f32.mrb[0].mxu0
  %v364 = vadd.f32 0.0, %v363
  %v365 = vpop.f32.mrb[0].mxu0
  %366 = vmatprep.mubr.bf16.mxu0 0
  %367 = vmatmul.mubr.bf16.gmra.mrb[0].mxu0 %v98
  %v368 = vpop.f32.mrb[0].mxu0
  %v369 = vadd.f32 0.0, %v368
  %v370 = vpop.f32.mrb[0].mxu0
  %v371 = vpop.f32.mrb[0].mxu0
  %v372 = vadd.f32 0.0, %v371
  %v373 = vpop.f32.mrb[0].mxu0
  %374 = vmatprep.mubr.bf16.mxu0 0
  %375 = vmatmul.mubr.bf16.gmra.mrb[0].mxu0 %v99
  %v376 = vpop.f32.mrb[0].mxu0
  %v377 = vadd.f32 0.0, %v376
  %v378 = vpop.f32.mrb[0].mxu0
  %v379 = vpop.f32.mrb[0].mxu0
  %v380 = vadd.f32 0.0, %v379
  %v381 = vpop.f32.mrb[0].mxu0
  %382 = vmatprep.mubr.bf16.mxu0 0
  %383 = vmatmul.mubr.bf16.gmra.mrb[0].mxu0 %v100
  %v384 = vpop.f32.mrb[0].mxu0
  %v385 = vadd.f32 0.0, %v384
  %v386 = vpop.f32.mrb[0].mxu0
  %v387 = vpop.f32.mrb[0].mxu0
  %v388 = vadd.f32 0.0, %v387
  %v389 = vpop.f32.mrb[0].mxu0
  %390 = vmatprep.mubr.bf16.mxu0 0
  %391 = vmatmul.mubr.bf16.gmra.mrb[0].mxu0 %v101
  %v392 = vpop.f32.mrb[0].mxu0
  %v393 = vadd.f32 0.0, %v392
  %v394 = vpop.f32.mrb[0].mxu0
  %v395 = vpop.f32.mrb[0].mxu0
  %v396 = vadd.f32 0.0, %v395
  %v397 = vpop.f32.mrb[0].mxu0
  %398 = vmatprep.mubr.bf16.mxu0 0
  %399 = vmatmul.mubr.bf16.gmra.mrb[0].mxu0 %v102
  %v400 = vpop.f32.mrb[0].mxu0
  %v401 = vadd.f32 0.0, %v400
  %v402 = vpop.f32.mrb[0].mxu0
  %v403 = vpop.f32.mrb[0].mxu0
  %v404 = vadd.f32 0.0, %v403
  %v405 = vpop.f32.mrb[0].mxu0
  %406 = vmatprep.mubr.bf16.mxu0 0
  %407 = vmatmul.mubr.bf16.gmra.mrb[0].mxu0 %v103
  %v408 = vpop.f32.mrb[0].mxu0
  %v409 = vadd.f32 0.0, %v408
  %v410 = vpop.f32.mrb[0].mxu0
  %v411 = vpop.f32.mrb[0].mxu0
  %v412 = vadd.f32 0.0, %v411
  %v413 = vpop.f32.mrb[0].mxu0
  %414 = vmatprep.mubr.bf16.mxu0 0
  %415 = vmatmul.mubr.bf16.gmra.mrb[0].mxu0 %v104
  %v416 = vpop.f32.mrb[0].mxu0
  %v417 = vadd.f32 0.0, %v416
  %v418 = vpop.f32.mrb[0].mxu0
  %v419 = vpop.f32.mrb[0].mxu0
  %v420 = vadd.f32 0.0, %v419
  %v421 = vpop.f32.mrb[0].mxu0
  %422 = vmatprep.mubr.bf16.mxu0 0
  %423 = vmatmul.mubr.bf16.gmra.mrb[0].mxu0 %v105
  %v424 = vpop.f32.mrb[0].mxu0
  %v425 = vadd.f32 0.0, %v424
  %v426 = vpop.f32.mrb[0].mxu0
  %v427 = vpop.f32.mrb[0].mxu0
  %v428 = vadd.f32 0.0, %v427
  %v429 = vpop.f32.mrb[0].mxu0
  %430 = vmatprep.mubr.bf16.mxu0 0
  %431 = vmatmul.mubr.bf16.gmra.mrb[0].mxu0 %v106
  %v432 = vpop.f32.mrb[0].mxu0
  %v433 = vadd.f32 0.0, %v432
  %v434 = vpop.f32.mrb[0].mxu0
  %v435 = vpop.f32.mrb[0].mxu0
  %v436 = vadd.f32 0.0, %v435
  %v437 = vpop.f32.mrb[0].mxu0
  %438 = vmatprep.mubr.bf16.mxu0 0
  %439 = vmatmul.mubr.bf16.gmra.mrb[0].mxu0 %v107
  %v440 = vpop.f32.mrb[0].mxu0
  %v441 = vadd.f32 0.0, %v440
  %v442 = vpop.f32.mrb[0].mxu0
  %v443 = vpop.f32.mrb[0].mxu0
  %v444 = vadd.f32 0.0, %v443
  %v445 = vpop.f32.mrb[0].mxu0
  %446 = vmatprep.mubr.bf16.mxu0 0
  %447 = vmatmul.mubr.bf16.gmra.mrb[0].mxu0 %v108
  %v448 = vpop.f32.mrb[0].mxu0
  %v449 = vadd.f32 0.0, %v448
  %v450 = vpop.f32.mrb[0].mxu0
  %v451 = vpop.f32.mrb[0].mxu0
  %v452 = vadd.f32 0.0, %v451
  %v453 = vpop.f32.mrb[0].mxu0
  %454 = vmatprep.mubr.bf16.mxu0 0
  %455 = vmatmul.mubr.bf16.gmra.mrb[0].mxu0 %v109
  %v456 = vpop.f32.mrb[0].mxu0
  %v457 = vadd.f32 0.0, %v456
  %v458 = vpop.f32.mrb[0].mxu0
  %v459 = vpop.f32.mrb[0].mxu0
  %v460 = vadd.f32 0.0, %v459
  %v461 = vpop.f32.mrb[0].mxu0
  %462 = vdwg.mxu0
  %v463 = vpack.c.bf16 %v212, %v209
  %v464 = vpack.c.bf16 %v220, %v217
  %v465 = vpack.c.bf16 %v228, %v225
  %v466 = vpack.c.bf16 %v236, %v233
  %v467 = vpack.c.bf16 %v244, %v241
  %v468 = vpack.c.bf16 %v252, %v249
  %v469 = vpack.c.bf16 %v260, %v257
  %v470 = vpack.c.bf16 %v268, %v265
  %v471 = vpack.c.bf16 %v276, %v273
  %v472 = vpack.c.bf16 %v284, %v281
  %v473 = vpack.c.bf16 %v292, %v289
  %v474 = vpack.c.bf16 %v300, %v297
  %v475 = vpack.c.bf16 %v308, %v305
  %v476 = vpack.c.bf16 %v316, %v313
  %v477 = vpack.c.bf16 %v324, %v321
  %v478 = vpack.c.bf16 %v332, %v329
  %v479 = vpack.c.bf16 %v340, %v337
  %v480 = vpack.c.bf16 %v348, %v345
  %v481 = vpack.c.bf16 %v356, %v353
  %v482 = vpack.c.bf16 %v364, %v361
  %v483 = vpack.c.bf16 %v372, %v369
  %v484 = vpack.c.bf16 %v380, %v377
  %v485 = vpack.c.bf16 %v388, %v385
  %v486 = vpack.c.bf16 %v396, %v393
  %v487 = vpack.c.bf16 %v404, %v401
  %v488 = vpack.c.bf16 %v412, %v409
  %v489 = vpack.c.bf16 %v420, %v417
  %v490 = vpack.c.bf16 %v428, %v425
  %v491 = vpack.c.bf16 %v436, %v433
  %v492 = vpack.c.bf16 %v444, %v441
  %v493 = vpack.c.bf16 %v452, %v449
  %v494 = vpack.c.bf16 %v460, %v457
  %v527 = vunpack.c.l.b16 %v463
  %v528 = vunpack.c.h.b16 %v463
  %v529 = vunpack.c.l.b16 %v464
  %v530 = vunpack.c.h.b16 %v464
  %v531 = vunpack.c.l.b16 %v465
  %v532 = vunpack.c.h.b16 %v465
  %v533 = vunpack.c.l.b16 %v466
  %v534 = vunpack.c.h.b16 %v466
  %v535 = vunpack.c.l.b16 %v467
  %v536 = vunpack.c.h.b16 %v467
  %v537 = vunpack.c.l.b16 %v468
  %v538 = vunpack.c.h.b16 %v468
  %v539 = vunpack.c.l.b16 %v469
  %v540 = vunpack.c.h.b16 %v469
  %v541 = vunpack.c.l.b16 %v470
  %v542 = vunpack.c.h.b16 %v470
  %v543 = vunpack.c.l.b16 %v471
  %v544 = vunpack.c.h.b16 %v471
  %v545 = vunpack.c.l.b16 %v472
  %v546 = vunpack.c.h.b16 %v472
  %v547 = vunpack.c.l.b16 %v473
  %v548 = vunpack.c.h.b16 %v473
  %v549 = vunpack.c.l.b16 %v474
  %v550 = vunpack.c.h.b16 %v474
  %v551 = vunpack.c.l.b16 %v475
  %v552 = vunpack.c.h.b16 %v475
  %v553 = vunpack.c.l.b16 %v476
  %v554 = vunpack.c.h.b16 %v476
  %v555 = vunpack.c.l.b16 %v477
  %v556 = vunpack.c.h.b16 %v477
  %v557 = vunpack.c.l.b16 %v478
  %v558 = vunpack.c.h.b16 %v478
  %v559 = vunpack.c.l.b16 %v479
  %v560 = vunpack.c.h.b16 %v479
  %v561 = vunpack.c.l.b16 %v480
  %v562 = vunpack.c.h.b16 %v480
  %v563 = vunpack.c.l.b16 %v481
  %v564 = vunpack.c.h.b16 %v481
  %v565 = vunpack.c.l.b16 %v482
  %v566 = vunpack.c.h.b16 %v482
  %v567 = vunpack.c.l.b16 %v483
  %v568 = vunpack.c.h.b16 %v483
  %v569 = vunpack.c.l.b16 %v484
  %v570 = vunpack.c.h.b16 %v484
  %v571 = vunpack.c.l.b16 %v485
  %v572 = vunpack.c.h.b16 %v485
  %v573 = vunpack.c.l.b16 %v486
  %v574 = vunpack.c.h.b16 %v486
  %v575 = vunpack.c.l.b16 %v487
  %v576 = vunpack.c.h.b16 %v487
  %v577 = vunpack.c.l.b16 %v488
  %v578 = vunpack.c.h.b16 %v488
  %v579 = vunpack.c.l.b16 %v489
  %v580 = vunpack.c.h.b16 %v489
  %v581 = vunpack.c.l.b16 %v490
  %v582 = vunpack.c.h.b16 %v490
  %v583 = vunpack.c.l.b16 %v491
  %v584 = vunpack.c.h.b16 %v491
  %v585 = vunpack.c.l.b16 %v492
  %v586 = vunpack.c.h.b16 %v492
  %v587 = vunpack.c.l.b16 %v493
  %v588 = vunpack.c.h.b16 %v493
  %v589 = vunpack.c.l.b16 %v494
  %v590 = vunpack.c.h.b16 %v494
  %v591 = vpack.c.b16 %v527, %v527
  %v592 = vpack.c.b16 %v528, %v528
  %v593 = vpack.c.b16 %v529, %v529
  %v594 = vpack.c.b16 %v530, %v530
  %v595 = vpack.c.b16 %v531, %v531
  %v596 = vpack.c.b16 %v532, %v532
  %v597 = vpack.c.b16 %v533, %v533
  %v598 = vpack.c.b16 %v534, %v534
  %v599 = vpack.c.b16 %v535, %v535
  %v600 = vpack.c.b16 %v536, %v536
  %v601 = vpack.c.b16 %v537, %v537
  %v602 = vpack.c.b16 %v538, %v538
  %v603 = vpack.c.b16 %v539, %v539
  %v604 = vpack.c.b16 %v540, %v540
  %v605 = vpack.c.b16 %v541, %v541
  %v606 = vpack.c.b16 %v542, %v542
  %v607 = vpack.c.b16 %v543, %v543
  %v608 = vpack.c.b16 %v544, %v544
  %v609 = vpack.c.b16 %v545, %v545
  %v610 = vpack.c.b16 %v546, %v546
  %v611 = vpack.c.b16 %v547, %v547
  %v612 = vpack.c.b16 %v548, %v548
  %v613 = vpack.c.b16 %v549, %v549
  %v614 = vpack.c.b16 %v550, %v550
  %v615 = vpack.c.b16 %v551, %v551
  %v616 = vpack.c.b16 %v552, %v552
  %v617 = vpack.c.b16 %v553, %v553
  %v618 = vpack.c.b16 %v554, %v554
  %v619 = vpack.c.b16 %v555, %v555
  %v620 = vpack.c.b16 %v556, %v556
  %v621 = vpack.c.b16 %v557, %v557
  %v622 = vpack.c.b16 %v558, %v558
  %v623 = vpack.c.b16 %v559, %v559
  %v624 = vpack.c.b16 %v560, %v560
  %v625 = vpack.c.b16 %v561, %v561
  %v626 = vpack.c.b16 %v562, %v562
  %v627 = vpack.c.b16 %v563, %v563
  %v628 = vpack.c.b16 %v564, %v564
  %v629 = vpack.c.b16 %v565, %v565
  %v630 = vpack.c.b16 %v566, %v566
  %v631 = vpack.c.b16 %v567, %v567
  %v632 = vpack.c.b16 %v568, %v568
  %v633 = vpack.c.b16 %v569, %v569
  %v634 = vpack.c.b16 %v570, %v570
  %v635 = vpack.c.b16 %v571, %v571
  %v636 = vpack.c.b16 %v572, %v572
  %v637 = vpack.c.b16 %v573, %v573
  %v638 = vpack.c.b16 %v574, %v574
  %v639 = vpack.c.b16 %v575, %v575
  %v640 = vpack.c.b16 %v576, %v576
  %v641 = vpack.c.b16 %v577, %v577
  %v642 = vpack.c.b16 %v578, %v578
  %v643 = vpack.c.b16 %v579, %v579
  %v644 = vpack.c.b16 %v580, %v580
  %v645 = vpack.c.b16 %v581, %v581
  %v646 = vpack.c.b16 %v582, %v582
  %v647 = vpack.c.b16 %v583, %v583
  %v648 = vpack.c.b16 %v584, %v584
  %v649 = vpack.c.b16 %v585, %v585
  %v650 = vpack.c.b16 %v586, %v586
  %v651 = vpack.c.b16 %v587, %v587
  %v652 = vpack.c.b16 %v588, %v588
  %v653 = vpack.c.b16 %v589, %v589
  %v654 = vpack.c.b16 %v590, %v590
  %719 = vst [vmem:[%s2] sm:$0xf] %v591
  %720 = vst [vmem:[%s2 + $0x4] sm:$0xf] %v592
  %721 = vst [vmem:[%s2 + $0x8] sm:$0xf] %v593
  %722 = vst [vmem:[%s2 + $0xc] sm:$0xf] %v594
  %723 = vst [vmem:[%s2 + $0x10] sm:$0xf] %v595
  %724 = vst [vmem:[%s2 + $0x14] sm:$0xf] %v596
  %725 = vst [vmem:[%s2 + $0x18] sm:$0xf] %v597
  %726 = vst [vmem:[%s2 + $0x1c] sm:$0xf] %v598
  %727 = vst [vmem:[%s2 + $0x20] sm:$0xf] %v599
  %728 = vst [vmem:[%s2 + $0x24] sm:$0xf] %v600
  %729 = vst [vmem:[%s2 + $0x28] sm:$0xf] %v601
  %730 = vst [vmem:[%s2 + $0x2c] sm:$0xf] %v602
  %731 = vst [vmem:[%s2 + $0x30] sm:$0xf] %v603
  %732 = vst [vmem:[%s2 + $0x34] sm:$0xf] %v604
  %733 = vst [vmem:[%s2 + $0x38] sm:$0xf] %v605
  %734 = vst [vmem:[%s2 + $0x3c] sm:$0xf] %v606
  %735 = vst [vmem:[%s2 + $0x40] sm:$0xf] %v607
  %736 = vst [vmem:[%s2 + $0x44] sm:$0xf] %v608
  %737 = vst [vmem:[%s2 + $0x48] sm:$0xf] %v609
  %738 = vst [vmem:[%s2 + $0x4c] sm:$0xf] %v610
  %739 = vst [vmem:[%s2 + $0x50] sm:$0xf] %v611
  %740 = vst [vmem:[%s2 + $0x54] sm:$0xf] %v612
  %741 = vst [vmem:[%s2 + $0x58] sm:$0xf] %v613
  %742 = vst [vmem:[%s2 + $0x5c] sm:$0xf] %v614
  %743 = vst [vmem:[%s2 + $0x60] sm:$0xf] %v615
  %744 = vst [vmem:[%s2 + $0x64] sm:$0xf] %v616
  %745 = vst [vmem:[%s2 + $0x68] sm:$0xf] %v617
  %746 = vst [vmem:[%s2 + $0x6c] sm:$0xf] %v618
  %747 = vst [vmem:[%s2 + $0x70] sm:$0xf] %v619
  %748 = vst [vmem:[%s2 + $0x74] sm:$0xf] %v620
  %749 = vst [vmem:[%s2 + $0x78] sm:$0xf] %v621
  %750 = vst [vmem:[%s2 + $0x7c] sm:$0xf] %v622
  %751 = vst [vmem:[%s2 + $0x80] sm:$0xf] %v623
  %752 = vst [vmem:[%s2 + $0x84] sm:$0xf] %v624
  %753 = vst [vmem:[%s2 + $0x88] sm:$0xf] %v625
  %754 = vst [vmem:[%s2 + $0x8c] sm:$0xf] %v626
  %755 = vst [vmem:[%s2 + $0x90] sm:$0xf] %v627
  %756 = vst [vmem:[%s2 + $0x94] sm:$0xf] %v628
  %757 = vst [vmem:[%s2 + $0x98] sm:$0xf] %v629
  %758 = vst [vmem:[%s2 + $0x9c] sm:$0xf] %v630
  %759 = vst [vmem:[%s2 + $0xa0] sm:$0xf] %v631
  %760 = vst [vmem:[%s2 + $0xa4] sm:$0xf] %v632
  %761 = vst [vmem:[%s2 + $0xa8] sm:$0xf] %v633
  %762 = vst [vmem:[%s2 + $0xac] sm:$0xf] %v634
  %763 = vst [vmem:[%s2 + $0xb0] sm:$0xf] %v635
  %764 = vst [vmem:[%s2 + $0xb4] sm:$0xf] %v636
  %765 = vst [vmem:[%s2 + $0xb8] sm:$0xf] %v637
  %766 = vst [vmem:[%s2 + $0xbc] sm:$0xf] %v638
  %767 = vst [vmem:[%s2 + $0xc0] sm:$0xf] %v639
  %768 = vst [vmem:[%s2 + $0xc4] sm:$0xf] %v640
  %769 = vst [vmem:[%s2 + $0xc8] sm:$0xf] %v641
  %770 = vst [vmem:[%s2 + $0xcc] sm:$0xf] %v642
  %771 = vst [vmem:[%s2 + $0xd0] sm:$0xf] %v643
  %772 = vst [vmem:[%s2 + $0xd4] sm:$0xf] %v644
  %773 = vst [vmem:[%s2 + $0xd8] sm:$0xf] %v645
  %774 = vst [vmem:[%s2 + $0xdc] sm:$0xf] %v646
  %775 = vst [vmem:[%s2 + $0xe0] sm:$0xf] %v647
  %776 = vst [vmem:[%s2 + $0xe4] sm:$0xf] %v648
  %777 = vst [vmem:[%s2 + $0xe8] sm:$0xf] %v649
  %778 = vst [vmem:[%s2 + $0xec] sm:$0xf] %v650
  %779 = vst [vmem:[%s2 + $0xf0] sm:$0xf] %v651
  %780 = vst [vmem:[%s2 + $0xf4] sm:$0xf] %v652
  %781 = vst [vmem:[%s2 + $0xf8] sm:$0xf] %v653
  %782 = vst [vmem:[%s2 + $0xfc] sm:$0xf] %v654
  %v783 = vadd.f32 %v209, %v212
  %v784 = vadd.f32 %v783, %v217
  %v785 = vadd.f32 %v784, %v220
  %v786 = vadd.f32 %v785, %v225
  %v787 = vadd.f32 %v786, %v228
  %v788 = vadd.f32 %v787, %v233
  %v789 = vadd.f32 %v788, %v236
  %v790 = vadd.f32 %v789, %v241
  %v791 = vadd.f32 %v790, %v244
  %v792 = vadd.f32 %v791, %v249
  %v793 = vadd.f32 %v792, %v252
  %v794 = vadd.f32 %v793, %v257
  %v795 = vadd.f32 %v794, %v260
  %v796 = vadd.f32 %v795, %v265
  %v797 = vadd.f32 %v796, %v268
  %v798 = vadd.f32 %v797, %v273
  %v799 = vadd.f32 %v798, %v276
  %v800 = vadd.f32 %v799, %v281
  %v801 = vadd.f32 %v800, %v284
  %v802 = vadd.f32 %v801, %v289
  %v803 = vadd.f32 %v802, %v292
  %v804 = vadd.f32 %v803, %v297
  %v805 = vadd.f32 %v804, %v300
  %v806 = vadd.f32 %v805, %v305
  %v807 = vadd.f32 %v806, %v308
  %v808 = vadd.f32 %v807, %v313
  %v809 = vadd.f32 %v808, %v316
  %v810 = vadd.f32 %v809, %v321
  %v811 = vadd.f32 %v810, %v324
  %v812 = vadd.f32 %v811, %v329
  %v813 = vadd.f32 %v812, %v332
  %v814 = vadd.f32 %v813, %v337
  %v815 = vadd.f32 %v814, %v340
  %v816 = vadd.f32 %v815, %v345
  %v817 = vadd.f32 %v816, %v348
  %v818 = vadd.f32 %v817, %v353
  %v819 = vadd.f32 %v818, %v356
  %v820 = vadd.f32 %v819, %v361
  %v821 = vadd.f32 %v820, %v364
  %v822 = vadd.f32 %v821, %v369
  %v823 = vadd.f32 %v822, %v372
  %v824 = vadd.f32 %v823, %v377
  %v825 = vadd.f32 %v824, %v380
  %v826 = vadd.f32 %v825, %v385
  %v827 = vadd.f32 %v826, %v388
  %v828 = vadd.f32 %v827, %v393
  %v829 = vadd.f32 %v828, %v396
  %v830 = vadd.f32 %v829, %v401
  %v831 = vadd.f32 %v830, %v404
  %v832 = vadd.f32 %v831, %v409
  %v833 = vadd.f32 %v832, %v412
  %v834 = vadd.f32 %v833, %v417
  %v835 = vadd.f32 %v834, %v420
  %v836 = vadd.f32 %v835, %v425
  %v837 = vadd.f32 %v836, %v428
  %v838 = vadd.f32 %v837, %v433
  %v839 = vadd.f32 %v838, %v436
  %v840 = vadd.f32 %v839, %v441
  %v841 = vadd.f32 %v840, %v444
  %v842 = vadd.f32 %v841, %v449
  %v843 = vadd.f32 %v842, %v452
  %v844 = vadd.f32 %v843, %v457
  %v845 = vadd.f32 %v844, %v460
  %v846 = vrot.slane %v845, 4
  %v847 = vadd.f32 %v845, %v846
  %v848 = vrot.slane %v847, 2
  %v849 = vadd.f32 %v847, %v848
  %v850 = vrot.slane %v849, 1
  %v851 = vadd.f32 %v849, %v850
  %v852 = vmul.f32 %v209, %v209
  %v853 = vmul.f32 %v212, %v212
  %v854 = vmul.f32 %v217, %v217
  %v855 = vmul.f32 %v220, %v220
  %v856 = vmul.f32 %v225, %v225
  %v857 = vmul.f32 %v228, %v228
  %v858 = vmul.f32 %v233, %v233
  %v859 = vmul.f32 %v236, %v236
  %v860 = vmul.f32 %v241, %v241
  %v861 = vmul.f32 %v244, %v244
  %v862 = vmul.f32 %v249, %v249
  %v863 = vmul.f32 %v252, %v252
  %v864 = vmul.f32 %v257, %v257
  %v865 = vmul.f32 %v260, %v260
  %v866 = vmul.f32 %v265, %v265
  %v867 = vmul.f32 %v268, %v268
  %v868 = vmul.f32 %v273, %v273
  %v869 = vmul.f32 %v276, %v276
  %v870 = vmul.f32 %v281, %v281
  %v871 = vmul.f32 %v284, %v284
  %v872 = vmul.f32 %v289, %v289
  %v873 = vmul.f32 %v292, %v292
  %v874 = vmul.f32 %v297, %v297
  %v875 = vmul.f32 %v300, %v300
  %v876 = vmul.f32 %v305, %v305
  %v877 = vmul.f32 %v308, %v308
  %v878 = vmul.f32 %v313, %v313
  %v879 = vmul.f32 %v316, %v316
  %v880 = vmul.f32 %v321, %v321
  %v881 = vmul.f32 %v324, %v324
  %v882 = vmul.f32 %v329, %v329
  %v883 = vmul.f32 %v332, %v332
  %v884 = vmul.f32 %v337, %v337
  %v885 = vmul.f32 %v340, %v340
  %v886 = vmul.f32 %v345, %v345
  %v887 = vmul.f32 %v348, %v348
  %v888 = vmul.f32 %v353, %v353
  %v889 = vmul.f32 %v356, %v356
  %v890 = vmul.f32 %v361, %v361
  %v891 = vmul.f32 %v364, %v364
  %v892 = vmul.f32 %v369, %v369
  %v893 = vmul.f32 %v372, %v372
  %v894 = vmul.f32 %v377, %v377
  %v895 = vmul.f32 %v380, %v380
  %v896 = vmul.f32 %v385, %v385
  %v897 = vmul.f32 %v388, %v388
  %v898 = vmul.f32 %v393, %v393
  %v899 = vmul.f32 %v396, %v396
  %v900 = vmul.f32 %v401, %v401
  %v901 = vmul.f32 %v404, %v404
  %v902 = vmul.f32 %v409, %v409
  %v903 = vmul.f32 %v412, %v412
  %v904 = vmul.f32 %v417, %v417
  %v905 = vmul.f32 %v420, %v420
  %v906 = vmul.f32 %v425, %v425
  %v907 = vmul.f32 %v428, %v428
  %v908 = vmul.f32 %v433, %v433
  %v909 = vmul.f32 %v436, %v436
  %v910 = vmul.f32 %v441, %v441
  %v911 = vmul.f32 %v444, %v444
  %v912 = vmul.f32 %v449, %v449
  %v913 = vmul.f32 %v452, %v452
  %v914 = vmul.f32 %v457, %v457
  %v915 = vmul.f32 %v460, %v460
  %v916 = vadd.f32 %v852, %v853
  %v917 = vadd.f32 %v916, %v854
  %v918 = vadd.f32 %v917, %v855
  %v919 = vadd.f32 %v918, %v856
  %v920 = vadd.f32 %v919, %v857
  %v921 = vadd.f32 %v920, %v858
  %v922 = vadd.f32 %v921, %v859
  %v923 = vadd.f32 %v922, %v860
  %v924 = vadd.f32 %v923, %v861
  %v925 = vadd.f32 %v924, %v862
  %v926 = vadd.f32 %v925, %v863
  %v927 = vadd.f32 %v926, %v864
  %v928 = vadd.f32 %v927, %v865
  %v929 = vadd.f32 %v928, %v866
  %v930 = vadd.f32 %v929, %v867
  %v931 = vadd.f32 %v930, %v868
  %v932 = vadd.f32 %v931, %v869
  %v933 = vadd.f32 %v932, %v870
  %v934 = vadd.f32 %v933, %v871
  %v935 = vadd.f32 %v934, %v872
  %v936 = vadd.f32 %v935, %v873
  %v937 = vadd.f32 %v936, %v874
  %v938 = vadd.f32 %v937, %v875
  %v939 = vadd.f32 %v938, %v876
  %v940 = vadd.f32 %v939, %v877
  %v941 = vadd.f32 %v940, %v878
  %v942 = vadd.f32 %v941, %v879
  %v943 = vadd.f32 %v942, %v880
  %v944 = vadd.f32 %v943, %v881
  %v945 = vadd.f32 %v944, %v882
  %v946 = vadd.f32 %v945, %v883
  %v947 = vadd.f32 %v946, %v884
  %v948 = vadd.f32 %v947, %v885
  %v949 = vadd.f32 %v948, %v886
  %v950 = vadd.f32 %v949, %v887
  %v951 = vadd.f32 %v950, %v888
  %v952 = vadd.f32 %v951, %v889
  %v953 = vadd.f32 %v952, %v890
  %v954 = vadd.f32 %v953, %v891
  %v955 = vadd.f32 %v954, %v892
  %v956 = vadd.f32 %v955, %v893
  %v957 = vadd.f32 %v956, %v894
  %v958 = vadd.f32 %v957, %v895
  %v959 = vadd.f32 %v958, %v896
  %v960 = vadd.f32 %v959, %v897
  %v961 = vadd.f32 %v960, %v898
  %v962 = vadd.f32 %v961, %v899
  %v963 = vadd.f32 %v962, %v900
  %v964 = vadd.f32 %v963, %v901
  %v965 = vadd.f32 %v964, %v902
  %v966 = vadd.f32 %v965, %v903
  %v967 = vadd.f32 %v966, %v904
  %v968 = vadd.f32 %v967, %v905
  %v969 = vadd.f32 %v968, %v906
  %v970 = vadd.f32 %v969, %v907
  %v971 = vadd.f32 %v970, %v908
  %v972 = vadd.f32 %v971, %v909
  %v973 = vadd.f32 %v972, %v910
  %v974 = vadd.f32 %v973, %v911
  %v975 = vadd.f32 %v974, %v912
  %v976 = vadd.f32 %v975, %v913
  %v977 = vadd.f32 %v976, %v914
  %v978 = vadd.f32 %v977, %v915
  %v979 = vrot.slane %v978, 4
  %v980 = vadd.f32 %v978, %v979
  %v981 = vrot.slane %v980, 2
  %v982 = vadd.f32 %v980, %v981
  %v983 = vrot.slane %v982, 1
  %v984 = vadd.f32 %v982, %v983
  %vm985 = vcmask 1040384
  %v986 = vsel %vm985, %v851, %v984
  %987 = vst [vmem:[%s3] sm:$0x3] %v986
  // Predicated region
  $region10: #{bottleneck_forward.4} parent=0 // pred_check
    _
  $region11: #{bottleneck_forward.4} parent=0 // pred_check_branch
    %989 = sbr.rel (0) target = $region13
  $region12: #{bottleneck_forward.4} parent=0 // pred_region
    _
  $region13: #{bottleneck_forward.4} parent=0 // pred_fallthru
    _
  // Predicated region
  $region14: #{bottleneck_forward.4} parent=0 // pred_check
    _
  $region15: #{bottleneck_forward.4} parent=0 // pred_check_branch
    %991 = sbr.rel (0) target = $region17
  $region16: #{bottleneck_forward.4} parent=0 // pred_region
    _
  $region17: #{bottleneck_forward.4} parent=0 // pred_fallthru
    _
  // Predicated region
  $region18: #{bottleneck_forward.4} parent=0 // pred_check
    _
  $region19: #{bottleneck_forward.4} parent=0 // pred_check_branch
    %993 = sbr.rel (0) target = $region21
  $region20: #{bottleneck_forward.4} parent=0 // pred_region
    _
  $region21: #{bottleneck_forward.4} parent=0 // pred_fallthru
    _
  // Predicated region
  $region22: #{bottleneck_forward.4} parent=0 // pred_check
    _
  $region23: #{bottleneck_forward.4} parent=0 // pred_check_branch
    %995 = sbr.rel (0) target = $region25
  $region24: #{bottleneck_forward.4} parent=0 // pred_region
    _
  $region25: #{bottleneck_forward.4} parent=0 // pred_fallthru
    _

// kernel: bottleneck_forward.7
$region0: #{bottleneck_forward.7}
  #allocation0 [shape = 'u32[]', space=smem, size = 0x4, offset = 0x4, fixed_abs, tag = 'smem constant byte address 0x4 - core index']
  #allocation1 [shape = 'u32[144,128]{1,0:T(1,128)}', space=vmem, size = 0x12000, scoped, tag = 'internal scratch']
  %s0 = inlined_call_operand.vmem [shape: bf16[512,128], index: 0, kind: input, shape index: {}]
  %s1 = inlined_call_operand.vmem [shape: f32[512,128], index: 1, kind: input, shape index: {}, may-alias: {1,4}]
  %s2 = inlined_call_operand.vmem [shape: f32[1,128], index: 2, kind: input, shape index: {}]
  %s3 = inlined_call_operand.vmem [shape: f32[1,128], index: 3, kind: input, shape index: {}]
  %s4 = inlined_call_operand.vmem [shape: f32[512,128], index: 4, kind: output, shape index: {}, may-alias: {1,4}]
  %s5 = sld [smem:[#allocation0]]
  $region26: #{bottleneck_forward.7} parent=0
    _
  %s7 = ssub.s32 1, %s5
  %s8 = scalar_select 0, %s7, %s5
  // Predicated region
  $region2: #{bottleneck_forward.7} parent=0 // pred_check
    _
  $region3: #{bottleneck_forward.7} parent=0 // pred_check_branch
    %10 = sbr.rel (0) target = $region5
  $region4: #{bottleneck_forward.7} parent=0 // pred_region
    _
  $region5: #{bottleneck_forward.7} parent=0 // pred_fallthru
    _
  // Predicated region
  $region6: #{bottleneck_forward.7} parent=0 // pred_check
    _
  $region7: #{bottleneck_forward.7} parent=0 // pred_check_branch
    %12 = sbr.rel (0) target = $region9
  $region8: #{bottleneck_forward.7} parent=0 // pred_region
    _
  $region9: #{bottleneck_forward.7} parent=0 // pred_fallthru
    _
  // Predicated region
  $region10: #{bottleneck_forward.7} parent=0 // pred_check
    _
  $region11: #{bottleneck_forward.7} parent=0 // pred_check_branch
    %14 = sbr.rel (0) target = $region13
  $region12: #{bottleneck_forward.7} parent=0 // pred_region
    _
  $region13: #{bottleneck_forward.7} parent=0 // pred_fallthru
    _
  // Predicated region
  $region14: #{bottleneck_forward.7} parent=0 // pred_check
    _
  $region15: #{bottleneck_forward.7} parent=0 // pred_check_branch
    %16 = sbr.rel (0) target = $region17
  $region16: #{bottleneck_forward.7} parent=0 // pred_region
    _
  $region17: #{bottleneck_forward.7} parent=0 // pred_fallthru
    _
  %v17 = vld [vmem:[%s0] sm:$0xf]
  %v18 = vld [vmem:[%s0 + $0x4] sm:$0xf]
  %v19 = vld [vmem:[%s0 + $0x8] sm:$0xf]
  %v20 = vld [vmem:[%s0 + $0xc] sm:$0xf]
  %v21 = vld [vmem:[%s0 + $0x10] sm:$0xf]
  %v22 = vld [vmem:[%s0 + $0x14] sm:$0xf]
  %v23 = vld [vmem:[%s0 + $0x18] sm:$0xf]
  %v24 = vld [vmem:[%s0 + $0x1c] sm:$0xf]
  %v25 = vld [vmem:[%s0 + $0x20] sm:$0xf]
  %v26 = vld [vmem:[%s0 + $0x24] sm:$0xf]
  %v27 = vld [vmem:[%s0 + $0x28] sm:$0xf]
  %v28 = vld [vmem:[%s0 + $0x2c] sm:$0xf]
  %v29 = vld [vmem:[%s0 + $0x30] sm:$0xf]
  %v30 = vld [vmem:[%s0 + $0x34] sm:$0xf]
  %v31 = vld [vmem:[%s0 + $0x38] sm:$0xf]
  %v32 = vld [vmem:[%s0 + $0x3c] sm:$0xf]
  %v33 = vld [vmem:[%s0 + $0x40] sm:$0xf]
  %v34 = vld [vmem:[%s0 + $0x44] sm:$0xf]
  %v35 = vld [vmem:[%s0 + $0x48] sm:$0xf]
  %v36 = vld [vmem:[%s0 + $0x4c] sm:$0xf]
  %v37 = vld [vmem:[%s0 + $0x50] sm:$0xf]
  %v38 = vld [vmem:[%s0 + $0x54] sm:$0xf]
  %v39 = vld [vmem:[%s0 + $0x58] sm:$0xf]
  %v40 = vld [vmem:[%s0 + $0x5c] sm:$0xf]
  %v41 = vld [vmem:[%s0 + $0x60] sm:$0xf]
  %v42 = vld [vmem:[%s0 + $0x64] sm:$0xf]
  %v43 = vld [vmem:[%s0 + $0x68] sm:$0xf]
  %v44 = vld [vmem:[%s0 + $0x6c] sm:$0xf]
  %v45 = vld [vmem:[%s0 + $0x70] sm:$0xf]
  %v46 = vld [vmem:[%s0 + $0x74] sm:$0xf]
  %v47 = vld [vmem:[%s0 + $0x78] sm:$0xf]
  %v48 = vld [vmem:[%s0 + $0x7c] sm:$0xf]
  %v49 = vld [vmem:[%s0 + $0x80] sm:$0xf]
  %v50 = vld [vmem:[%s0 + $0x84] sm:$0xf]
  %v51 = vld [vmem:[%s0 + $0x88] sm:$0xf]
  %v52 = vld [vmem:[%s0 + $0x8c] sm:$0xf]
  %v53 = vld [vmem:[%s0 + $0x90] sm:$0xf]
  %v54 = vld [vmem:[%s0 + $0x94] sm:$0xf]
  %v55 = vld [vmem:[%s0 + $0x98] sm:$0xf]
  %v56 = vld [vmem:[%s0 + $0x9c] sm:$0xf]
  %v57 = vld [vmem:[%s0 + $0xa0] sm:$0xf]
  %v58 = vld [vmem:[%s0 + $0xa4] sm:$0xf]
  %v59 = vld [vmem:[%s0 + $0xa8] sm:$0xf]
  %v60 = vld [vmem:[%s0 + $0xac] sm:$0xf]
  %v61 = vld [vmem:[%s0 + $0xb0] sm:$0xf]
  %v62 = vld [vmem:[%s0 + $0xb4] sm:$0xf]
  %v63 = vld [vmem:[%s0 + $0xb8] sm:$0xf]
  %v64 = vld [vmem:[%s0 + $0xbc] sm:$0xf]
  %v65 = vld [vmem:[%s0 + $0xc0] sm:$0xf]
  %v66 = vld [vmem:[%s0 + $0xc4] sm:$0xf]
  %v67 = vld [vmem:[%s0 + $0xc8] sm:$0xf]
  %v68 = vld [vmem:[%s0 + $0xcc] sm:$0xf]
  %v69 = vld [vmem:[%s0 + $0xd0] sm:$0xf]
  %v70 = vld [vmem:[%s0 + $0xd4] sm:$0xf]
  %v71 = vld [vmem:[%s0 + $0xd8] sm:$0xf]
  %v72 = vld [vmem:[%s0 + $0xdc] sm:$0xf]
  %v73 = vld [vmem:[%s0 + $0xe0] sm:$0xf]
  %v74 = vld [vmem:[%s0 + $0xe4] sm:$0xf]
  %v75 = vld [vmem:[%s0 + $0xe8] sm:$0xf]
  %v76 = vld [vmem:[%s0 + $0xec] sm:$0xf]
  %v77 = vld [vmem:[%s0 + $0xf0] sm:$0xf]
  %v78 = vld [vmem:[%s0 + $0xf4] sm:$0xf]
  %v79 = vld [vmem:[%s0 + $0xf8] sm:$0xf]
  %v80 = vld [vmem:[%s0 + $0xfc] sm:$0xf]
  %v81 = vunpack.c.l.bf16 %v17
  %v82 = vunpack.c.l.bf16 %v18
  %v83 = vunpack.c.l.bf16 %v19
  %v84 = vunpack.c.l.bf16 %v20
  %v85 = vunpack.c.l.bf16 %v21
  %v86 = vunpack.c.l.bf16 %v22
  %v87 = vunpack.c.l.bf16 %v23
  %v88 = vunpack.c.l.bf16 %v24
  %v89 = vunpack.c.l.bf16 %v25
  %v90 = vunpack.c.l.bf16 %v26
  %v91 = vunpack.c.l.bf16 %v27
  %v92 = vunpack.c.l.bf16 %v28
  %v93 = vunpack.c.l.bf16 %v29
  %v94 = vunpack.c.l.bf16 %v30
  %v95 = vunpack.c.l.bf16 %v31
  %v96 = vunpack.c.l.bf16 %v32
  %v97 = vunpack.c.l.bf16 %v33
  %v98 = vunpack.c.l.bf16 %v34
  %v99 = vunpack.c.l.bf16 %v35
  %v100 = vunpack.c.l.bf16 %v36
  %v101 = vunpack.c.l.bf16 %v37
  %v102 = vunpack.c.l.bf16 %v38
  %v103 = vunpack.c.l.bf16 %v39
  %v104 = vunpack.c.l.bf16 %v40
  %v105 = vunpack.c.l.bf16 %v41
  %v106 = vunpack.c.l.bf16 %v42
  %v107 = vunpack.c.l.bf16 %v43
  %v108 = vunpack.c.l.bf16 %v44
  %v109 = vunpack.c.l.bf16 %v45
  %v110 = vunpack.c.l.bf16 %v46
  %v111 = vunpack.c.l.bf16 %v47
  %v112 = vunpack.c.l.bf16 %v48
  %v113 = vunpack.c.l.bf16 %v49
  %v114 = vunpack.c.l.bf16 %v50
  %v115 = vunpack.c.l.bf16 %v51
  %v116 = vunpack.c.l.bf16 %v52
  %v117 = vunpack.c.l.bf16 %v53
  %v118 = vunpack.c.l.bf16 %v54
  %v119 = vunpack.c.l.bf16 %v55
  %v120 = vunpack.c.l.bf16 %v56
  %v121 = vunpack.c.l.bf16 %v57
  %v122 = vunpack.c.l.bf16 %v58
  %v123 = vunpack.c.l.bf16 %v59
  %v124 = vunpack.c.l.bf16 %v60
  %v125 = vunpack.c.l.bf16 %v61
  %v126 = vunpack.c.l.bf16 %v62
  %v127 = vunpack.c.l.bf16 %v63
  %v128 = vunpack.c.l.bf16 %v64
  %v129 = vunpack.c.l.bf16 %v65
  %v130 = vunpack.c.l.bf16 %v66
  %v131 = vunpack.c.l.bf16 %v67
  %v132 = vunpack.c.l.bf16 %v68
  %v133 = vunpack.c.l.bf16 %v69
  %v134 = vunpack.c.l.bf16 %v70
  %v135 = vunpack.c.l.bf16 %v71
  %v136 = vunpack.c.l.bf16 %v72
  %v137 = vunpack.c.l.bf16 %v73
  %v138 = vunpack.c.l.bf16 %v74
  %v139 = vunpack.c.l.bf16 %v75
  %v140 = vunpack.c.l.bf16 %v76
  %v141 = vunpack.c.l.bf16 %v77
  %v142 = vunpack.c.l.bf16 %v78
  %v143 = vunpack.c.l.bf16 %v79
  %v144 = vunpack.c.l.bf16 %v80
  %v145 = vld [vmem:[%s2] sm:$0x1]
  %v147 = vlaneseq
  %v148 = vshrl.u32 %v147, 7
  %v149 = vsub.s32 0, %v148
  %v150 = vrot.slane %v145, %v149
  %v152 = vmul.f32 %v81, %v150
  %v153 = vmul.f32 %v82, %v150
  %v154 = vmul.f32 %v83, %v150
  %v155 = vmul.f32 %v84, %v150
  %v156 = vmul.f32 %v85, %v150
  %v157 = vmul.f32 %v86, %v150
  %v158 = vmul.f32 %v87, %v150
  %v159 = vmul.f32 %v88, %v150
  %v160 = vmul.f32 %v89, %v150
  %v161 = vmul.f32 %v90, %v150
  %v162 = vmul.f32 %v91, %v150
  %v163 = vmul.f32 %v92, %v150
  %v164 = vmul.f32 %v93, %v150
  %v165 = vmul.f32 %v94, %v150
  %v166 = vmul.f32 %v95, %v150
  %v167 = vmul.f32 %v96, %v150
  %v168 = vmul.f32 %v97, %v150
  %v169 = vmul.f32 %v98, %v150
  %v170 = vmul.f32 %v99, %v150
  %v171 = vmul.f32 %v100, %v150
  %v172 = vmul.f32 %v101, %v150
  %v173 = vmul.f32 %v102, %v150
  %v174 = vmul.f32 %v103, %v150
  %v175 = vmul.f32 %v104, %v150
  %v176 = vmul.f32 %v105, %v150
  %v177 = vmul.f32 %v106, %v150
  %v178 = vmul.f32 %v107, %v150
  %v179 = vmul.f32 %v108, %v150
  %v180 = vmul.f32 %v109, %v150
  %v181 = vmul.f32 %v110, %v150
  %v182 = vmul.f32 %v111, %v150
  %v183 = vmul.f32 %v112, %v150
  %v184 = vmul.f32 %v113, %v150
  %v185 = vmul.f32 %v114, %v150
  %v186 = vmul.f32 %v115, %v150
  %v187 = vmul.f32 %v116, %v150
  %v188 = vmul.f32 %v117, %v150
  %v189 = vmul.f32 %v118, %v150
  %v190 = vmul.f32 %v119, %v150
  %v191 = vmul.f32 %v120, %v150
  %v192 = vmul.f32 %v121, %v150
  %v193 = vmul.f32 %v122, %v150
  %v194 = vmul.f32 %v123, %v150
  %v195 = vmul.f32 %v124, %v150
  %v196 = vmul.f32 %v125, %v150
  %v197 = vmul.f32 %v126, %v150
  %v198 = vmul.f32 %v127, %v150
  %v199 = vmul.f32 %v128, %v150
  %v200 = vmul.f32 %v129, %v150
  %v201 = vmul.f32 %v130, %v150
  %v202 = vmul.f32 %v131, %v150
  %v203 = vmul.f32 %v132, %v150
  %v204 = vmul.f32 %v133, %v150
  %v205 = vmul.f32 %v134, %v150
  %v206 = vmul.f32 %v135, %v150
  %v207 = vmul.f32 %v136, %v150
  %v208 = vmul.f32 %v137, %v150
  %v209 = vmul.f32 %v138, %v150
  %v210 = vmul.f32 %v139, %v150
  %v211 = vmul.f32 %v140, %v150
  %v212 = vmul.f32 %v141, %v150
  %v213 = vmul.f32 %v142, %v150
  %v214 = vmul.f32 %v143, %v150
  %v215 = vmul.f32 %v144, %v150
  %v216 = vld [vmem:[%s3] sm:$0x1]
  %v218 = vlaneseq
  %v219 = vshrl.u32 %v218, 7
  %v220 = vsub.s32 0, %v219
  %v221 = vrot.slane %v216, %v220
  %v223 = vadd.f32 %v152, %v221
  %v224 = vadd.f32 %v153, %v221
  %v225 = vadd.f32 %v154, %v221
  %v226 = vadd.f32 %v155, %v221
  %v227 = vadd.f32 %v156, %v221
  %v228 = vadd.f32 %v157, %v221
  %v229 = vadd.f32 %v158, %v221
  %v230 = vadd.f32 %v159, %v221
  %v231 = vadd.f32 %v160, %v221
  %v232 = vadd.f32 %v161, %v221
  %v233 = vadd.f32 %v162, %v221
  %v234 = vadd.f32 %v163, %v221
  %v235 = vadd.f32 %v164, %v221
  %v236 = vadd.f32 %v165, %v221
  %v237 = vadd.f32 %v166, %v221
  %v238 = vadd.f32 %v167, %v221
  %v239 = vadd.f32 %v168, %v221
  %v240 = vadd.f32 %v169, %v221
  %v241 = vadd.f32 %v170, %v221
  %v242 = vadd.f32 %v171, %v221
  %v243 = vadd.f32 %v172, %v221
  %v244 = vadd.f32 %v173, %v221
  %v245 = vadd.f32 %v174, %v221
  %v246 = vadd.f32 %v175, %v221
  %v247 = vadd.f32 %v176, %v221
  %v248 = vadd.f32 %v177, %v221
  %v249 = vadd.f32 %v178, %v221
  %v250 = vadd.f32 %v179, %v221
  %v251 = vadd.f32 %v180, %v221
  %v252 = vadd.f32 %v181, %v221
  %v253 = vadd.f32 %v182, %v221
  %v254 = vadd.f32 %v183, %v221
  %v255 = vadd.f32 %v184, %v221
  %v256 = vadd.f32 %v185, %v221
  %v257 = vadd.f32 %v186, %v221
  %v258 = vadd.f32 %v187, %v221
  %v259 = vadd.f32 %v188, %v221
  %v260 = vadd.f32 %v189, %v221
  %v261 = vadd.f32 %v190, %v221
  %v262 = vadd.f32 %v191, %v221
  %v263 = vadd.f32 %v192, %v221
  %v264 = vadd.f32 %v193, %v221
  %v265 = vadd.f32 %v194, %v221
  %v266 = vadd.f32 %v195, %v221
  %v267 = vadd.f32 %v196, %v221
  %v268 = vadd.f32 %v197, %v221
  %v269 = vadd.f32 %v198, %v221
  %v270 = vadd.f32 %v199, %v221
  %v271 = vadd.f32 %v200, %v221
  %v272 = vadd.f32 %v201, %v221
  %v273 = vadd.f32 %v202, %v221
  %v274 = vadd.f32 %v203, %v221
  %v275 = vadd.f32 %v204, %v221
  %v276 = vadd.f32 %v205, %v221
  %v277 = vadd.f32 %v206, %v221
  %v278 = vadd.f32 %v207, %v221
  %v279 = vadd.f32 %v208, %v221
  %v280 = vadd.f32 %v209, %v221
  %v281 = vadd.f32 %v210, %v221
  %v282 = vadd.f32 %v211, %v221
  %v283 = vadd.f32 %v212, %v221
  %v284 = vadd.f32 %v213, %v221
  %v285 = vadd.f32 %v214, %v221
  %v286 = vadd.f32 %v215, %v221
  %v287 = vld [vmem:[%s1] sm:$0xff]
  %v288 = vld [vmem:[%s1 + $0x8] sm:$0xff]
  %v289 = vld [vmem:[%s1 + $0x10] sm:$0xff]
  %v290 = vld [vmem:[%s1 + $0x18] sm:$0xff]
  %v291 = vld [vmem:[%s1 + $0x20] sm:$0xff]
  %v292 = vld [vmem:[%s1 + $0x28] sm:$0xff]
  %v293 = vld [vmem:[%s1 + $0x30] sm:$0xff]
  %v294 = vld [vmem:[%s1 + $0x38] sm:$0xff]
  %v295 = vld [vmem:[%s1 + $0x40] sm:$0xff]
  %v296 = vld [vmem:[%s1 + $0x48] sm:$0xff]
  %v297 = vld [vmem:[%s1 + $0x50] sm:$0xff]
  %v298 = vld [vmem:[%s1 + $0x58] sm:$0xff]
  %v299 = vld [vmem:[%s1 + $0x60] sm:$0xff]
  %v300 = vld [vmem:[%s1 + $0x68] sm:$0xff]
  %v301 = vld [vmem:[%s1 + $0x70] sm:$0xff]
  %v302 = vld [vmem:[%s1 + $0x78] sm:$0xff]
  %v303 = vld [vmem:[%s1 + $0x80] sm:$0xff]
  %v304 = vld [vmem:[%s1 + $0x88] sm:$0xff]
  %v305 = vld [vmem:[%s1 + $0x90] sm:$0xff]
  %v306 = vld [vmem:[%s1 + $0x98] sm:$0xff]
  %v307 = vld [vmem:[%s1 + $0xa0] sm:$0xff]
  %v308 = vld [vmem:[%s1 + $0xa8] sm:$0xff]
  %v309 = vld [vmem:[%s1 + $0xb0] sm:$0xff]
  %v310 = vld [vmem:[%s1 + $0xb8] sm:$0xff]
  %v311 = vld [vmem:[%s1 + $0xc0] sm:$0xff]
  %v312 = vld [vmem:[%s1 + $0xc8] sm:$0xff]
  %v313 = vld [vmem:[%s1 + $0xd0] sm:$0xff]
  %v314 = vld [vmem:[%s1 + $0xd8] sm:$0xff]
  %v315 = vld [vmem:[%s1 + $0xe0] sm:$0xff]
  %v316 = vld [vmem:[%s1 + $0xe8] sm:$0xff]
  %v317 = vld [vmem:[%s1 + $0xf0] sm:$0xff]
  %v318 = vld [vmem:[%s1 + $0xf8] sm:$0xff]
  %v319 = vld [vmem:[%s1 + $0x100] sm:$0xff]
  %v320 = vld [vmem:[%s1 + $0x108] sm:$0xff]
  %v321 = vld [vmem:[%s1 + $0x110] sm:$0xff]
  %v322 = vld [vmem:[%s1 + $0x118] sm:$0xff]
  %v323 = vld [vmem:[%s1 + $0x120] sm:$0xff]
  %v324 = vld [vmem:[%s1 + $0x128] sm:$0xff]
  %v325 = vld [vmem:[%s1 + $0x130] sm:$0xff]
  %v326 = vld [vmem:[%s1 + $0x138] sm:$0xff]
  %v327 = vld [vmem:[%s1 + $0x140] sm:$0xff]
  %v328 = vld [vmem:[%s1 + $0x148] sm:$0xff]
  %v329 = vld [vmem:[%s1 + $0x150] sm:$0xff]
  %v330 = vld [vmem:[%s1 + $0x158] sm:$0xff]
  %v331 = vld [vmem:[%s1 + $0x160] sm:$0xff]
  %v332 = vld [vmem:[%s1 + $0x168] sm:$0xff]
  %v333 = vld [vmem:[%s1 + $0x170] sm:$0xff]
  %v334 = vld [vmem:[%s1 + $0x178] sm:$0xff]
  %v335 = vld [vmem:[%s1 + $0x180] sm:$0xff]
  %v336 = vld [vmem:[%s1 + $0x188] sm:$0xff]
  %v337 = vld [vmem:[%s1 + $0x190] sm:$0xff]
  %v338 = vld [vmem:[%s1 + $0x198] sm:$0xff]
  %v339 = vld [vmem:[%s1 + $0x1a0] sm:$0xff]
  %v340 = vld [vmem:[%s1 + $0x1a8] sm:$0xff]
  %v341 = vld [vmem:[%s1 + $0x1b0] sm:$0xff]
  %v342 = vld [vmem:[%s1 + $0x1b8] sm:$0xff]
  %v343 = vld [vmem:[%s1 + $0x1c0] sm:$0xff]
  %v344 = vld [vmem:[%s1 + $0x1c8] sm:$0xff]
  %v345 = vld [vmem:[%s1 + $0x1d0] sm:$0xff]
  %v346 = vld [vmem:[%s1 + $0x1d8] sm:$0xff]
  %v347 = vld [vmem:[%s1 + $0x1e0] sm:$0xff]
  %v348 = vld [vmem:[%s1 + $0x1e8] sm:$0xff]
  %v349 = vld [vmem:[%s1 + $0x1f0] sm:$0xff]
  %v350 = vld [vmem:[%s1 + $0x1f8] sm:$0xff]
  %v351 = vadd.f32 %v223, %v287
  %v352 = vadd.f32 %v224, %v288
  %v353 = vadd.f32 %v225, %v289
  %v354 = vadd.f32 %v226, %v290
  %v355 = vadd.f32 %v227, %v291
  %v356 = vadd.f32 %v228, %v292
  %v357 = vadd.f32 %v229, %v293
  %v358 = vadd.f32 %v230, %v294
  %v359 = vadd.f32 %v231, %v295
  %v360 = vadd.f32 %v232, %v296
  %v361 = vadd.f32 %v233, %v297
  %v362 = vadd.f32 %v234, %v298
  %v363 = vadd.f32 %v235, %v299
  %v364 = vadd.f32 %v236, %v300
  %v365 = vadd.f32 %v237, %v301
  %v366 = vadd.f32 %v238, %v302
  %v367 = vadd.f32 %v239, %v303
  %v368 = vadd.f32 %v240, %v304
  %v369 = vadd.f32 %v241, %v305
  %v370 = vadd.f32 %v242, %v306
  %v371 = vadd.f32 %v243, %v307
  %v372 = vadd.f32 %v244, %v308
  %v373 = vadd.f32 %v245, %v309
  %v374 = vadd.f32 %v246, %v310
  %v375 = vadd.f32 %v247, %v311
  %v376 = vadd.f32 %v248, %v312
  %v377 = vadd.f32 %v249, %v313
  %v378 = vadd.f32 %v250, %v314
  %v379 = vadd.f32 %v251, %v315
  %v380 = vadd.f32 %v252, %v316
  %v381 = vadd.f32 %v253, %v317
  %v382 = vadd.f32 %v254, %v318
  %v383 = vadd.f32 %v255, %v319
  %v384 = vadd.f32 %v256, %v320
  %v385 = vadd.f32 %v257, %v321
  %v386 = vadd.f32 %v258, %v322
  %v387 = vadd.f32 %v259, %v323
  %v388 = vadd.f32 %v260, %v324
  %v389 = vadd.f32 %v261, %v325
  %v390 = vadd.f32 %v262, %v326
  %v391 = vadd.f32 %v263, %v327
  %v392 = vadd.f32 %v264, %v328
  %v393 = vadd.f32 %v265, %v329
  %v394 = vadd.f32 %v266, %v330
  %v395 = vadd.f32 %v267, %v331
  %v396 = vadd.f32 %v268, %v332
  %v397 = vadd.f32 %v269, %v333
  %v398 = vadd.f32 %v270, %v334
  %v399 = vadd.f32 %v271, %v335
  %v400 = vadd.f32 %v272, %v336
  %v401 = vadd.f32 %v273, %v337
  %v402 = vadd.f32 %v274, %v338
  %v403 = vadd.f32 %v275, %v339
  %v404 = vadd.f32 %v276, %v340
  %v405 = vadd.f32 %v277, %v341
  %v406 = vadd.f32 %v278, %v342
  %v407 = vadd.f32 %v279, %v343
  %v408 = vadd.f32 %v280, %v344
  %v409 = vadd.f32 %v281, %v345
  %v410 = vadd.f32 %v282, %v346
  %v411 = vadd.f32 %v283, %v347
  %v412 = vadd.f32 %v284, %v348
  %v413 = vadd.f32 %v285, %v349
  %v414 = vadd.f32 %v286, %v350
  %v415 = vmax.f32 %v351, 0.0
  %v416 = vmax.f32 %v352, 0.0
  %v417 = vmax.f32 %v353, 0.0
  %v418 = vmax.f32 %v354, 0.0
  %v419 = vmax.f32 %v355, 0.0
  %v420 = vmax.f32 %v356, 0.0
  %v421 = vmax.f32 %v357, 0.0
  %v422 = vmax.f32 %v358, 0.0
  %v423 = vmax.f32 %v359, 0.0
  %v424 = vmax.f32 %v360, 0.0
  %v425 = vmax.f32 %v361, 0.0
  %v426 = vmax.f32 %v362, 0.0
  %v427 = vmax.f32 %v363, 0.0
  %v428 = vmax.f32 %v364, 0.0
  %v429 = vmax.f32 %v365, 0.0
  %v430 = vmax.f32 %v366, 0.0
  %v431 = vmax.f32 %v367, 0.0
  %v432 = vmax.f32 %v368, 0.0
  %v433 = vmax.f32 %v369, 0.0
  %v434 = vmax.f32 %v370, 0.0
  %v435 = vmax.f32 %v371, 0.0
  %v436 = vmax.f32 %v372, 0.0
  %v437 = vmax.f32 %v373, 0.0
  %v438 = vmax.f32 %v374, 0.0
  %v439 = vmax.f32 %v375, 0.0
  %v440 = vmax.f32 %v376, 0.0
  %v441 = vmax.f32 %v377, 0.0
  %v442 = vmax.f32 %v378, 0.0
  %v443 = vmax.f32 %v379, 0.0
  %v444 = vmax.f32 %v380, 0.0
  %v445 = vmax.f32 %v381, 0.0
  %v446 = vmax.f32 %v382, 0.0
  %v447 = vmax.f32 %v383, 0.0
  %v448 = vmax.f32 %v384, 0.0
  %v449 = vmax.f32 %v385, 0.0
  %v450 = vmax.f32 %v386, 0.0
  %v451 = vmax.f32 %v387, 0.0
  %v452 = vmax.f32 %v388, 0.0
  %v453 = vmax.f32 %v389, 0.0
  %v454 = vmax.f32 %v390, 0.0
  %v455 = vmax.f32 %v391, 0.0
  %v456 = vmax.f32 %v392, 0.0
  %v457 = vmax.f32 %v393, 0.0
  %v458 = vmax.f32 %v394, 0.0
  %v459 = vmax.f32 %v395, 0.0
  %v460 = vmax.f32 %v396, 0.0
  %v461 = vmax.f32 %v397, 0.0
  %v462 = vmax.f32 %v398, 0.0
  %v463 = vmax.f32 %v399, 0.0
  %v464 = vmax.f32 %v400, 0.0
  %v465 = vmax.f32 %v401, 0.0
  %v466 = vmax.f32 %v402, 0.0
  %v467 = vmax.f32 %v403, 0.0
  %v468 = vmax.f32 %v404, 0.0
  %v469 = vmax.f32 %v405, 0.0
  %v470 = vmax.f32 %v406, 0.0
  %v471 = vmax.f32 %v407, 0.0
  %v472 = vmax.f32 %v408, 0.0
  %v473 = vmax.f32 %v409, 0.0
  %v474 = vmax.f32 %v410, 0.0
  %v475 = vmax.f32 %v411, 0.0
  %v476 = vmax.f32 %v412, 0.0
  %v477 = vmax.f32 %v413, 0.0
  %v478 = vmax.f32 %v414, 0.0
  %479 = vst [vmem:[%s4] sm:$0xff] %v415
  %480 = vst [vmem:[%s4 + $0x8] sm:$0xff] %v416
  %481 = vst [vmem:[%s4 + $0x10] sm:$0xff] %v417
  %482 = vst [vmem:[%s4 + $0x18] sm:$0xff] %v418
  %483 = vst [vmem:[%s4 + $0x20] sm:$0xff] %v419
  %484 = vst [vmem:[%s4 + $0x28] sm:$0xff] %v420
  %485 = vst [vmem:[%s4 + $0x30] sm:$0xff] %v421
  %486 = vst [vmem:[%s4 + $0x38] sm:$0xff] %v422
  %487 = vst [vmem:[%s4 + $0x40] sm:$0xff] %v423
  %488 = vst [vmem:[%s4 + $0x48] sm:$0xff] %v424
  %489 = vst [vmem:[%s4 + $0x50] sm:$0xff] %v425
  %490 = vst [vmem:[%s4 + $0x58] sm:$0xff] %v426
  %491 = vst [vmem:[%s4 + $0x60] sm:$0xff] %v427
  %492 = vst [vmem:[%s4 + $0x68] sm:$0xff] %v428
  %493 = vst [vmem:[%s4 + $0x70] sm:$0xff] %v429
  %494 = vst [vmem:[%s4 + $0x78] sm:$0xff] %v430
  %495 = vst [vmem:[%s4 + $0x80] sm:$0xff] %v431
  %496 = vst [vmem:[%s4 + $0x88] sm:$0xff] %v432
  %497 = vst [vmem:[%s4 + $0x90] sm:$0xff] %v433
  %498 = vst [vmem:[%s4 + $0x98] sm:$0xff] %v434
  %499 = vst [vmem:[%s4 + $0xa0] sm:$0xff] %v435
  %500 = vst [vmem:[%s4 + $0xa8] sm:$0xff] %v436
  %501 = vst [vmem:[%s4 + $0xb0] sm:$0xff] %v437
  %502 = vst [vmem:[%s4 + $0xb8] sm:$0xff] %v438
  %503 = vst [vmem:[%s4 + $0xc0] sm:$0xff] %v439
  %504 = vst [vmem:[%s4 + $0xc8] sm:$0xff] %v440
  %505 = vst [vmem:[%s4 + $0xd0] sm:$0xff] %v441
  %506 = vst [vmem:[%s4 + $0xd8] sm:$0xff] %v442
  %507 = vst [vmem:[%s4 + $0xe0] sm:$0xff] %v443
  %508 = vst [vmem:[%s4 + $0xe8] sm:$0xff] %v444
  %509 = vst [vmem:[%s4 + $0xf0] sm:$0xff] %v445
  %510 = vst [vmem:[%s4 + $0xf8] sm:$0xff] %v446
  %511 = vst [vmem:[%s4 + $0x100] sm:$0xff] %v447
  %512 = vst [vmem:[%s4 + $0x108] sm:$0xff] %v448
  %513 = vst [vmem:[%s4 + $0x110] sm:$0xff] %v449
  %514 = vst [vmem:[%s4 + $0x118] sm:$0xff] %v450
  %515 = vst [vmem:[%s4 + $0x120] sm:$0xff] %v451
  %516 = vst [vmem:[%s4 + $0x128] sm:$0xff] %v452
  %517 = vst [vmem:[%s4 + $0x130] sm:$0xff] %v453
  %518 = vst [vmem:[%s4 + $0x138] sm:$0xff] %v454
  %519 = vst [vmem:[%s4 + $0x140] sm:$0xff] %v455
  %520 = vst [vmem:[%s4 + $0x148] sm:$0xff] %v456
  %521 = vst [vmem:[%s4 + $0x150] sm:$0xff] %v457
  %522 = vst [vmem:[%s4 + $0x158] sm:$0xff] %v458
  %523 = vst [vmem:[%s4 + $0x160] sm:$0xff] %v459
  %524 = vst [vmem:[%s4 + $0x168] sm:$0xff] %v460
  %525 = vst [vmem:[%s4 + $0x170] sm:$0xff] %v461
  %526 = vst [vmem:[%s4 + $0x178] sm:$0xff] %v462
  %527 = vst [vmem:[%s4 + $0x180] sm:$0xff] %v463
  %528 = vst [vmem:[%s4 + $0x188] sm:$0xff] %v464
  %529 = vst [vmem:[%s4 + $0x190] sm:$0xff] %v465
  %530 = vst [vmem:[%s4 + $0x198] sm:$0xff] %v466
  %531 = vst [vmem:[%s4 + $0x1a0] sm:$0xff] %v467
  %532 = vst [vmem:[%s4 + $0x1a8] sm:$0xff] %v468
  %533 = vst [vmem:[%s4 + $0x1b0] sm:$0xff] %v469
  %534 = vst [vmem:[%s4 + $0x1b8] sm:$0xff] %v470
  %535 = vst [vmem:[%s4 + $0x1c0] sm:$0xff] %v471
  %536 = vst [vmem:[%s4 + $0x1c8] sm:$0xff] %v472
  %537 = vst [vmem:[%s4 + $0x1d0] sm:$0xff] %v473
  %538 = vst [vmem:[%s4 + $0x1d8] sm:$0xff] %v474
  %539 = vst [vmem:[%s4 + $0x1e0] sm:$0xff] %v475
  %540 = vst [vmem:[%s4 + $0x1e8] sm:$0xff] %v476
  %541 = vst [vmem:[%s4 + $0x1f0] sm:$0xff] %v477
  %542 = vst [vmem:[%s4 + $0x1f8] sm:$0xff] %v478
  // Predicated region
  $region18: #{bottleneck_forward.7} parent=0 // pred_check
    _
  $region19: #{bottleneck_forward.7} parent=0 // pred_check_branch
    %544 = sbr.rel (0) target = $region21
  $region20: #{bottleneck_forward.7} parent=0 // pred_region
    _
  $region21: #{bottleneck_forward.7} parent=0 // pred_fallthru
    _
  // Predicated region
  $region22: #{bottleneck_forward.7} parent=0 // pred_check
    _
  $region23: #{bottleneck_forward.7} parent=0 // pred_check_branch
    %546 = sbr.rel (0) target = $region25
  $region24: #{bottleneck_forward.7} parent=0 // pred_region
    _
  $region25: #{bottleneck_forward.7} parent=0 // pred_fallthru
    _

// kernel: bottleneck_forward.6
$region0: #{bottleneck_forward.6}
  #allocation0 [shape = 'u32[]', space=smem, size = 0x4, offset = 0x4, fixed_abs, tag = 'smem constant byte address 0x4 - core index']
  #allocation1 [shape = 'u32[144,128]{1,0:T(1,128)}', space=vmem, size = 0x12000, scoped, tag = 'internal scratch']
  %s0 = inlined_call_operand.vmem [shape: bf16[512,128], index: 0, kind: input, shape index: {}]
  %s1 = inlined_call_operand.vmem [shape: f32[1,128], index: 1, kind: input, shape index: {}]
  %s2 = inlined_call_operand.vmem [shape: f32[1,128], index: 2, kind: input, shape index: {}]
  %s3 = inlined_call_operand.vmem [shape: bf16[128,128], index: 3, kind: input, shape index: {}]
  %s4 = inlined_call_operand.vmem [shape: bf16[512,128], index: 4, kind: output, shape index: {0}]
  %s5 = inlined_call_operand.vmem [shape: f32[1,2,128], index: 5, kind: output, shape index: {1}]
  %6 = xla_tuple %s4, %s5
  %s7 = sld [smem:[#allocation0]]
  $region34: #{bottleneck_forward.6} parent=0
    _
  %s9 = ssub.s32 1, %s7
  %s10 = scalar_select 0, %s9, %s7
  // Predicated region
  $region2: #{bottleneck_forward.6} parent=0 // pred_check
    _
  $region3: #{bottleneck_forward.6} parent=0 // pred_check_branch
    %12 = sbr.rel (0) target = $region5
  $region4: #{bottleneck_forward.6} parent=0 // pred_region
    _
  $region5: #{bottleneck_forward.6} parent=0 // pred_fallthru
    _
  // Predicated region
  $region6: #{bottleneck_forward.6} parent=0 // pred_check
    _
  $region7: #{bottleneck_forward.6} parent=0 // pred_check_branch
    %14 = sbr.rel (0) target = $region9
  $region8: #{bottleneck_forward.6} parent=0 // pred_region
    _
  $region9: #{bottleneck_forward.6} parent=0 // pred_fallthru
    _
  // Predicated region
  $region10: #{bottleneck_forward.6} parent=0 // pred_check
    _
  $region11: #{bottleneck_forward.6} parent=0 // pred_check_branch
    %16 = sbr.rel (0) target = $region13
  $region12: #{bottleneck_forward.6} parent=0 // pred_region
    _
  $region13: #{bottleneck_forward.6} parent=0 // pred_fallthru
    _
  // Predicated region
  $region14: #{bottleneck_forward.6} parent=0 // pred_check
    _
  $region15: #{bottleneck_forward.6} parent=0 // pred_check_branch
    %18 = sbr.rel (0) target = $region17
  $region16: #{bottleneck_forward.6} parent=0 // pred_region
    _
  $region17: #{bottleneck_forward.6} parent=0 // pred_fallthru
    _
  %v20 = vld [vmem:[%s0] sm:$0xf]
  %v21 = vld [vmem:[%s0 + $0x4] sm:$0xf]
  %v22 = vld [vmem:[%s0 + $0x8] sm:$0xf]
  %v23 = vld [vmem:[%s0 + $0xc] sm:$0xf]
  %v24 = vld [vmem:[%s0 + $0x10] sm:$0xf]
  %v25 = vld [vmem:[%s0 + $0x14] sm:$0xf]
  %v26 = vld [vmem:[%s0 + $0x18] sm:$0xf]
  %v27 = vld [vmem:[%s0 + $0x1c] sm:$0xf]
  %v28 = vld [vmem:[%s0 + $0x20] sm:$0xf]
  %v29 = vld [vmem:[%s0 + $0x24] sm:$0xf]
  %v30 = vld [vmem:[%s0 + $0x28] sm:$0xf]
  %v31 = vld [vmem:[%s0 + $0x2c] sm:$0xf]
  %v32 = vld [vmem:[%s0 + $0x30] sm:$0xf]
  %v33 = vld [vmem:[%s0 + $0x34] sm:$0xf]
  %v34 = vld [vmem:[%s0 + $0x38] sm:$0xf]
  %v35 = vld [vmem:[%s0 + $0x3c] sm:$0xf]
  %v36 = vld [vmem:[%s0 + $0x40] sm:$0xf]
  %v37 = vld [vmem:[%s0 + $0x44] sm:$0xf]
  %v38 = vld [vmem:[%s0 + $0x48] sm:$0xf]
  %v39 = vld [vmem:[%s0 + $0x4c] sm:$0xf]
  %v40 = vld [vmem:[%s0 + $0x50] sm:$0xf]
  %v41 = vld [vmem:[%s0 + $0x54] sm:$0xf]
  %v42 = vld [vmem:[%s0 + $0x58] sm:$0xf]
  %v43 = vld [vmem:[%s0 + $0x5c] sm:$0xf]
  %v44 = vld [vmem:[%s0 + $0x60] sm:$0xf]
  %v45 = vld [vmem:[%s0 + $0x64] sm:$0xf]
  %v46 = vld [vmem:[%s0 + $0x68] sm:$0xf]
  %v47 = vld [vmem:[%s0 + $0x6c] sm:$0xf]
  %v48 = vld [vmem:[%s0 + $0x70] sm:$0xf]
  %v49 = vld [vmem:[%s0 + $0x74] sm:$0xf]
  %v50 = vld [vmem:[%s0 + $0x78] sm:$0xf]
  %v51 = vld [vmem:[%s0 + $0x7c] sm:$0xf]
  %v52 = vld [vmem:[%s0 + $0x80] sm:$0xf]
  %v53 = vld [vmem:[%s0 + $0x84] sm:$0xf]
  %v54 = vld [vmem:[%s0 + $0x88] sm:$0xf]
  %v55 = vld [vmem:[%s0 + $0x8c] sm:$0xf]
  %v56 = vld [vmem:[%s0 + $0x90] sm:$0xf]
  %v57 = vld [vmem:[%s0 + $0x94] sm:$0xf]
  %v58 = vld [vmem:[%s0 + $0x98] sm:$0xf]
  %v59 = vld [vmem:[%s0 + $0x9c] sm:$0xf]
  %v60 = vld [vmem:[%s0 + $0xa0] sm:$0xf]
  %v61 = vld [vmem:[%s0 + $0xa4] sm:$0xf]
  %v62 = vld [vmem:[%s0 + $0xa8] sm:$0xf]
  %v63 = vld [vmem:[%s0 + $0xac] sm:$0xf]
  %v64 = vld [vmem:[%s0 + $0xb0] sm:$0xf]
  %v65 = vld [vmem:[%s0 + $0xb4] sm:$0xf]
  %v66 = vld [vmem:[%s0 + $0xb8] sm:$0xf]
  %v67 = vld [vmem:[%s0 + $0xbc] sm:$0xf]
  %v68 = vld [vmem:[%s0 + $0xc0] sm:$0xf]
  %v69 = vld [vmem:[%s0 + $0xc4] sm:$0xf]
  %v70 = vld [vmem:[%s0 + $0xc8] sm:$0xf]
  %v71 = vld [vmem:[%s0 + $0xcc] sm:$0xf]
  %v72 = vld [vmem:[%s0 + $0xd0] sm:$0xf]
  %v73 = vld [vmem:[%s0 + $0xd4] sm:$0xf]
  %v74 = vld [vmem:[%s0 + $0xd8] sm:$0xf]
  %v75 = vld [vmem:[%s0 + $0xdc] sm:$0xf]
  %v76 = vld [vmem:[%s0 + $0xe0] sm:$0xf]
  %v77 = vld [vmem:[%s0 + $0xe4] sm:$0xf]
  %v78 = vld [vmem:[%s0 + $0xe8] sm:$0xf]
  %v79 = vld [vmem:[%s0 + $0xec] sm:$0xf]
  %v80 = vld [vmem:[%s0 + $0xf0] sm:$0xf]
  %v81 = vld [vmem:[%s0 + $0xf4] sm:$0xf]
  %v82 = vld [vmem:[%s0 + $0xf8] sm:$0xf]
  %v83 = vld [vmem:[%s0 + $0xfc] sm:$0xf]
  %v84 = vunpack.c.l.bf16 %v20
  %v85 = vunpack.c.l.bf16 %v21
  %v86 = vunpack.c.l.bf16 %v22
  %v87 = vunpack.c.l.bf16 %v23
  %v88 = vunpack.c.l.bf16 %v24
  %v89 = vunpack.c.l.bf16 %v25
  %v90 = vunpack.c.l.bf16 %v26
  %v91 = vunpack.c.l.bf16 %v27
  %v92 = vunpack.c.l.bf16 %v28
  %v93 = vunpack.c.l.bf16 %v29
  %v94 = vunpack.c.l.bf16 %v30
  %v95 = vunpack.c.l.bf16 %v31
  %v96 = vunpack.c.l.bf16 %v32
  %v97 = vunpack.c.l.bf16 %v33
  %v98 = vunpack.c.l.bf16 %v34
  %v99 = vunpack.c.l.bf16 %v35
  %v100 = vunpack.c.l.bf16 %v36
  %v101 = vunpack.c.l.bf16 %v37
  %v102 = vunpack.c.l.bf16 %v38
  %v103 = vunpack.c.l.bf16 %v39
  %v104 = vunpack.c.l.bf16 %v40
  %v105 = vunpack.c.l.bf16 %v41
  %v106 = vunpack.c.l.bf16 %v42
  %v107 = vunpack.c.l.bf16 %v43
  %v108 = vunpack.c.l.bf16 %v44
  %v109 = vunpack.c.l.bf16 %v45
  %v110 = vunpack.c.l.bf16 %v46
  %v111 = vunpack.c.l.bf16 %v47
  %v112 = vunpack.c.l.bf16 %v48
  %v113 = vunpack.c.l.bf16 %v49
  %v114 = vunpack.c.l.bf16 %v50
  %v115 = vunpack.c.l.bf16 %v51
  %v116 = vunpack.c.l.bf16 %v52
  %v117 = vunpack.c.l.bf16 %v53
  %v118 = vunpack.c.l.bf16 %v54
  %v119 = vunpack.c.l.bf16 %v55
  %v120 = vunpack.c.l.bf16 %v56
  %v121 = vunpack.c.l.bf16 %v57
  %v122 = vunpack.c.l.bf16 %v58
  %v123 = vunpack.c.l.bf16 %v59
  %v124 = vunpack.c.l.bf16 %v60
  %v125 = vunpack.c.l.bf16 %v61
  %v126 = vunpack.c.l.bf16 %v62
  %v127 = vunpack.c.l.bf16 %v63
  %v128 = vunpack.c.l.bf16 %v64
  %v129 = vunpack.c.l.bf16 %v65
  %v130 = vunpack.c.l.bf16 %v66
  %v131 = vunpack.c.l.bf16 %v67
  %v132 = vunpack.c.l.bf16 %v68
  %v133 = vunpack.c.l.bf16 %v69
  %v134 = vunpack.c.l.bf16 %v70
  %v135 = vunpack.c.l.bf16 %v71
  %v136 = vunpack.c.l.bf16 %v72
  %v137 = vunpack.c.l.bf16 %v73
  %v138 = vunpack.c.l.bf16 %v74
  %v139 = vunpack.c.l.bf16 %v75
  %v140 = vunpack.c.l.bf16 %v76
  %v141 = vunpack.c.l.bf16 %v77
  %v142 = vunpack.c.l.bf16 %v78
  %v143 = vunpack.c.l.bf16 %v79
  %v144 = vunpack.c.l.bf16 %v80
  %v145 = vunpack.c.l.bf16 %v81
  %v146 = vunpack.c.l.bf16 %v82
  %v147 = vunpack.c.l.bf16 %v83
  %v148 = vld [vmem:[%s1] sm:$0x1]
  %v150 = vlaneseq
  %v151 = vshrl.u32 %v150, 7
  %v152 = vsub.s32 0, %v151
  %v153 = vrot.slane %v148, %v152
  %v155 = vmul.f32 %v84, %v153
  %v156 = vmul.f32 %v85, %v153
  %v157 = vmul.f32 %v86, %v153
  %v158 = vmul.f32 %v87, %v153
  %v159 = vmul.f32 %v88, %v153
  %v160 = vmul.f32 %v89, %v153
  %v161 = vmul.f32 %v90, %v153
  %v162 = vmul.f32 %v91, %v153
  %v163 = vmul.f32 %v92, %v153
  %v164 = vmul.f32 %v93, %v153
  %v165 = vmul.f32 %v94, %v153
  %v166 = vmul.f32 %v95, %v153
  %v167 = vmul.f32 %v96, %v153
  %v168 = vmul.f32 %v97, %v153
  %v169 = vmul.f32 %v98, %v153
  %v170 = vmul.f32 %v99, %v153
  %v171 = vmul.f32 %v100, %v153
  %v172 = vmul.f32 %v101, %v153
  %v173 = vmul.f32 %v102, %v153
  %v174 = vmul.f32 %v103, %v153
  %v175 = vmul.f32 %v104, %v153
  %v176 = vmul.f32 %v105, %v153
  %v177 = vmul.f32 %v106, %v153
  %v178 = vmul.f32 %v107, %v153
  %v179 = vmul.f32 %v108, %v153
  %v180 = vmul.f32 %v109, %v153
  %v181 = vmul.f32 %v110, %v153
  %v182 = vmul.f32 %v111, %v153
  %v183 = vmul.f32 %v112, %v153
  %v184 = vmul.f32 %v113, %v153
  %v185 = vmul.f32 %v114, %v153
  %v186 = vmul.f32 %v115, %v153
  %v187 = vmul.f32 %v116, %v153
  %v188 = vmul.f32 %v117, %v153
  %v189 = vmul.f32 %v118, %v153
  %v190 = vmul.f32 %v119, %v153
  %v191 = vmul.f32 %v120, %v153
  %v192 = vmul.f32 %v121, %v153
  %v193 = vmul.f32 %v122, %v153
  %v194 = vmul.f32 %v123, %v153
  %v195 = vmul.f32 %v124, %v153
  %v196 = vmul.f32 %v125, %v153
  %v197 = vmul.f32 %v126, %v153
  %v198 = vmul.f32 %v127, %v153
  %v199 = vmul.f32 %v128, %v153
  %v200 = vmul.f32 %v129, %v153
  %v201 = vmul.f32 %v130, %v153
  %v202 = vmul.f32 %v131, %v153
  %v203 = vmul.f32 %v132, %v153
  %v204 = vmul.f32 %v133, %v153
  %v205 = vmul.f32 %v134, %v153
  %v206 = vmul.f32 %v135, %v153
  %v207 = vmul.f32 %v136, %v153
  %v208 = vmul.f32 %v137, %v153
  %v209 = vmul.f32 %v138, %v153
  %v210 = vmul.f32 %v139, %v153
  %v211 = vmul.f32 %v140, %v153
  %v212 = vmul.f32 %v141, %v153
  %v213 = vmul.f32 %v142, %v153
  %v214 = vmul.f32 %v143, %v153
  %v215 = vmul.f32 %v144, %v153
  %v216 = vmul.f32 %v145, %v153
  %v217 = vmul.f32 %v146, %v153
  %v218 = vmul.f32 %v147, %v153
  %v219 = vld [vmem:[%s2] sm:$0x1]
  %v221 = vlaneseq
  %v222 = vshrl.u32 %v221, 7
  %v223 = vsub.s32 0, %v222
  %v224 = vrot.slane %v219, %v223
  %v226 = vadd.f32 %v155, %v224
  %v227 = vadd.f32 %v156, %v224
  %v228 = vadd.f32 %v157, %v224
  %v229 = vadd.f32 %v158, %v224
  %v230 = vadd.f32 %v159, %v224
  %v231 = vadd.f32 %v160, %v224
  %v232 = vadd.f32 %v161, %v224
  %v233 = vadd.f32 %v162, %v224
  %v234 = vadd.f32 %v163, %v224
  %v235 = vadd.f32 %v164, %v224
  %v236 = vadd.f32 %v165, %v224
  %v237 = vadd.f32 %v166, %v224
  %v238 = vadd.f32 %v167, %v224
  %v239 = vadd.f32 %v168, %v224
  %v240 = vadd.f32 %v169, %v224
  %v241 = vadd.f32 %v170, %v224
  %v242 = vadd.f32 %v171, %v224
  %v243 = vadd.f32 %v172, %v224
  %v244 = vadd.f32 %v173, %v224
  %v245 = vadd.f32 %v174, %v224
  %v246 = vadd.f32 %v175, %v224
  %v247 = vadd.f32 %v176, %v224
  %v248 = vadd.f32 %v177, %v224
  %v249 = vadd.f32 %v178, %v224
  %v250 = vadd.f32 %v179, %v224
  %v251 = vadd.f32 %v180, %v224
  %v252 = vadd.f32 %v181, %v224
  %v253 = vadd.f32 %v182, %v224
  %v254 = vadd.f32 %v183, %v224
  %v255 = vadd.f32 %v184, %v224
  %v256 = vadd.f32 %v185, %v224
  %v257 = vadd.f32 %v186, %v224
  %v258 = vadd.f32 %v187, %v224
  %v259 = vadd.f32 %v188, %v224
  %v260 = vadd.f32 %v189, %v224
  %v261 = vadd.f32 %v190, %v224
  %v262 = vadd.f32 %v191, %v224
  %v263 = vadd.f32 %v192, %v224
  %v264 = vadd.f32 %v193, %v224
  %v265 = vadd.f32 %v194, %v224
  %v266 = vadd.f32 %v195, %v224
  %v267 = vadd.f32 %v196, %v224
  %v268 = vadd.f32 %v197, %v224
  %v269 = vadd.f32 %v198, %v224
  %v270 = vadd.f32 %v199, %v224
  %v271 = vadd.f32 %v200, %v224
  %v272 = vadd.f32 %v201, %v224
  %v273 = vadd.f32 %v202, %v224
  %v274 = vadd.f32 %v203, %v224
  %v275 = vadd.f32 %v204, %v224
  %v276 = vadd.f32 %v205, %v224
  %v277 = vadd.f32 %v206, %v224
  %v278 = vadd.f32 %v207, %v224
  %v279 = vadd.f32 %v208, %v224
  %v280 = vadd.f32 %v209, %v224
  %v281 = vadd.f32 %v210, %v224
  %v282 = vadd.f32 %v211, %v224
  %v283 = vadd.f32 %v212, %v224
  %v284 = vadd.f32 %v213, %v224
  %v285 = vadd.f32 %v214, %v224
  %v286 = vadd.f32 %v215, %v224
  %v287 = vadd.f32 %v216, %v224
  %v288 = vadd.f32 %v217, %v224
  %v289 = vadd.f32 %v218, %v224
  %v290 = vmax.f32 %v226, 0.0
  %v291 = vmax.f32 %v227, 0.0
  %v292 = vmax.f32 %v228, 0.0
  %v293 = vmax.f32 %v229, 0.0
  %v294 = vmax.f32 %v230, 0.0
  %v295 = vmax.f32 %v231, 0.0
  %v296 = vmax.f32 %v232, 0.0
  %v297 = vmax.f32 %v233, 0.0
  %v298 = vmax.f32 %v234, 0.0
  %v299 = vmax.f32 %v235, 0.0
  %v300 = vmax.f32 %v236, 0.0
  %v301 = vmax.f32 %v237, 0.0
  %v302 = vmax.f32 %v238, 0.0
  %v303 = vmax.f32 %v239, 0.0
  %v304 = vmax.f32 %v240, 0.0
  %v305 = vmax.f32 %v241, 0.0
  %v306 = vmax.f32 %v242, 0.0
  %v307 = vmax.f32 %v243, 0.0
  %v308 = vmax.f32 %v244, 0.0
  %v309 = vmax.f32 %v245, 0.0
  %v310 = vmax.f32 %v246, 0.0
  %v311 = vmax.f32 %v247, 0.0
  %v312 = vmax.f32 %v248, 0.0
  %v313 = vmax.f32 %v249, 0.0
  %v314 = vmax.f32 %v250, 0.0
  %v315 = vmax.f32 %v251, 0.0
  %v316 = vmax.f32 %v252, 0.0
  %v317 = vmax.f32 %v253, 0.0
  %v318 = vmax.f32 %v254, 0.0
  %v319 = vmax.f32 %v255, 0.0
  %v320 = vmax.f32 %v256, 0.0
  %v321 = vmax.f32 %v257, 0.0
  %v322 = vmax.f32 %v258, 0.0
  %v323 = vmax.f32 %v259, 0.0
  %v324 = vmax.f32 %v260, 0.0
  %v325 = vmax.f32 %v261, 0.0
  %v326 = vmax.f32 %v262, 0.0
  %v327 = vmax.f32 %v263, 0.0
  %v328 = vmax.f32 %v264, 0.0
  %v329 = vmax.f32 %v265, 0.0
  %v330 = vmax.f32 %v266, 0.0
  %v331 = vmax.f32 %v267, 0.0
  %v332 = vmax.f32 %v268, 0.0
  %v333 = vmax.f32 %v269, 0.0
  %v334 = vmax.f32 %v270, 0.0
  %v335 = vmax.f32 %v271, 0.0
  %v336 = vmax.f32 %v272, 0.0
  %v337 = vmax.f32 %v273, 0.0
  %v338 = vmax.f32 %v274, 0.0
  %v339 = vmax.f32 %v275, 0.0
  %v340 = vmax.f32 %v276, 0.0
  %v341 = vmax.f32 %v277, 0.0
  %v342 = vmax.f32 %v278, 0.0
  %v343 = vmax.f32 %v279, 0.0
  %v344 = vmax.f32 %v280, 0.0
  %v345 = vmax.f32 %v281, 0.0
  %v346 = vmax.f32 %v282, 0.0
  %v347 = vmax.f32 %v283, 0.0
  %v348 = vmax.f32 %v284, 0.0
  %v349 = vmax.f32 %v285, 0.0
  %v350 = vmax.f32 %v286, 0.0
  %v351 = vmax.f32 %v287, 0.0
  %v352 = vmax.f32 %v288, 0.0
  %v353 = vmax.f32 %v289, 0.0
  %v354 = vpack.c.bf16 %v291, %v290
  %v355 = vpack.c.bf16 %v293, %v292
  %v356 = vpack.c.bf16 %v295, %v294
  %v357 = vpack.c.bf16 %v297, %v296
  %v358 = vpack.c.bf16 %v299, %v298
  %v359 = vpack.c.bf16 %v301, %v300
  %v360 = vpack.c.bf16 %v303, %v302
  %v361 = vpack.c.bf16 %v305, %v304
  %v362 = vpack.c.bf16 %v307, %v306
  %v363 = vpack.c.bf16 %v309, %v308
  %v364 = vpack.c.bf16 %v311, %v310
  %v365 = vpack.c.bf16 %v313, %v312
  %v366 = vpack.c.bf16 %v315, %v314
  %v367 = vpack.c.bf16 %v317, %v316
  %v368 = vpack.c.bf16 %v319, %v318
  %v369 = vpack.c.bf16 %v321, %v320
  %v370 = vpack.c.bf16 %v323, %v322
  %v371 = vpack.c.bf16 %v325, %v324
  %v372 = vpack.c.bf16 %v327, %v326
  %v373 = vpack.c.bf16 %v329, %v328
  %v374 = vpack.c.bf16 %v331, %v330
  %v375 = vpack.c.bf16 %v333, %v332
  %v376 = vpack.c.bf16 %v335, %v334
  %v377 = vpack.c.bf16 %v337, %v336
  %v378 = vpack.c.bf16 %v339, %v338
  %v379 = vpack.c.bf16 %v341, %v340
  %v380 = vpack.c.bf16 %v343, %v342
  %v381 = vpack.c.bf16 %v345, %v344
  %v382 = vpack.c.bf16 %v347, %v346
  %v383 = vpack.c.bf16 %v349, %v348
  %v384 = vpack.c.bf16 %v351, %v350
  %v385 = vpack.c.bf16 %v353, %v352
  %v386 = vld [vmem:[%s3] sm:$0xf]
  %v387 = vld [vmem:[%s3 + $0x4] sm:$0xf]
  %v388 = vld [vmem:[%s3 + $0x8] sm:$0xf]
  %v389 = vld [vmem:[%s3 + $0xc] sm:$0xf]
  %v390 = vld [vmem:[%s3 + $0x10] sm:$0xf]
  %v391 = vld [vmem:[%s3 + $0x14] sm:$0xf]
  %v392 = vld [vmem:[%s3 + $0x18] sm:$0xf]
  %v393 = vld [vmem:[%s3 + $0x1c] sm:$0xf]
  %v394 = vld [vmem:[%s3 + $0x20] sm:$0xf]
  %v395 = vld [vmem:[%s3 + $0x24] sm:$0xf]
  %v396 = vld [vmem:[%s3 + $0x28] sm:$0xf]
  %v397 = vld [vmem:[%s3 + $0x2c] sm:$0xf]
  %v398 = vld [vmem:[%s3 + $0x30] sm:$0xf]
  %v399 = vld [vmem:[%s3 + $0x34] sm:$0xf]
  %v400 = vld [vmem:[%s3 + $0x38] sm:$0xf]
  %v401 = vld [vmem:[%s3 + $0x3c] sm:$0xf]
  %v418 = vunpack.c.l.b16 %v386
  %v419 = vunpack.c.l.b16 %v387
  %v420 = vunpack.c.l.b16 %v388
  %v421 = vunpack.c.l.b16 %v389
  %v422 = vunpack.c.l.b16 %v390
  %v423 = vunpack.c.l.b16 %v391
  %v424 = vunpack.c.l.b16 %v392
  %v425 = vunpack.c.l.b16 %v393
  %v426 = vunpack.c.l.b16 %v394
  %v427 = vunpack.c.l.b16 %v395
  %v428 = vunpack.c.l.b16 %v396
  %v429 = vunpack.c.l.b16 %v397
  %v430 = vunpack.c.l.b16 %v398
  %v431 = vunpack.c.l.b16 %v399
  %v432 = vunpack.c.l.b16 %v400
  %v433 = vunpack.c.l.b16 %v401
  %v434 = vpack.c.b16 %v419, %v418
  %v435 = vpack.c.b16 %v421, %v420
  %v436 = vpack.c.b16 %v423, %v422
  %v437 = vpack.c.b16 %v425, %v424
  %v438 = vpack.c.b16 %v427, %v426
  %v439 = vpack.c.b16 %v429, %v428
  %v440 = vpack.c.b16 %v431, %v430
  %v441 = vpack.c.b16 %v433, %v432
  %450 = vmatprep.subr.bf16.mxu0 0
  %451 = vmatpush1.bf16.msra.mxu0 %v434
  %452 = vmatprep.subr.bf16.mxu0 0
  %453 = vmatpush1.bf16.msra.mxu0 %v435
  %454 = vmatprep.subr.bf16.mxu0 0
  %455 = vmatpush1.bf16.msra.mxu0 %v436
  %456 = vmatprep.subr.bf16.mxu0 0
  %457 = vmatpush1.bf16.msra.mxu0 %v437
  %458 = vmatprep.subr.bf16.mxu0 0
  %459 = vmatpush1.bf16.msra.mxu0 %v438
  %460 = vmatprep.subr.bf16.mxu0 0
  %461 = vmatpush1.bf16.msra.mxu0 %v439
  %462 = vmatprep.subr.bf16.mxu0 0
  %463 = vmatpush1.bf16.msra.mxu0 %v440
  %464 = vmatprep.subr.bf16.mxu0 0
  %465 = vmatpush1.bf16.msra.mxu0 %v441
  %466 = vmatprep.subr.bf16.mxu0 0
  %467 = vmatpush1.bf16.msra.mxu0 0
  %468 = vmatprep.subr.bf16.mxu0 0
  %469 = vmatpush1.bf16.msra.mxu0 0
  %470 = vmatprep.subr.bf16.mxu0 0
  %471 = vmatpush1.bf16.msra.mxu0 0
  %472 = vmatprep.subr.bf16.mxu0 0
  %473 = vmatpush1.bf16.msra.mxu0 0
  %474 = vmatprep.subr.bf16.mxu0 0
  %475 = vmatpush1.bf16.msra.mxu0 0
  %476 = vmatprep.subr.bf16.mxu0 0
  %477 = vmatpush1.bf16.msra.mxu0 0
  %478 = vmatprep.subr.bf16.mxu0 0
  %479 = vmatpush1.bf16.msra.mxu0 0
  %480 = vmatprep.subr.bf16.mxu0 0
  %481 = vmatpush1.bf16.msra.mxu0 0
  %482 = vmatprep.mubr.bf16.mxu0 0
  %483 = vmatmul.mubr.bf16.gmra.mrb[0].mxu0 %v354
  %v484 = vpop.f32.mrb[0].mxu0
  %v485 = vadd.f32 0.0, %v484
  %v486 = vpop.f32.mrb[0].mxu0
  %v487 = vpop.f32.mrb[0].mxu0
  %v488 = vadd.f32 0.0, %v487
  %v489 = vpop.f32.mrb[0].mxu0
  %490 = vmatprep.mubr.bf16.mxu0 0
  %491 = vmatmul.mubr.bf16.gmra.mrb[0].mxu0 %v355
  %v492 = vpop.f32.mrb[0].mxu0
  %v493 = vadd.f32 0.0, %v492
  %v494 = vpop.f32.mrb[0].mxu0
  %v495 = vpop.f32.mrb[0].mxu0
  %v496 = vadd.f32 0.0, %v495
  %v497 = vpop.f32.mrb[0].mxu0
  %498 = vmatprep.mubr.bf16.mxu0 0
  %499 = vmatmul.mubr.bf16.gmra.mrb[0].mxu0 %v356
  %v500 = vpop.f32.mrb[0].mxu0
  %v501 = vadd.f32 0.0, %v500
  %v502 = vpop.f32.mrb[0].mxu0
  %v503 = vpop.f32.mrb[0].mxu0
  %v504 = vadd.f32 0.0, %v503
  %v505 = vpop.f32.mrb[0].mxu0
  %506 = vmatprep.mubr.bf16.mxu0 0
  %507 = vmatmul.mubr.bf16.gmra.mrb[0].mxu0 %v357
  %v508 = vpop.f32.mrb[0].mxu0
  %v509 = vadd.f32 0.0, %v508
  %v510 = vpop.f32.mrb[0].mxu0
  %v511 = vpop.f32.mrb[0].mxu0
  %v512 = vadd.f32 0.0, %v511
  %v513 = vpop.f32.mrb[0].mxu0
  %514 = vmatprep.mubr.bf16.mxu0 0
  %515 = vmatmul.mubr.bf16.gmra.mrb[0].mxu0 %v358
  %v516 = vpop.f32.mrb[0].mxu0
  %v517 = vadd.f32 0.0, %v516
  %v518 = vpop.f32.mrb[0].mxu0
  %v519 = vpop.f32.mrb[0].mxu0
  %v520 = vadd.f32 0.0, %v519
  %v521 = vpop.f32.mrb[0].mxu0
  %522 = vmatprep.mubr.bf16.mxu0 0
  %523 = vmatmul.mubr.bf16.gmra.mrb[0].mxu0 %v359
  %v524 = vpop.f32.mrb[0].mxu0
  %v525 = vadd.f32 0.0, %v524
  %v526 = vpop.f32.mrb[0].mxu0
  %v527 = vpop.f32.mrb[0].mxu0
  %v528 = vadd.f32 0.0, %v527
  %v529 = vpop.f32.mrb[0].mxu0
  %530 = vmatprep.mubr.bf16.mxu0 0
  %531 = vmatmul.mubr.bf16.gmra.mrb[0].mxu0 %v360
  %v532 = vpop.f32.mrb[0].mxu0
  %v533 = vadd.f32 0.0, %v532
  %v534 = vpop.f32.mrb[0].mxu0
  %v535 = vpop.f32.mrb[0].mxu0
  %v536 = vadd.f32 0.0, %v535
  %v537 = vpop.f32.mrb[0].mxu0
  %538 = vmatprep.mubr.bf16.mxu0 0
  %539 = vmatmul.mubr.bf16.gmra.mrb[0].mxu0 %v361
  %v540 = vpop.f32.mrb[0].mxu0
  %v541 = vadd.f32 0.0, %v540
  %v542 = vpop.f32.mrb[0].mxu0
  %v543 = vpop.f32.mrb[0].mxu0
  %v544 = vadd.f32 0.0, %v543
  %v545 = vpop.f32.mrb[0].mxu0
  %546 = vmatprep.mubr.bf16.mxu0 0
  %547 = vmatmul.mubr.bf16.gmra.mrb[0].mxu0 %v362
  %v548 = vpop.f32.mrb[0].mxu0
  %v549 = vadd.f32 0.0, %v548
  %v550 = vpop.f32.mrb[0].mxu0
  %v551 = vpop.f32.mrb[0].mxu0
  %v552 = vadd.f32 0.0, %v551
  %v553 = vpop.f32.mrb[0].mxu0
  %554 = vmatprep.mubr.bf16.mxu0 0
  %555 = vmatmul.mubr.bf16.gmra.mrb[0].mxu0 %v363
  %v556 = vpop.f32.mrb[0].mxu0
  %v557 = vadd.f32 0.0, %v556
  %v558 = vpop.f32.mrb[0].mxu0
  %v559 = vpop.f32.mrb[0].mxu0
  %v560 = vadd.f32 0.0, %v559
  %v561 = vpop.f32.mrb[0].mxu0
  %562 = vmatprep.mubr.bf16.mxu0 0
  %563 = vmatmul.mubr.bf16.gmra.mrb[0].mxu0 %v364
  %v564 = vpop.f32.mrb[0].mxu0
  %v565 = vadd.f32 0.0, %v564
  %v566 = vpop.f32.mrb[0].mxu0
  %v567 = vpop.f32.mrb[0].mxu0
  %v568 = vadd.f32 0.0, %v567
  %v569 = vpop.f32.mrb[0].mxu0
  %570 = vmatprep.mubr.bf16.mxu0 0
  %571 = vmatmul.mubr.bf16.gmra.mrb[0].mxu0 %v365
  %v572 = vpop.f32.mrb[0].mxu0
  %v573 = vadd.f32 0.0, %v572
  %v574 = vpop.f32.mrb[0].mxu0
  %v575 = vpop.f32.mrb[0].mxu0
  %v576 = vadd.f32 0.0, %v575
  %v577 = vpop.f32.mrb[0].mxu0
  %578 = vmatprep.mubr.bf16.mxu0 0
  %579 = vmatmul.mubr.bf16.gmra.mrb[0].mxu0 %v366
  %v580 = vpop.f32.mrb[0].mxu0
  %v581 = vadd.f32 0.0, %v580
  %v582 = vpop.f32.mrb[0].mxu0
  %v583 = vpop.f32.mrb[0].mxu0
  %v584 = vadd.f32 0.0, %v583
  %v585 = vpop.f32.mrb[0].mxu0
  %586 = vmatprep.mubr.bf16.mxu0 0
  %587 = vmatmul.mubr.bf16.gmra.mrb[0].mxu0 %v367
  %v588 = vpop.f32.mrb[0].mxu0
  %v589 = vadd.f32 0.0, %v588
  %v590 = vpop.f32.mrb[0].mxu0
  %v591 = vpop.f32.mrb[0].mxu0
  %v592 = vadd.f32 0.0, %v591
  %v593 = vpop.f32.mrb[0].mxu0
  %594 = vmatprep.mubr.bf16.mxu0 0
  %595 = vmatmul.mubr.bf16.gmra.mrb[0].mxu0 %v368
  %v596 = vpop.f32.mrb[0].mxu0
  %v597 = vadd.f32 0.0, %v596
  %v598 = vpop.f32.mrb[0].mxu0
  %v599 = vpop.f32.mrb[0].mxu0
  %v600 = vadd.f32 0.0, %v599
  %v601 = vpop.f32.mrb[0].mxu0
  %602 = vmatprep.mubr.bf16.mxu0 0
  %603 = vmatmul.mubr.bf16.gmra.mrb[0].mxu0 %v369
  %v604 = vpop.f32.mrb[0].mxu0
  %v605 = vadd.f32 0.0, %v604
  %v606 = vpop.f32.mrb[0].mxu0
  %v607 = vpop.f32.mrb[0].mxu0
  %v608 = vadd.f32 0.0, %v607
  %v609 = vpop.f32.mrb[0].mxu0
  %610 = vmatprep.mubr.bf16.mxu0 0
  %611 = vmatmul.mubr.bf16.gmra.mrb[0].mxu0 %v370
  %v612 = vpop.f32.mrb[0].mxu0
  %v613 = vadd.f32 0.0, %v612
  %v614 = vpop.f32.mrb[0].mxu0
  %v615 = vpop.f32.mrb[0].mxu0
  %v616 = vadd.f32 0.0, %v615
  %v617 = vpop.f32.mrb[0].mxu0
  %618 = vmatprep.mubr.bf16.mxu0 0
  %619 = vmatmul.mubr.bf16.gmra.mrb[0].mxu0 %v371
  %v620 = vpop.f32.mrb[0].mxu0
  %v621 = vadd.f32 0.0, %v620
  %v622 = vpop.f32.mrb[0].mxu0
  %v623 = vpop.f32.mrb[0].mxu0
  %v624 = vadd.f32 0.0, %v623
  %v625 = vpop.f32.mrb[0].mxu0
  %626 = vmatprep.mubr.bf16.mxu0 0
  %627 = vmatmul.mubr.bf16.gmra.mrb[0].mxu0 %v372
  %v628 = vpop.f32.mrb[0].mxu0
  %v629 = vadd.f32 0.0, %v628
  %v630 = vpop.f32.mrb[0].mxu0
  %v631 = vpop.f32.mrb[0].mxu0
  %v632 = vadd.f32 0.0, %v631
  %v633 = vpop.f32.mrb[0].mxu0
  %634 = vmatprep.mubr.bf16.mxu0 0
  %635 = vmatmul.mubr.bf16.gmra.mrb[0].mxu0 %v373
  %v636 = vpop.f32.mrb[0].mxu0
  %v637 = vadd.f32 0.0, %v636
  %v638 = vpop.f32.mrb[0].mxu0
  %v639 = vpop.f32.mrb[0].mxu0
  %v640 = vadd.f32 0.0, %v639
  %v641 = vpop.f32.mrb[0].mxu0
  %642 = vmatprep.mubr.bf16.mxu0 0
  %643 = vmatmul.mubr.bf16.gmra.mrb[0].mxu0 %v374
  %v644 = vpop.f32.mrb[0].mxu0
  %v645 = vadd.f32 0.0, %v644
  %v646 = vpop.f32.mrb[0].mxu0
  %v647 = vpop.f32.mrb[0].mxu0
  %v648 = vadd.f32 0.0, %v647
  %v649 = vpop.f32.mrb[0].mxu0
  %650 = vmatprep.mubr.bf16.mxu0 0
  %651 = vmatmul.mubr.bf16.gmra.mrb[0].mxu0 %v375
  %v652 = vpop.f32.mrb[0].mxu0
  %v653 = vadd.f32 0.0, %v652
  %v654 = vpop.f32.mrb[0].mxu0
  %v655 = vpop.f32.mrb[0].mxu0
  %v656 = vadd.f32 0.0, %v655
  %v657 = vpop.f32.mrb[0].mxu0
  %658 = vmatprep.mubr.bf16.mxu0 0
  %659 = vmatmul.mubr.bf16.gmra.mrb[0].mxu0 %v376
  %v660 = vpop.f32.mrb[0].mxu0
  %v661 = vadd.f32 0.0, %v660
  %v662 = vpop.f32.mrb[0].mxu0
  %v663 = vpop.f32.mrb[0].mxu0
  %v664 = vadd.f32 0.0, %v663
  %v665 = vpop.f32.mrb[0].mxu0
  %666 = vmatprep.mubr.bf16.mxu0 0
  %667 = vmatmul.mubr.bf16.gmra.mrb[0].mxu0 %v377
  %v668 = vpop.f32.mrb[0].mxu0
  %v669 = vadd.f32 0.0, %v668
  %v670 = vpop.f32.mrb[0].mxu0
  %v671 = vpop.f32.mrb[0].mxu0
  %v672 = vadd.f32 0.0, %v671
  %v673 = vpop.f32.mrb[0].mxu0
  %674 = vmatprep.mubr.bf16.mxu0 0
  %675 = vmatmul.mubr.bf16.gmra.mrb[0].mxu0 %v378
  %v676 = vpop.f32.mrb[0].mxu0
  %v677 = vadd.f32 0.0, %v676
  %v678 = vpop.f32.mrb[0].mxu0
  %v679 = vpop.f32.mrb[0].mxu0
  %v680 = vadd.f32 0.0, %v679
  %v681 = vpop.f32.mrb[0].mxu0
  %682 = vmatprep.mubr.bf16.mxu0 0
  %683 = vmatmul.mubr.bf16.gmra.mrb[0].mxu0 %v379
  %v684 = vpop.f32.mrb[0].mxu0
  %v685 = vadd.f32 0.0, %v684
  %v686 = vpop.f32.mrb[0].mxu0
  %v687 = vpop.f32.mrb[0].mxu0
  %v688 = vadd.f32 0.0, %v687
  %v689 = vpop.f32.mrb[0].mxu0
  %690 = vmatprep.mubr.bf16.mxu0 0
  %691 = vmatmul.mubr.bf16.gmra.mrb[0].mxu0 %v380
  %v692 = vpop.f32.mrb[0].mxu0
  %v693 = vadd.f32 0.0, %v692
  %v694 = vpop.f32.mrb[0].mxu0
  %v695 = vpop.f32.mrb[0].mxu0
  %v696 = vadd.f32 0.0, %v695
  %v697 = vpop.f32.mrb[0].mxu0
  %698 = vmatprep.mubr.bf16.mxu0 0
  %699 = vmatmul.mubr.bf16.gmra.mrb[0].mxu0 %v381
  %v700 = vpop.f32.mrb[0].mxu0
  %v701 = vadd.f32 0.0, %v700
  %v702 = vpop.f32.mrb[0].mxu0
  %v703 = vpop.f32.mrb[0].mxu0
  %v704 = vadd.f32 0.0, %v703
  %v705 = vpop.f32.mrb[0].mxu0
  %706 = vmatprep.mubr.bf16.mxu0 0
  %707 = vmatmul.mubr.bf16.gmra.mrb[0].mxu0 %v382
  %v708 = vpop.f32.mrb[0].mxu0
  %v709 = vadd.f32 0.0, %v708
  %v710 = vpop.f32.mrb[0].mxu0
  %v711 = vpop.f32.mrb[0].mxu0
  %v712 = vadd.f32 0.0, %v711
  %v713 = vpop.f32.mrb[0].mxu0
  %714 = vmatprep.mubr.bf16.mxu0 0
  %715 = vmatmul.mubr.bf16.gmra.mrb[0].mxu0 %v383
  %v716 = vpop.f32.mrb[0].mxu0
  %v717 = vadd.f32 0.0, %v716
  %v718 = vpop.f32.mrb[0].mxu0
  %v719 = vpop.f32.mrb[0].mxu0
  %v720 = vadd.f32 0.0, %v719
  %v721 = vpop.f32.mrb[0].mxu0
  %722 = vmatprep.mubr.bf16.mxu0 0
  %723 = vmatmul.mubr.bf16.gmra.mrb[0].mxu0 %v384
  %v724 = vpop.f32.mrb[0].mxu0
  %v725 = vadd.f32 0.0, %v724
  %v726 = vpop.f32.mrb[0].mxu0
  %v727 = vpop.f32.mrb[0].mxu0
  %v728 = vadd.f32 0.0, %v727
  %v729 = vpop.f32.mrb[0].mxu0
  %730 = vmatprep.mubr.bf16.mxu0 0
  %731 = vmatmul.mubr.bf16.gmra.mrb[0].mxu0 %v385
  %v732 = vpop.f32.mrb[0].mxu0
  %v733 = vadd.f32 0.0, %v732
  %v734 = vpop.f32.mrb[0].mxu0
  %v735 = vpop.f32.mrb[0].mxu0
  %v736 = vadd.f32 0.0, %v735
  %v737 = vpop.f32.mrb[0].mxu0
  %738 = vdwg.mxu0
  %v739 = vpack.c.bf16 %v488, %v485
  %v740 = vpack.c.bf16 %v496, %v493
  %v741 = vpack.c.bf16 %v504, %v501
  %v742 = vpack.c.bf16 %v512, %v509
  %v743 = vpack.c.bf16 %v520, %v517
  %v744 = vpack.c.bf16 %v528, %v525
  %v745 = vpack.c.bf16 %v536, %v533
  %v746 = vpack.c.bf16 %v544, %v541
  %v747 = vpack.c.bf16 %v552, %v549
  %v748 = vpack.c.bf16 %v560, %v557
  %v749 = vpack.c.bf16 %v568, %v565
  %v750 = vpack.c.bf16 %v576, %v573
  %v751 = vpack.c.bf16 %v584, %v581
  %v752 = vpack.c.bf16 %v592, %v589
  %v753 = vpack.c.bf16 %v600, %v597
  %v754 = vpack.c.bf16 %v608, %v605
  %v755 = vpack.c.bf16 %v616, %v613
  %v756 = vpack.c.bf16 %v624, %v621
  %v757 = vpack.c.bf16 %v632, %v629
  %v758 = vpack.c.bf16 %v640, %v637
  %v759 = vpack.c.bf16 %v648, %v645
  %v760 = vpack.c.bf16 %v656, %v653
  %v761 = vpack.c.bf16 %v664, %v661
  %v762 = vpack.c.bf16 %v672, %v669
  %v763 = vpack.c.bf16 %v680, %v677
  %v764 = vpack.c.bf16 %v688, %v685
  %v765 = vpack.c.bf16 %v696, %v693
  %v766 = vpack.c.bf16 %v704, %v701
  %v767 = vpack.c.bf16 %v712, %v709
  %v768 = vpack.c.bf16 %v720, %v717
  %v769 = vpack.c.bf16 %v728, %v725
  %v770 = vpack.c.bf16 %v736, %v733
  %v803 = vunpack.c.l.b16 %v739
  %v804 = vunpack.c.h.b16 %v739
  %v805 = vunpack.c.l.b16 %v740
  %v806 = vunpack.c.h.b16 %v740
  %v807 = vunpack.c.l.b16 %v741
  %v808 = vunpack.c.h.b16 %v741
  %v809 = vunpack.c.l.b16 %v742
  %v810 = vunpack.c.h.b16 %v742
  %v811 = vunpack.c.l.b16 %v743
  %v812 = vunpack.c.h.b16 %v743
  %v813 = vunpack.c.l.b16 %v744
  %v814 = vunpack.c.h.b16 %v744
  %v815 = vunpack.c.l.b16 %v745
  %v816 = vunpack.c.h.b16 %v745
  %v817 = vunpack.c.l.b16 %v746
  %v818 = vunpack.c.h.b16 %v746
  %v819 = vunpack.c.l.b16 %v747
  %v820 = vunpack.c.h.b16 %v747
  %v821 = vunpack.c.l.b16 %v748
  %v822 = vunpack.c.h.b16 %v748
  %v823 = vunpack.c.l.b16 %v749
  %v824 = vunpack.c.h.b16 %v749
  %v825 = vunpack.c.l.b16 %v750
  %v826 = vunpack.c.h.b16 %v750
  %v827 = vunpack.c.l.b16 %v751
  %v828 = vunpack.c.h.b16 %v751
  %v829 = vunpack.c.l.b16 %v752
  %v830 = vunpack.c.h.b16 %v752
  %v831 = vunpack.c.l.b16 %v753
  %v832 = vunpack.c.h.b16 %v753
  %v833 = vunpack.c.l.b16 %v754
  %v834 = vunpack.c.h.b16 %v754
  %v835 = vunpack.c.l.b16 %v755
  %v836 = vunpack.c.h.b16 %v755
  %v837 = vunpack.c.l.b16 %v756
  %v838 = vunpack.c.h.b16 %v756
  %v839 = vunpack.c.l.b16 %v757
  %v840 = vunpack.c.h.b16 %v757
  %v841 = vunpack.c.l.b16 %v758
  %v842 = vunpack.c.h.b16 %v758
  %v843 = vunpack.c.l.b16 %v759
  %v844 = vunpack.c.h.b16 %v759
  %v845 = vunpack.c.l.b16 %v760
  %v846 = vunpack.c.h.b16 %v760
  %v847 = vunpack.c.l.b16 %v761
  %v848 = vunpack.c.h.b16 %v761
  %v849 = vunpack.c.l.b16 %v762
  %v850 = vunpack.c.h.b16 %v762
  %v851 = vunpack.c.l.b16 %v763
  %v852 = vunpack.c.h.b16 %v763
  %v853 = vunpack.c.l.b16 %v764
  %v854 = vunpack.c.h.b16 %v764
  %v855 = vunpack.c.l.b16 %v765
  %v856 = vunpack.c.h.b16 %v765
  %v857 = vunpack.c.l.b16 %v766
  %v858 = vunpack.c.h.b16 %v766
  %v859 = vunpack.c.l.b16 %v767
  %v860 = vunpack.c.h.b16 %v767
  %v861 = vunpack.c.l.b16 %v768
  %v862 = vunpack.c.h.b16 %v768
  %v863 = vunpack.c.l.b16 %v769
  %v864 = vunpack.c.h.b16 %v769
  %v865 = vunpack.c.l.b16 %v770
  %v866 = vunpack.c.h.b16 %v770
  %v867 = vpack.c.b16 %v803, %v803
  %v868 = vpack.c.b16 %v804, %v804
  %v869 = vpack.c.b16 %v805, %v805
  %v870 = vpack.c.b16 %v806, %v806
  %v871 = vpack.c.b16 %v807, %v807
  %v872 = vpack.c.b16 %v808, %v808
  %v873 = vpack.c.b16 %v809, %v809
  %v874 = vpack.c.b16 %v810, %v810
  %v875 = vpack.c.b16 %v811, %v811
  %v876 = vpack.c.b16 %v812, %v812
  %v877 = vpack.c.b16 %v813, %v813
  %v878 = vpack.c.b16 %v814, %v814
  %v879 = vpack.c.b16 %v815, %v815
  %v880 = vpack.c.b16 %v816, %v816
  %v881 = vpack.c.b16 %v817, %v817
  %v882 = vpack.c.b16 %v818, %v818
  %v883 = vpack.c.b16 %v819, %v819
  %v884 = vpack.c.b16 %v820, %v820
  %v885 = vpack.c.b16 %v821, %v821
  %v886 = vpack.c.b16 %v822, %v822
  %v887 = vpack.c.b16 %v823, %v823
  %v888 = vpack.c.b16 %v824, %v824
  %v889 = vpack.c.b16 %v825, %v825
  %v890 = vpack.c.b16 %v826, %v826
  %v891 = vpack.c.b16 %v827, %v827
  %v892 = vpack.c.b16 %v828, %v828
  %v893 = vpack.c.b16 %v829, %v829
  %v894 = vpack.c.b16 %v830, %v830
  %v895 = vpack.c.b16 %v831, %v831
  %v896 = vpack.c.b16 %v832, %v832
  %v897 = vpack.c.b16 %v833, %v833
  %v898 = vpack.c.b16 %v834, %v834
  %v899 = vpack.c.b16 %v835, %v835
  %v900 = vpack.c.b16 %v836, %v836
  %v901 = vpack.c.b16 %v837, %v837
  %v902 = vpack.c.b16 %v838, %v838
  %v903 = vpack.c.b16 %v839, %v839
  %v904 = vpack.c.b16 %v840, %v840
  %v905 = vpack.c.b16 %v841, %v841
  %v906 = vpack.c.b16 %v842, %v842
  %v907 = vpack.c.b16 %v843, %v843
  %v908 = vpack.c.b16 %v844, %v844
  %v909 = vpack.c.b16 %v845, %v845
  %v910 = vpack.c.b16 %v846, %v846
  %v911 = vpack.c.b16 %v847, %v847
  %v912 = vpack.c.b16 %v848, %v848
  %v913 = vpack.c.b16 %v849, %v849
  %v914 = vpack.c.b16 %v850, %v850
  %v915 = vpack.c.b16 %v851, %v851
  %v916 = vpack.c.b16 %v852, %v852
  %v917 = vpack.c.b16 %v853, %v853
  %v918 = vpack.c.b16 %v854, %v854
  %v919 = vpack.c.b16 %v855, %v855
  %v920 = vpack.c.b16 %v856, %v856
  %v921 = vpack.c.b16 %v857, %v857
  %v922 = vpack.c.b16 %v858, %v858
  %v923 = vpack.c.b16 %v859, %v859
  %v924 = vpack.c.b16 %v860, %v860
  %v925 = vpack.c.b16 %v861, %v861
  %v926 = vpack.c.b16 %v862, %v862
  %v927 = vpack.c.b16 %v863, %v863
  %v928 = vpack.c.b16 %v864, %v864
  %v929 = vpack.c.b16 %v865, %v865
  %v930 = vpack.c.b16 %v866, %v866
  %995 = vst [vmem:[%s4] sm:$0xf] %v867
  %996 = vst [vmem:[%s4 + $0x4] sm:$0xf] %v868
  %997 = vst [vmem:[%s4 + $0x8] sm:$0xf] %v869
  %998 = vst [vmem:[%s4 + $0xc] sm:$0xf] %v870
  %999 = vst [vmem:[%s4 + $0x10] sm:$0xf] %v871
  %1000 = vst [vmem:[%s4 + $0x14] sm:$0xf] %v872
  %1001 = vst [vmem:[%s4 + $0x18] sm:$0xf] %v873
  %1002 = vst [vmem:[%s4 + $0x1c] sm:$0xf] %v874
  %1003 = vst [vmem:[%s4 + $0x20] sm:$0xf] %v875
  %1004 = vst [vmem:[%s4 + $0x24] sm:$0xf] %v876
  %1005 = vst [vmem:[%s4 + $0x28] sm:$0xf] %v877
  %1006 = vst [vmem:[%s4 + $0x2c] sm:$0xf] %v878
  %1007 = vst [vmem:[%s4 + $0x30] sm:$0xf] %v879
  %1008 = vst [vmem:[%s4 + $0x34] sm:$0xf] %v880
  %1009 = vst [vmem:[%s4 + $0x38] sm:$0xf] %v881
  %1010 = vst [vmem:[%s4 + $0x3c] sm:$0xf] %v882
  %1011 = vst [vmem:[%s4 + $0x40] sm:$0xf] %v883
  %1012 = vst [vmem:[%s4 + $0x44] sm:$0xf] %v884
  %1013 = vst [vmem:[%s4 + $0x48] sm:$0xf] %v885
  %1014 = vst [vmem:[%s4 + $0x4c] sm:$0xf] %v886
  %1015 = vst [vmem:[%s4 + $0x50] sm:$0xf] %v887
  %1016 = vst [vmem:[%s4 + $0x54] sm:$0xf] %v888
  %1017 = vst [vmem:[%s4 + $0x58] sm:$0xf] %v889
  %1018 = vst [vmem:[%s4 + $0x5c] sm:$0xf] %v890
  %1019 = vst [vmem:[%s4 + $0x60] sm:$0xf] %v891
  %1020 = vst [vmem:[%s4 + $0x64] sm:$0xf] %v892
  %1021 = vst [vmem:[%s4 + $0x68] sm:$0xf] %v893
  %1022 = vst [vmem:[%s4 + $0x6c] sm:$0xf] %v894
  %1023 = vst [vmem:[%s4 + $0x70] sm:$0xf] %v895
  %1024 = vst [vmem:[%s4 + $0x74] sm:$0xf] %v896
  %1025 = vst [vmem:[%s4 + $0x78] sm:$0xf] %v897
  %1026 = vst [vmem:[%s4 + $0x7c] sm:$0xf] %v898
  %1027 = vst [vmem:[%s4 + $0x80] sm:$0xf] %v899
  %1028 = vst [vmem:[%s4 + $0x84] sm:$0xf] %v900
  %1029 = vst [vmem:[%s4 + $0x88] sm:$0xf] %v901
  %1030 = vst [vmem:[%s4 + $0x8c] sm:$0xf] %v902
  %1031 = vst [vmem:[%s4 + $0x90] sm:$0xf] %v903
  %1032 = vst [vmem:[%s4 + $0x94] sm:$0xf] %v904
  %1033 = vst [vmem:[%s4 + $0x98] sm:$0xf] %v905
  %1034 = vst [vmem:[%s4 + $0x9c] sm:$0xf] %v906
  %1035 = vst [vmem:[%s4 + $0xa0] sm:$0xf] %v907
  %1036 = vst [vmem:[%s4 + $0xa4] sm:$0xf] %v908
  %1037 = vst [vmem:[%s4 + $0xa8] sm:$0xf] %v909
  %1038 = vst [vmem:[%s4 + $0xac] sm:$0xf] %v910
  %1039 = vst [vmem:[%s4 + $0xb0] sm:$0xf] %v911
  %1040 = vst [vmem:[%s4 + $0xb4] sm:$0xf] %v912
  %1041 = vst [vmem:[%s4 + $0xb8] sm:$0xf] %v913
  %1042 = vst [vmem:[%s4 + $0xbc] sm:$0xf] %v914
  %1043 = vst [vmem:[%s4 + $0xc0] sm:$0xf] %v915
  %1044 = vst [vmem:[%s4 + $0xc4] sm:$0xf] %v916
  %1045 = vst [vmem:[%s4 + $0xc8] sm:$0xf] %v917
  %1046 = vst [vmem:[%s4 + $0xcc] sm:$0xf] %v918
  %1047 = vst [vmem:[%s4 + $0xd0] sm:$0xf] %v919
  %1048 = vst [vmem:[%s4 + $0xd4] sm:$0xf] %v920
  %1049 = vst [vmem:[%s4 + $0xd8] sm:$0xf] %v921
  %1050 = vst [vmem:[%s4 + $0xdc] sm:$0xf] %v922
  %1051 = vst [vmem:[%s4 + $0xe0] sm:$0xf] %v923
  %1052 = vst [vmem:[%s4 + $0xe4] sm:$0xf] %v924
  %1053 = vst [vmem:[%s4 + $0xe8] sm:$0xf] %v925
  %1054 = vst [vmem:[%s4 + $0xec] sm:$0xf] %v926
  %1055 = vst [vmem:[%s4 + $0xf0] sm:$0xf] %v927
  %1056 = vst [vmem:[%s4 + $0xf4] sm:$0xf] %v928
  %1057 = vst [vmem:[%s4 + $0xf8] sm:$0xf] %v929
  %1058 = vst [vmem:[%s4 + $0xfc] sm:$0xf] %v930
  %v1059 = vadd.f32 %v485, %v488
  %v1060 = vadd.f32 %v1059, %v493
  %v1061 = vadd.f32 %v1060, %v496
  %v1062 = vadd.f32 %v1061, %v501
  %v1063 = vadd.f32 %v1062, %v504
  %v1064 = vadd.f32 %v1063, %v509
  %v1065 = vadd.f32 %v1064, %v512
  %v1066 = vadd.f32 %v1065, %v517
  %v1067 = vadd.f32 %v1066, %v520
  %v1068 = vadd.f32 %v1067, %v525
  %v1069 = vadd.f32 %v1068, %v528
  %v1070 = vadd.f32 %v1069, %v533
  %v1071 = vadd.f32 %v1070, %v536
  %v1072 = vadd.f32 %v1071, %v541
  %v1073 = vadd.f32 %v1072, %v544
  %v1074 = vadd.f32 %v1073, %v549
  %v1075 = vadd.f32 %v1074, %v552
  %v1076 = vadd.f32 %v1075, %v557
  %v1077 = vadd.f32 %v1076, %v560
  %v1078 = vadd.f32 %v1077, %v565
  %v1079 = vadd.f32 %v1078, %v568
  %v1080 = vadd.f32 %v1079, %v573
  %v1081 = vadd.f32 %v1080, %v576
  %v1082 = vadd.f32 %v1081, %v581
  %v1083 = vadd.f32 %v1082, %v584
  %v1084 = vadd.f32 %v1083, %v589
  %v1085 = vadd.f32 %v1084, %v592
  %v1086 = vadd.f32 %v1085, %v597
  %v1087 = vadd.f32 %v1086, %v600
  %v1088 = vadd.f32 %v1087, %v605
  %v1089 = vadd.f32 %v1088, %v608
  %v1090 = vadd.f32 %v1089, %v613
  %v1091 = vadd.f32 %v1090, %v616
  %v1092 = vadd.f32 %v1091, %v621
  %v1093 = vadd.f32 %v1092, %v624
  %v1094 = vadd.f32 %v1093, %v629
  %v1095 = vadd.f32 %v1094, %v632
  %v1096 = vadd.f32 %v1095, %v637
  %v1097 = vadd.f32 %v1096, %v640
  %v1098 = vadd.f32 %v1097, %v645
  %v1099 = vadd.f32 %v1098, %v648
  %v1100 = vadd.f32 %v1099, %v653
  %v1101 = vadd.f32 %v1100, %v656
  %v1102 = vadd.f32 %v1101, %v661
  %v1103 = vadd.f32 %v1102, %v664
  %v1104 = vadd.f32 %v1103, %v669
  %v1105 = vadd.f32 %v1104, %v672
  %v1106 = vadd.f32 %v1105, %v677
  %v1107 = vadd.f32 %v1106, %v680
  %v1108 = vadd.f32 %v1107, %v685
  %v1109 = vadd.f32 %v1108, %v688
  %v1110 = vadd.f32 %v1109, %v693
  %v1111 = vadd.f32 %v1110, %v696
  %v1112 = vadd.f32 %v1111, %v701
  %v1113 = vadd.f32 %v1112, %v704
  %v1114 = vadd.f32 %v1113, %v709
  %v1115 = vadd.f32 %v1114, %v712
  %v1116 = vadd.f32 %v1115, %v717
  %v1117 = vadd.f32 %v1116, %v720
  %v1118 = vadd.f32 %v1117, %v725
  %v1119 = vadd.f32 %v1118, %v728
  %v1120 = vadd.f32 %v1119, %v733
  %v1121 = vadd.f32 %v1120, %v736
  %v1122 = vrot.slane %v1121, 4
  %v1123 = vadd.f32 %v1121, %v1122
  %v1124 = vrot.slane %v1123, 2
  %v1125 = vadd.f32 %v1123, %v1124
  %v1126 = vrot.slane %v1125, 1
  %v1127 = vadd.f32 %v1125, %v1126
  %v1128 = vmul.f32 %v485, %v485
  %v1129 = vmul.f32 %v488, %v488
  %v1130 = vmul.f32 %v493, %v493
  %v1131 = vmul.f32 %v496, %v496
  %v1132 = vmul.f32 %v501, %v501
  %v1133 = vmul.f32 %v504, %v504
  %v1134 = vmul.f32 %v509, %v509
  %v1135 = vmul.f32 %v512, %v512
  %v1136 = vmul.f32 %v517, %v517
  %v1137 = vmul.f32 %v520, %v520
  %v1138 = vmul.f32 %v525, %v525
  %v1139 = vmul.f32 %v528, %v528
  %v1140 = vmul.f32 %v533, %v533
  %v1141 = vmul.f32 %v536, %v536
  %v1142 = vmul.f32 %v541, %v541
  %v1143 = vmul.f32 %v544, %v544
  %v1144 = vmul.f32 %v549, %v549
  %v1145 = vmul.f32 %v552, %v552
  %v1146 = vmul.f32 %v557, %v557
  %v1147 = vmul.f32 %v560, %v560
  %v1148 = vmul.f32 %v565, %v565
  %v1149 = vmul.f32 %v568, %v568
  %v1150 = vmul.f32 %v573, %v573
  %v1151 = vmul.f32 %v576, %v576
  %v1152 = vmul.f32 %v581, %v581
  %v1153 = vmul.f32 %v584, %v584
  %v1154 = vmul.f32 %v589, %v589
  %v1155 = vmul.f32 %v592, %v592
  %v1156 = vmul.f32 %v597, %v597
  %v1157 = vmul.f32 %v600, %v600
  %v1158 = vmul.f32 %v605, %v605
  %v1159 = vmul.f32 %v608, %v608
  %v1160 = vmul.f32 %v613, %v613
  %v1161 = vmul.f32 %v616, %v616
  %v1162 = vmul.f32 %v621, %v621
  %v1163 = vmul.f32 %v624, %v624
  %v1164 = vmul.f32 %v629, %v629
  %v1165 = vmul.f32 %v632, %v632
  %v1166 = vmul.f32 %v637, %v637
  %v1167 = vmul.f32 %v640, %v640
  %v1168 = vmul.f32 %v645, %v645
  %v1169 = vmul.f32 %v648, %v648
  %v1170 = vmul.f32 %v653, %v653
  %v1171 = vmul.f32 %v656, %v656
  %v1172 = vmul.f32 %v661, %v661
  %v1173 = vmul.f32 %v664, %v664
  %v1174 = vmul.f32 %v669, %v669
  %v1175 = vmul.f32 %v672, %v672
  %v1176 = vmul.f32 %v677, %v677
  %v1177 = vmul.f32 %v680, %v680
  %v1178 = vmul.f32 %v685, %v685
  %v1179 = vmul.f32 %v688, %v688
  %v1180 = vmul.f32 %v693, %v693
  %v1181 = vmul.f32 %v696, %v696
  %v1182 = vmul.f32 %v701, %v701
  %v1183 = vmul.f32 %v704, %v704
  %v1184 = vmul.f32 %v709, %v709
  %v1185 = vmul.f32 %v712, %v712
  %v1186 = vmul.f32 %v717, %v717
  %v1187 = vmul.f32 %v720, %v720
  %v1188 = vmul.f32 %v725, %v725
  %v1189 = vmul.f32 %v728, %v728
  %v1190 = vmul.f32 %v733, %v733
  %v1191 = vmul.f32 %v736, %v736
  %v1192 = vadd.f32 %v1128, %v1129
  %v1193 = vadd.f32 %v1192, %v1130
  %v1194 = vadd.f32 %v1193, %v1131
  %v1195 = vadd.f32 %v1194, %v1132
  %v1196 = vadd.f32 %v1195, %v1133
  %v1197 = vadd.f32 %v1196, %v1134
  %v1198 = vadd.f32 %v1197, %v1135
  %v1199 = vadd.f32 %v1198, %v1136
  %v1200 = vadd.f32 %v1199, %v1137
  %v1201 = vadd.f32 %v1200, %v1138
  %v1202 = vadd.f32 %v1201, %v1139
  %v1203 = vadd.f32 %v1202, %v1140
  %v1204 = vadd.f32 %v1203, %v1141
  %v1205 = vadd.f32 %v1204, %v1142
  %v1206 = vadd.f32 %v1205, %v1143
  %v1207 = vadd.f32 %v1206, %v1144
  %v1208 = vadd.f32 %v1207, %v1145
  %v1209 = vadd.f32 %v1208, %v1146
  %v1210 = vadd.f32 %v1209, %v1147
  %v1211 = vadd.f32 %v1210, %v1148
  %v1212 = vadd.f32 %v1211, %v1149
  %v1213 = vadd.f32 %v1212, %v1150
  %v1214 = vadd.f32 %v1213, %v1151
  %v1215 = vadd.f32 %v1214, %v1152
  %v1216 = vadd.f32 %v1215, %v1153
  %v1217 = vadd.f32 %v1216, %v1154
  %v1218 = vadd.f32 %v1217, %v1155
  %v1219 = vadd.f32 %v1218, %v1156
  %v1220 = vadd.f32 %v1219, %v1157
  %v1221 = vadd.f32 %v1220, %v1158
  %v1222 = vadd.f32 %v1221, %v1159
  %v1223 = vadd.f32 %v1222, %v1160
  %v1224 = vadd.f32 %v1223, %v1161
  %v1225 = vadd.f32 %v1224, %v1162
  %v1226 = vadd.f32 %v1225, %v1163
  %v1227 = vadd.f32 %v1226, %v1164
  %v1228 = vadd.f32 %v1227, %v1165
  %v1229 = vadd.f32 %v1228, %v1166
  %v1230 = vadd.f32 %v1229, %v1167
  %v1231 = vadd.f32 %v1230, %v1168
  %v1232 = vadd.f32 %v1231, %v1169
  %v1233 = vadd.f32 %v1232, %v1170
  %v1234 = vadd.f32 %v1233, %v1171
  %v1235 = vadd.f32 %v1234, %v1172
  %v1236 = vadd.f32 %v1235, %v1173
  %v1237 = vadd.f32 %v1236, %v1174
  %v1238 = vadd.f32 %v1237, %v1175
  %v1239 = vadd.f32 %v1238, %v1176
  %v1240 = vadd.f32 %v1239, %v1177
  %v1241 = vadd.f32 %v1240, %v1178
  %v1242 = vadd.f32 %v1241, %v1179
  %v1243 = vadd.f32 %v1242, %v1180
  %v1244 = vadd.f32 %v1243, %v1181
  %v1245 = vadd.f32 %v1244, %v1182
  %v1246 = vadd.f32 %v1245, %v1183
  %v1247 = vadd.f32 %v1246, %v1184
  %v1248 = vadd.f32 %v1247, %v1185
  %v1249 = vadd.f32 %v1248, %v1186
  %v1250 = vadd.f32 %v1249, %v1187
  %v1251 = vadd.f32 %v1250, %v1188
  %v1252 = vadd.f32 %v1251, %v1189
  %v1253 = vadd.f32 %v1252, %v1190
  %v1254 = vadd.f32 %v1253, %v1191
  %v1255 = vrot.slane %v1254, 4
  %v1256 = vadd.f32 %v1254, %v1255
  %v1257 = vrot.slane %v1256, 2
  %v1258 = vadd.f32 %v1256, %v1257
  %v1259 = vrot.slane %v1258, 1
  %v1260 = vadd.f32 %v1258, %v1259
  %vm1261 = vcmask 1040384
  %v1262 = vsel %vm1261, %v1127, %v1260
  %1263 = vst [vmem:[%s5] sm:$0x3] %v1262
  // Predicated region
  $region18: #{bottleneck_forward.6} parent=0 // pred_check
    _
  $region19: #{bottleneck_forward.6} parent=0 // pred_check_branch
    %1265 = sbr.rel (0) target = $region21
  $region20: #{bottleneck_forward.6} parent=0 // pred_region
    _
  $region21: #{bottleneck_forward.6} parent=0 // pred_fallthru
    _
  // Predicated region
  $region22: #{bottleneck_forward.6} parent=0 // pred_check
    _
  $region23: #{bottleneck_forward.6} parent=0 // pred_check_branch
    %1267 = sbr.rel (0) target = $region25
  $region24: #{bottleneck_forward.6} parent=0 // pred_region
    _
  $region25: #{bottleneck_forward.6} parent=0 // pred_fallthru
    _
  // Predicated region
  $region26: #{bottleneck_forward.6} parent=0 // pred_check
    _
  $region27: #{bottleneck_forward.6} parent=0 // pred_check_branch
    %1269 = sbr.rel (0) target = $region29
  $region28: #{bottleneck_forward.6} parent=0 // pred_region
    _
  $region29: #{bottleneck_forward.6} parent=0 // pred_fallthru
    _
  // Predicated region
  $region30: #{bottleneck_forward.6} parent=0 // pred_check
    _
  $region31: #{bottleneck_forward.6} parent=0 // pred_check_branch
    %1271 = sbr.rel (0) target = $region33
  $region32: #{bottleneck_forward.6} parent=0 // pred_region
    _
  $region33: #{bottleneck_forward.6} parent=0 // pred_fallthru
    _

// kernel: bottleneck_forward.5
$region0: #{bottleneck_forward.5}
  #allocation0 [shape = 'u32[]', space=smem, size = 0x4, offset = 0x4, fixed_abs, tag = 'smem constant byte address 0x4 - core index']
  #allocation1 [shape = 'u32[144,128]{1,0:T(1,128)}', space=vmem, size = 0x12000, scoped, tag = 'internal scratch']
  #allocation2 [shape = 'bf16[18,16,384]{2,1,0:T(16,128)(2,1)}', space=vmem, size = 0x36000, scoped, tag = 'scratch operand']
  %s0 = inlined_call_operand.vmem [shape: bf16[2,16,16,128], index: 0, kind: input, shape index: {}]
  %s1 = inlined_call_operand.vmem [shape: f32[1,128], index: 1, kind: input, shape index: {}]
  %s2 = inlined_call_operand.vmem [shape: f32[1,128], index: 2, kind: input, shape index: {}]
  %s3 = inlined_call_operand.vmem [shape: bf16[3,384,128], index: 3, kind: input, shape index: {}]
  %s4 = inlined_call_operand.vmem [shape: bf16[2,16,16,128], index: 4, kind: output, shape index: {0}]
  %s5 = inlined_call_operand.vmem [shape: f32[2,2,128], index: 5, kind: output, shape index: {1}]
  %6 = xla_tuple %s4, %s5
  %s7 = sld [smem:[#allocation0]]
  $region57: #{bottleneck_forward.5} parent=0
    _
  %s9 = ssub.s32 1, %s7
  %s10 = scalar_select 0, %s9, %s7
  loop: start=0, step=1, limit=4
  $region2: #{bottleneck_forward.5} parent=0 // loop_pre_header
    _
  $region3: #{bottleneck_forward.5} parent=0 // loop_header
    %s12 = sphi 0, %s16
    %p13 = scmp.ge.s32.totalorder %s12, 4
    %s22 = sphi 0, %s24
    %s25 = sphi 0, %s22
    %s26 = sphi 0, %s25
    %s42 = sphi 0, %s26
    %s46 = sphi 0, %s46
    %s48 = sphi 0, %s46
    %s49 = sphi 0, %s48
    %s63 = sphi 0, %s49
    %s67 = sphi 0, %s67
    %s69 = sphi 0, %s67
    %s70 = sphi 0, %s69
    %s84 = sphi 0, %s70
    %s88 = sphi 0, %s88
    %s90 = sphi 0, %s88
    %s91 = sphi 0, %s90
    %s105 = sphi 0, %s91
    %s111 = sphi 0, %s113
    %s114 = sphi 0, %s111
    %s115 = sphi 0, %s114
    %s131 = sphi 0, %s115
    %s137 = sphi 0, %s139
    %s140 = sphi 0, %s137
    %s141 = sphi 0, %s140
    %s157 = sphi 0, %s141
  $region4: #{bottleneck_forward.5} parent=0 // loop_header_branch
    %15 = sbr.rel (%p13) target = $region8
  $region5: #{bottleneck_forward.5} parent=0 // loop_body
    %s17 = ssub.s32 %s12, 1
    %s18 = ssub.s32 %s12, 2
    %s19 = sadd.s32 %s12, 1
    %s20 = ssub.s32 %s12, %s19
    %p21 = scmp.eq.s32.totalorder %s20, 0
    %s23 = sadd.s32 %s22, 1
    %s24 = scalar_select %p21, %s22, %s23
    %p27 = pneg %p21
    %p28 = scmp.eq.s32.totalorder %s12, 1
    %p29 = por %p27, %p28
    %p30 = scmp.ne.s32.totalorder %s22, %s25
    %p31 = scmp.eq.s32.totalorder %s12, 0
    %p32 = por %p30, %p31
    %p33 = scmp.ne.s32.totalorder %s22, %s25
    %p34 = scmp.eq.s32.totalorder %s17, 1
    %p35 = por %p33, %p34
    %p36 = scmp.ne.s32.totalorder %s25, %s26
    %p37 = scmp.eq.s32.totalorder %s17, 0
    %p38 = por %p36, %p37
    %p39 = scmp.ne.s32.totalorder %s25, %s26
    %p40 = scmp.eq.s32.totalorder %s18, 1
    %p41 = por %p39, %p40
    %p43 = scmp.ne.s32.totalorder %s26, %s42
    %p44 = scmp.eq.s32.totalorder %s18, 0
    %p45 = por %p43, %p44
    %s47 = sadd.s32 %s46, 1
    %p50 = scmp.eq.s32.totalorder %s12, 1
    %p51 = scmp.ne.s32.totalorder %s46, %s48
    %p52 = scmp.eq.s32.totalorder %s12, 0
    %p53 = por %p51, %p52
    %p54 = scmp.ne.s32.totalorder %s46, %s48
    %p55 = scmp.eq.s32.totalorder %s17, 1
    %p56 = por %p54, %p55
    %p57 = scmp.ne.s32.totalorder %s48, %s49
    %p58 = scmp.eq.s32.totalorder %s17, 0
    %p59 = por %p57, %p58
    %p60 = scmp.ne.s32.totalorder %s48, %s49
    %p61 = scmp.eq.s32.totalorder %s18, 1
    %p62 = por %p60, %p61
    %p64 = scmp.ne.s32.totalorder %s49, %s63
    %p65 = scmp.eq.s32.totalorder %s18, 0
    %p66 = por %p64, %p65
    %s68 = sadd.s32 %s67, 1
    %p71 = scmp.eq.s32.totalorder %s12, 1
    %p72 = scmp.ne.s32.totalorder %s67, %s69
    %p73 = scmp.eq.s32.totalorder %s12, 0
    %p74 = por %p72, %p73
    %p75 = scmp.ne.s32.totalorder %s67, %s69
    %p76 = scmp.eq.s32.totalorder %s17, 1
    %p77 = por %p75, %p76
    %p78 = scmp.ne.s32.totalorder %s69, %s70
    %p79 = scmp.eq.s32.totalorder %s17, 0
    %p80 = por %p78, %p79
    %p81 = scmp.ne.s32.totalorder %s69, %s70
    %p82 = scmp.eq.s32.totalorder %s18, 1
    %p83 = por %p81, %p82
    %p85 = scmp.ne.s32.totalorder %s70, %s84
    %p86 = scmp.eq.s32.totalorder %s18, 0
    %p87 = por %p85, %p86
    %s89 = sadd.s32 %s88, 1
    %p92 = scmp.eq.s32.totalorder %s12, 1
    %p93 = scmp.ne.s32.totalorder %s88, %s90
    %p94 = scmp.eq.s32.totalorder %s12, 0
    %p95 = por %p93, %p94
    %p96 = scmp.ne.s32.totalorder %s88, %s90
    %p97 = scmp.eq.s32.totalorder %s17, 1
    %p98 = por %p96, %p97
    %p99 = scmp.ne.s32.totalorder %s90, %s91
    %p100 = scmp.eq.s32.totalorder %s17, 0
    %p101 = por %p99, %p100
    %p102 = scmp.ne.s32.totalorder %s90, %s91
    %p103 = scmp.eq.s32.totalorder %s18, 1
    %p104 = por %p102, %p103
    %p106 = scmp.ne.s32.totalorder %s91, %s105
    %p107 = scmp.eq.s32.totalorder %s18, 0
    %p108 = por %p106, %p107
    %s109 = ssub.s32 %s12, %s19
    %p110 = scmp.eq.s32.totalorder %s109, 0
    %s112 = sadd.s32 %s111, 1
    %s113 = scalar_select %p110, %s111, %s112
    %p116 = pneg %p110
    %p117 = scmp.eq.s32.totalorder %s12, 1
    %p118 = por %p116, %p117
    %p119 = scmp.ne.s32.totalorder %s111, %s114
    %p120 = scmp.eq.s32.totalorder %s12, 0
    %p121 = por %p119, %p120
    %p122 = scmp.ne.s32.totalorder %s111, %s114
    %p123 = scmp.eq.s32.totalorder %s17, 1
    %p124 = por %p122, %p123
    %p125 = scmp.ne.s32.totalorder %s114, %s115
    %p126 = scmp.eq.s32.totalorder %s17, 0
    %p127 = por %p125, %p126
    %p128 = scmp.ne.s32.totalorder %s114, %s115
    %p129 = scmp.eq.s32.totalorder %s18, 1
    %p130 = por %p128, %p129
    %p132 = scmp.ne.s32.totalorder %s115, %s131
    %p133 = scmp.eq.s32.totalorder %s18, 0
    %p134 = por %p132, %p133
    %s135 = ssub.s32 %s12, %s19
    %p136 = scmp.eq.s32.totalorder %s135, 0
    %s138 = sadd.s32 %s137, 1
    %s139 = scalar_select %p136, %s137, %s138
    %p142 = pneg %p136
    %p143 = scmp.eq.s32.totalorder %s12, 1
    %p144 = por %p142, %p143
    %p145 = scmp.ne.s32.totalorder %s137, %s140
    %p146 = scmp.eq.s32.totalorder %s12, 0
    %p147 = por %p145, %p146
    %p148 = scmp.ne.s32.totalorder %s137, %s140
    %p149 = scmp.eq.s32.totalorder %s17, 1
    %p150 = por %p148, %p149
    %p151 = scmp.ne.s32.totalorder %s140, %s141
    %p152 = scmp.eq.s32.totalorder %s17, 0
    %p153 = por %p151, %p152
    %p154 = scmp.ne.s32.totalorder %s140, %s141
    %p155 = scmp.eq.s32.totalorder %s18, 1
    %p156 = por %p154, %p155
    %p158 = scmp.ne.s32.totalorder %s141, %s157
    %p159 = scmp.eq.s32.totalorder %s18, 0
    %p160 = por %p158, %p159
    %p161 = scmp.le.s32.totalorder 1, %s12
    %p162 = scmp.lt.s32.totalorder %s12, 3
    %p163 = pnand %p161, %p162
    %p164 = pneg %p163
    // Predicated region
    $region9: #{bottleneck_forward.5} parent=5 // pred_check
      _
    $region10: #{bottleneck_forward.5} parent=5 // pred_check_branch
      %166 = sbr.rel (%p163) target = $region12
    $region11: #{bottleneck_forward.5} parent=5 // pred_region
      %s167 = ssub.s32 %s12, 1
      // Predicated region
      $region13: #{bottleneck_forward.5} parent=11 // pred_check
        %p168 = pneg %p59
      $region14: #{bottleneck_forward.5} parent=11 // pred_check_branch
        %170 = sbr.rel (%p168) target = $region16
      $region15: #{bottleneck_forward.5} parent=11 // pred_region
        _
      $region16: #{bottleneck_forward.5} parent=11 // pred_fallthru
        _
      // Predicated region
      $region17: #{bottleneck_forward.5} parent=11 // pred_check
        %p171 = pneg %p80
      $region18: #{bottleneck_forward.5} parent=11 // pred_check_branch
        %173 = sbr.rel (%p171) target = $region20
      $region19: #{bottleneck_forward.5} parent=11 // pred_region
        _
      $region20: #{bottleneck_forward.5} parent=11 // pred_fallthru
        _
      // Predicated region
      $region21: #{bottleneck_forward.5} parent=11 // pred_check
        %p174 = pneg %p101
      $region22: #{bottleneck_forward.5} parent=11 // pred_check_branch
        %176 = sbr.rel (%p174) target = $region24
      $region23: #{bottleneck_forward.5} parent=11 // pred_region
        _
      $region24: #{bottleneck_forward.5} parent=11 // pred_fallthru
        _
    $region12: #{bottleneck_forward.5} parent=5 // pred_fallthru
      _
    %p177 = scmp.lt.s32.totalorder %s12, 2
    // Predicated region
    $region25: #{bottleneck_forward.5} parent=5 // pred_check
      %p178 = pneg %p177
    $region26: #{bottleneck_forward.5} parent=5 // pred_check_branch
      %180 = sbr.rel (%p178) target = $region28
    $region27: #{bottleneck_forward.5} parent=5 // pred_region
      // Predicated region
      $region29: #{bottleneck_forward.5} parent=27 // pred_check
        %p181 = pneg %p32
      $region30: #{bottleneck_forward.5} parent=27 // pred_check_branch
        %183 = sbr.rel (%p181) target = $region32
      $region31: #{bottleneck_forward.5} parent=27 // pred_region
        %p184 = scmp.lt.s32.totalorder %s12, 1
        %s185 = scalar_select %p184, %s12, 1
        %s186 = smul.addr %s185, 32
        %s187 = smul.addr %s186, 4
        %s188 = scalar_lea.vmem %s0, %s187
      $region32: #{bottleneck_forward.5} parent=27 // pred_fallthru
        _
    $region28: #{bottleneck_forward.5} parent=5 // pred_fallthru
      _
    %p189 = scmp.le.s32.totalorder 1, %s12
    %p190 = scmp.lt.s32.totalorder %s12, 3
    %p191 = pnand %p189, %p190
    %p192 = pneg %p191
    // Predicated region
    $region33: #{bottleneck_forward.5} parent=5 // pred_check
      _
    $region34: #{bottleneck_forward.5} parent=5 // pred_check_branch
      %194 = sbr.rel (%p191) target = $region36
    $region35: #{bottleneck_forward.5} parent=5 // pred_region
      %s195 = ssub.s32 %s12, 1
      %p196 = scmp.lt.s32.totalorder %s17, 1
      %s197 = scalar_select %p196, %s17, 1
      %s198 = smul.addr %s197, 32
      %s199 = smul.addr %s198, 4
      %s200 = scalar_lea.vmem %s0, %s199
      %p201 = pneg %p38
      %p202 = pneg %p35
      %p203 = pneg %p59
      %p204 = pneg %p56
      %p205 = pneg %p80
      %p206 = pneg %p77
      %p207 = pneg %p101
      %p208 = pneg %p98
      %p209 = pneg %p127
      %p210 = pneg %p124
      %p211 = scmp.lt.s32.totalorder %s17, 1
      %s212 = scalar_select %p211, %s17, 1
      %s213 = smul.addr %s212, 32
      %s214 = smul.addr %s213, 4
      %s215 = scalar_lea.vmem %s4, %s214
      %p216 = pneg %p153
      %p217 = pneg %p150
      %p218 = scmp.lt.s32.totalorder %s17, 1
      %s219 = scalar_select %p218, %s17, 1
      %s220 = smul.addr %s219, 2
      %s221 = scalar_lea.vmem %s5, %s220
      %p222 = scmp.lt.s32.totalorder %s17, 1
      %s223 = scalar_select %p222, %s17, 1
      %s224 = smul.addr %s223, 32
      %s225 = smul.addr %s224, 4
      %s226 = scalar_lea.vmem %s0, %s225
      %p227 = scmp.lt.s32.totalorder %s17, 1
      %s228 = scalar_select %p227, %s17, 1
      %s229 = smul.addr %s228, 32
      %s230 = smul.addr %s229, 4
      %s231 = scalar_lea.vmem %s4, %s230
      %p232 = scmp.lt.s32.totalorder %s17, 1
      %s233 = scalar_select %p232, %s17, 1
      %s234 = smul.addr %s233, 2
      %s235 = scalar_lea.vmem %s5, %s234
      %v237 = vld [vmem:[%s226] sm:$0xf]
      %v238 = vld [vmem:[%s226 + $0x4] sm:$0xf]
      %v239 = vld [vmem:[%s226 + $0x8] sm:$0xf]
      %v240 = vld [vmem:[%s226 + $0xc] sm:$0xf]
      %v241 = vld [vmem:[%s226 + $0x10] sm:$0xf]
      %v242 = vld [vmem:[%s226 + $0x14] sm:$0xf]
      %v243 = vld [vmem:[%s226 + $0x18] sm:$0xf]
      %v244 = vld [vmem:[%s226 + $0x1c] sm:$0xf]
      %v245 = vld [vmem:[%s226 + $0x20] sm:$0xf]
      %v246 = vld [vmem:[%s226 + $0x24] sm:$0xf]
      %v247 = vld [vmem:[%s226 + $0x28] sm:$0xf]
      %v248 = vld [vmem:[%s226 + $0x2c] sm:$0xf]
      %v249 = vld [vmem:[%s226 + $0x30] sm:$0xf]
      %v250 = vld [vmem:[%s226 + $0x34] sm:$0xf]
      %v251 = vld [vmem:[%s226 + $0x38] sm:$0xf]
      %v252 = vld [vmem:[%s226 + $0x3c] sm:$0xf]
      %v253 = vld [vmem:[%s226 + $0x40] sm:$0xf]
      %v254 = vld [vmem:[%s226 + $0x44] sm:$0xf]
      %v255 = vld [vmem:[%s226 + $0x48] sm:$0xf]
      %v256 = vld [vmem:[%s226 + $0x4c] sm:$0xf]
      %v257 = vld [vmem:[%s226 + $0x50] sm:$0xf]
      %v258 = vld [vmem:[%s226 + $0x54] sm:$0xf]
      %v259 = vld [vmem:[%s226 + $0x58] sm:$0xf]
      %v260 = vld [vmem:[%s226 + $0x5c] sm:$0xf]
      %v261 = vld [vmem:[%s226 + $0x60] sm:$0xf]
      %v262 = vld [vmem:[%s226 + $0x64] sm:$0xf]
      %v263 = vld [vmem:[%s226 + $0x68] sm:$0xf]
      %v264 = vld [vmem:[%s226 + $0x6c] sm:$0xf]
      %v265 = vld [vmem:[%s226 + $0x70] sm:$0xf]
      %v266 = vld [vmem:[%s226 + $0x74] sm:$0xf]
      %v267 = vld [vmem:[%s226 + $0x78] sm:$0xf]
      %v268 = vld [vmem:[%s226 + $0x7c] sm:$0xf]
      %v269 = vunpack.c.l.bf16 %v237
      %v270 = vunpack.c.l.bf16 %v238
      %v271 = vunpack.c.l.bf16 %v239
      %v272 = vunpack.c.l.bf16 %v240
      %v273 = vunpack.c.l.bf16 %v241
      %v274 = vunpack.c.l.bf16 %v242
      %v275 = vunpack.c.l.bf16 %v243
      %v276 = vunpack.c.l.bf16 %v244
      %v277 = vunpack.c.l.bf16 %v245
      %v278 = vunpack.c.l.bf16 %v246
      %v279 = vunpack.c.l.bf16 %v247
      %v280 = vunpack.c.l.bf16 %v248
      %v281 = vunpack.c.l.bf16 %v249
      %v282 = vunpack.c.l.bf16 %v250
      %v283 = vunpack.c.l.bf16 %v251
      %v284 = vunpack.c.l.bf16 %v252
      %v285 = vunpack.c.l.bf16 %v253
      %v286 = vunpack.c.l.bf16 %v254
      %v287 = vunpack.c.l.bf16 %v255
      %v288 = vunpack.c.l.bf16 %v256
      %v289 = vunpack.c.l.bf16 %v257
      %v290 = vunpack.c.l.bf16 %v258
      %v291 = vunpack.c.l.bf16 %v259
      %v292 = vunpack.c.l.bf16 %v260
      %v293 = vunpack.c.l.bf16 %v261
      %v294 = vunpack.c.l.bf16 %v262
      %v295 = vunpack.c.l.bf16 %v263
      %v296 = vunpack.c.l.bf16 %v264
      %v297 = vunpack.c.l.bf16 %v265
      %v298 = vunpack.c.l.bf16 %v266
      %v299 = vunpack.c.l.bf16 %v267
      %v300 = vunpack.c.l.bf16 %v268
      %v301 = vld [vmem:[%s1] sm:$0x1]
      %v303 = vlaneseq
      %v304 = vshrl.u32 %v303, 7
      %v305 = vsub.s32 0, %v304
      %v306 = vrot.slane %v301, %v305
      %v308 = vmul.f32 %v269, %v306
      %v309 = vmul.f32 %v270, %v306
      %v310 = vmul.f32 %v271, %v306
      %v311 = vmul.f32 %v272, %v306
      %v312 = vmul.f32 %v273, %v306
      %v313 = vmul.f32 %v274, %v306
      %v314 = vmul.f32 %v275, %v306
      %v315 = vmul.f32 %v276, %v306
      %v316 = vmul.f32 %v277, %v306
      %v317 = vmul.f32 %v278, %v306
      %v318 = vmul.f32 %v279, %v306
      %v319 = vmul.f32 %v280, %v306
      %v320 = vmul.f32 %v281, %v306
      %v321 = vmul.f32 %v282, %v306
      %v322 = vmul.f32 %v283, %v306
      %v323 = vmul.f32 %v284, %v306
      %v324 = vmul.f32 %v285, %v306
      %v325 = vmul.f32 %v286, %v306
      %v326 = vmul.f32 %v287, %v306
      %v327 = vmul.f32 %v288, %v306
      %v328 = vmul.f32 %v289, %v306
      %v329 = vmul.f32 %v290, %v306
      %v330 = vmul.f32 %v291, %v306
      %v331 = vmul.f32 %v292, %v306
      %v332 = vmul.f32 %v293, %v306
      %v333 = vmul.f32 %v294, %v306
      %v334 = vmul.f32 %v295, %v306
      %v335 = vmul.f32 %v296, %v306
      %v336 = vmul.f32 %v297, %v306
      %v337 = vmul.f32 %v298, %v306
      %v338 = vmul.f32 %v299, %v306
      %v339 = vmul.f32 %v300, %v306
      %v340 = vld [vmem:[%s2] sm:$0x1]
      %v342 = vlaneseq
      %v343 = vshrl.u32 %v342, 7
      %v344 = vsub.s32 0, %v343
      %v345 = vrot.slane %v340, %v344
      %v347 = vadd.f32 %v308, %v345
      %v348 = vadd.f32 %v309, %v345
      %v349 = vadd.f32 %v310, %v345
      %v350 = vadd.f32 %v311, %v345
      %v351 = vadd.f32 %v312, %v345
      %v352 = vadd.f32 %v313, %v345
      %v353 = vadd.f32 %v314, %v345
      %v354 = vadd.f32 %v315, %v345
      %v355 = vadd.f32 %v316, %v345
      %v356 = vadd.f32 %v317, %v345
      %v357 = vadd.f32 %v318, %v345
      %v358 = vadd.f32 %v319, %v345
      %v359 = vadd.f32 %v320, %v345
      %v360 = vadd.f32 %v321, %v345
      %v361 = vadd.f32 %v322, %v345
      %v362 = vadd.f32 %v323, %v345
      %v363 = vadd.f32 %v324, %v345
      %v364 = vadd.f32 %v325, %v345
      %v365 = vadd.f32 %v326, %v345
      %v366 = vadd.f32 %v327, %v345
      %v367 = vadd.f32 %v328, %v345
      %v368 = vadd.f32 %v329, %v345
      %v369 = vadd.f32 %v330, %v345
      %v370 = vadd.f32 %v331, %v345
      %v371 = vadd.f32 %v332, %v345
      %v372 = vadd.f32 %v333, %v345
      %v373 = vadd.f32 %v334, %v345
      %v374 = vadd.f32 %v335, %v345
      %v375 = vadd.f32 %v336, %v345
      %v376 = vadd.f32 %v337, %v345
      %v377 = vadd.f32 %v338, %v345
      %v378 = vadd.f32 %v339, %v345
      %v379 = vmax.f32 %v347, 0.0
      %v380 = vmax.f32 %v348, 0.0
      %v381 = vmax.f32 %v349, 0.0
      %v382 = vmax.f32 %v350, 0.0
      %v383 = vmax.f32 %v351, 0.0
      %v384 = vmax.f32 %v352, 0.0
      %v385 = vmax.f32 %v353, 0.0
      %v386 = vmax.f32 %v354, 0.0
      %v387 = vmax.f32 %v355, 0.0
      %v388 = vmax.f32 %v356, 0.0
      %v389 = vmax.f32 %v357, 0.0
      %v390 = vmax.f32 %v358, 0.0
      %v391 = vmax.f32 %v359, 0.0
      %v392 = vmax.f32 %v360, 0.0
      %v393 = vmax.f32 %v361, 0.0
      %v394 = vmax.f32 %v362, 0.0
      %v395 = vmax.f32 %v363, 0.0
      %v396 = vmax.f32 %v364, 0.0
      %v397 = vmax.f32 %v365, 0.0
      %v398 = vmax.f32 %v366, 0.0
      %v399 = vmax.f32 %v367, 0.0
      %v400 = vmax.f32 %v368, 0.0
      %v401 = vmax.f32 %v369, 0.0
      %v402 = vmax.f32 %v370, 0.0
      %v403 = vmax.f32 %v371, 0.0
      %v404 = vmax.f32 %v372, 0.0
      %v405 = vmax.f32 %v373, 0.0
      %v406 = vmax.f32 %v374, 0.0
      %v407 = vmax.f32 %v375, 0.0
      %v408 = vmax.f32 %v376, 0.0
      %v409 = vmax.f32 %v377, 0.0
      %v410 = vmax.f32 %v378, 0.0
      %v411 = vpack.c.bf16 %v380, %v379
      %v412 = vpack.c.bf16 %v382, %v381
      %v413 = vpack.c.bf16 %v384, %v383
      %v414 = vpack.c.bf16 %v386, %v385
      %v415 = vpack.c.bf16 %v388, %v387
      %v416 = vpack.c.bf16 %v390, %v389
      %v417 = vpack.c.bf16 %v392, %v391
      %v418 = vpack.c.bf16 %v394, %v393
      %v419 = vpack.c.bf16 %v396, %v395
      %v420 = vpack.c.bf16 %v398, %v397
      %v421 = vpack.c.bf16 %v400, %v399
      %v422 = vpack.c.bf16 %v402, %v401
      %v423 = vpack.c.bf16 %v404, %v403
      %v424 = vpack.c.bf16 %v406, %v405
      %v425 = vpack.c.bf16 %v408, %v407
      %v426 = vpack.c.bf16 %v410, %v409
      %427 = vst [vmem:[#allocation2] sm:$0xff] 0
      %428 = vst [vmem:[#allocation2 + $0x8] sm:$0xff] 0
      %429 = vst [vmem:[#allocation2 + $0x10] sm:$0xff] 0
      %s430 = scalar_lea.vmem [#allocation2], 408
      %431 = vst [vmem:[%s430] sm:$0xff] 0
      %432 = vst [vmem:[%s430 + $0x8] sm:$0xff] 0
      %433 = vst [vmem:[%s430 + $0x10] sm:$0xff] 0
      %s434 = scalar_lea.vmem [#allocation2], 24
      %vm435 = vcmask 1040384
      %vm436 = vsmask.f32 256
      %vm437 = vmand %vm435, %vm436
      %v438 = vld [vmem:[%s434] sm:$0x1]
      %v439 = vsel %vm437, 0, %v438
      %440 = vst [vmem:[%s434] sm:$0x1] %v439
      %v441 = vld [vmem:[%s434 + $0x18] sm:$0x1]
      %v442 = vsel %vm437, 0, %v441
      %443 = vst [vmem:[%s434 + $0x18] sm:$0x1] %v442
      %v444 = vld [vmem:[%s434 + $0x30] sm:$0x1]
      %v445 = vsel %vm437, 0, %v444
      %446 = vst [vmem:[%s434 + $0x30] sm:$0x1] %v445
      %v447 = vld [vmem:[%s434 + $0x48] sm:$0x1]
      %v448 = vsel %vm437, 0, %v447
      %449 = vst [vmem:[%s434 + $0x48] sm:$0x1] %v448
      %v450 = vld [vmem:[%s434 + $0x60] sm:$0x1]
      %v451 = vsel %vm437, 0, %v450
      %452 = vst [vmem:[%s434 + $0x60] sm:$0x1] %v451
      %v453 = vld [vmem:[%s434 + $0x78] sm:$0x1]
      %v454 = vsel %vm437, 0, %v453
      %455 = vst [vmem:[%s434 + $0x78] sm:$0x1] %v454
      %v456 = vld [vmem:[%s434 + $0x90] sm:$0x1]
      %v457 = vsel %vm437, 0, %v456
      %458 = vst [vmem:[%s434 + $0x90] sm:$0x1] %v457
      %v459 = vld [vmem:[%s434 + $0xa8] sm:$0x1]
      %v460 = vsel %vm437, 0, %v459
      %461 = vst [vmem:[%s434 + $0xa8] sm:$0x1] %v460
      %v462 = vld [vmem:[%s434 + $0xc0] sm:$0x1]
      %v463 = vsel %vm437, 0, %v462
      %464 = vst [vmem:[%s434 + $0xc0] sm:$0x1] %v463
      %v465 = vld [vmem:[%s434 + $0xd8] sm:$0x1]
      %v466 = vsel %vm437, 0, %v465
      %467 = vst [vmem:[%s434 + $0xd8] sm:$0x1] %v466
      %v468 = vld [vmem:[%s434 + $0xf0] sm:$0x1]
      %v469 = vsel %vm437, 0, %v468
      %470 = vst [vmem:[%s434 + $0xf0] sm:$0x1] %v469
      %v471 = vld [vmem:[%s434 + $0x108] sm:$0x1]
      %v472 = vsel %vm437, 0, %v471
      %473 = vst [vmem:[%s434 + $0x108] sm:$0x1] %v472
      %v474 = vld [vmem:[%s434 + $0x120] sm:$0x1]
      %v475 = vsel %vm437, 0, %v474
      %476 = vst [vmem:[%s434 + $0x120] sm:$0x1] %v475
      %v477 = vld [vmem:[%s434 + $0x138] sm:$0x1]
      %v478 = vsel %vm437, 0, %v477
      %479 = vst [vmem:[%s434 + $0x138] sm:$0x1] %v478
      %v480 = vld [vmem:[%s434 + $0x150] sm:$0x1]
      %v481 = vsel %vm437, 0, %v480
      %482 = vst [vmem:[%s434 + $0x150] sm:$0x1] %v481
      %v483 = vld [vmem:[%s434 + $0x168] sm:$0x1]
      %v484 = vsel %vm437, 0, %v483
      %485 = vst [vmem:[%s434 + $0x168] sm:$0x1] %v484
      %vm486 = vcmask 1047559
      %vm487 = vsmask.f32 7966
      %vm488 = vmand %vm486, %vm487
      %v489 = vld [vmem:[%s434 + $0x10] sm:$0x80]
      %v490 = vsel %vm488, 0, %v489
      %491 = vst [vmem:[%s434 + $0x10] sm:$0x80] %v490
      %v492 = vld [vmem:[%s434 + $0x28] sm:$0x80]
      %v493 = vsel %vm488, 0, %v492
      %494 = vst [vmem:[%s434 + $0x28] sm:$0x80] %v493
      %v495 = vld [vmem:[%s434 + $0x40] sm:$0x80]
      %v496 = vsel %vm488, 0, %v495
      %497 = vst [vmem:[%s434 + $0x40] sm:$0x80] %v496
      %v498 = vld [vmem:[%s434 + $0x58] sm:$0x80]
      %v499 = vsel %vm488, 0, %v498
      %500 = vst [vmem:[%s434 + $0x58] sm:$0x80] %v499
      %v501 = vld [vmem:[%s434 + $0x70] sm:$0x80]
      %v502 = vsel %vm488, 0, %v501
      %503 = vst [vmem:[%s434 + $0x70] sm:$0x80] %v502
      %v504 = vld [vmem:[%s434 + $0x88] sm:$0x80]
      %v505 = vsel %vm488, 0, %v504
      %506 = vst [vmem:[%s434 + $0x88] sm:$0x80] %v505
      %v507 = vld [vmem:[%s434 + $0xa0] sm:$0x80]
      %v508 = vsel %vm488, 0, %v507
      %509 = vst [vmem:[%s434 + $0xa0] sm:$0x80] %v508
      %v510 = vld [vmem:[%s434 + $0xb8] sm:$0x80]
      %v511 = vsel %vm488, 0, %v510
      %512 = vst [vmem:[%s434 + $0xb8] sm:$0x80] %v511
      %v513 = vld [vmem:[%s434 + $0xd0] sm:$0x80]
      %v514 = vsel %vm488, 0, %v513
      %515 = vst [vmem:[%s434 + $0xd0] sm:$0x80] %v514
      %v516 = vld [vmem:[%s434 + $0xe8] sm:$0x80]
      %v517 = vsel %vm488, 0, %v516
      %518 = vst [vmem:[%s434 + $0xe8] sm:$0x80] %v517
      %v519 = vld [vmem:[%s434 + $0x100] sm:$0x80]
      %v520 = vsel %vm488, 0, %v519
      %521 = vst [vmem:[%s434 + $0x100] sm:$0x80] %v520
      %v522 = vld [vmem:[%s434 + $0x118] sm:$0x80]
      %v523 = vsel %vm488, 0, %v522
      %524 = vst [vmem:[%s434 + $0x118] sm:$0x80] %v523
      %v525 = vld [vmem:[%s434 + $0x130] sm:$0x80]
      %v526 = vsel %vm488, 0, %v525
      %527 = vst [vmem:[%s434 + $0x130] sm:$0x80] %v526
      %v528 = vld [vmem:[%s434 + $0x148] sm:$0x80]
      %v529 = vsel %vm488, 0, %v528
      %530 = vst [vmem:[%s434 + $0x148] sm:$0x80] %v529
      %v531 = vld [vmem:[%s434 + $0x160] sm:$0x80]
      %v532 = vsel %vm488, 0, %v531
      %533 = vst [vmem:[%s434 + $0x160] sm:$0x80] %v532
      %v534 = vld [vmem:[%s434 + $0x178] sm:$0x80]
      %v535 = vsel %vm488, 0, %v534
      %536 = vst [vmem:[%s434 + $0x178] sm:$0x80] %v535
      %v538 = vshrl.u32 %v411, 16
      %v540 = vrot.slane %v538, 7
      %v541 = vshll.u32 %v411, 16
      %v543 = vor.u32 %v540, %v541
      %v545 = vshrl.u32 %v412, 16
      %v547 = vrot.slane %v545, 7
      %v548 = vshll.u32 %v412, 16
      %v550 = vor.u32 %v547, %v548
      %v552 = vshrl.u32 %v413, 16
      %v554 = vrot.slane %v552, 7
      %v555 = vshll.u32 %v413, 16
      %v557 = vor.u32 %v554, %v555
      %v559 = vshrl.u32 %v414, 16
      %v561 = vrot.slane %v559, 7
      %v562 = vshll.u32 %v414, 16
      %v564 = vor.u32 %v561, %v562
      %v566 = vshrl.u32 %v415, 16
      %v568 = vrot.slane %v566, 7
      %v569 = vshll.u32 %v415, 16
      %v571 = vor.u32 %v568, %v569
      %v573 = vshrl.u32 %v416, 16
      %v575 = vrot.slane %v573, 7
      %v576 = vshll.u32 %v416, 16
      %v578 = vor.u32 %v575, %v576
      %v580 = vshrl.u32 %v417, 16
      %v582 = vrot.slane %v580, 7
      %v583 = vshll.u32 %v417, 16
      %v585 = vor.u32 %v582, %v583
      %v587 = vshrl.u32 %v418, 16
      %v589 = vrot.slane %v587, 7
      %v590 = vshll.u32 %v418, 16
      %v592 = vor.u32 %v589, %v590
      %v594 = vshrl.u32 %v419, 16
      %v596 = vrot.slane %v594, 7
      %v597 = vshll.u32 %v419, 16
      %v599 = vor.u32 %v596, %v597
      %v601 = vshrl.u32 %v420, 16
      %v603 = vrot.slane %v601, 7
      %v604 = vshll.u32 %v420, 16
      %v606 = vor.u32 %v603, %v604
      %v608 = vshrl.u32 %v421, 16
      %v610 = vrot.slane %v608, 7
      %v611 = vshll.u32 %v421, 16
      %v613 = vor.u32 %v610, %v611
      %v615 = vshrl.u32 %v422, 16
      %v617 = vrot.slane %v615, 7
      %v618 = vshll.u32 %v422, 16
      %v620 = vor.u32 %v617, %v618
      %v622 = vshrl.u32 %v423, 16
      %v624 = vrot.slane %v622, 7
      %v625 = vshll.u32 %v423, 16
      %v627 = vor.u32 %v624, %v625
      %v629 = vshrl.u32 %v424, 16
      %v631 = vrot.slane %v629, 7
      %v632 = vshll.u32 %v424, 16
      %v634 = vor.u32 %v631, %v632
      %v636 = vshrl.u32 %v425, 16
      %v638 = vrot.slane %v636, 7
      %v639 = vshll.u32 %v425, 16
      %v641 = vor.u32 %v638, %v639
      %v643 = vshrl.u32 %v426, 16
      %v645 = vrot.slane %v643, 7
      %v646 = vshll.u32 %v426, 16
      %v648 = vor.u32 %v645, %v646
      %vm665 = vcmask 1047552
      %vm666 = vsmask.f32 7938
      %vm667 = vmand %vm665, %vm666
      %v668 = vld [vmem:[%s434] sm:$0xff]
      %v669 = vsel %vm667, %v543, %v668
      %670 = vst [vmem:[%s434] sm:$0xff] %v669
      %v671 = vld [vmem:[%s434 + $0x18] sm:$0xff]
      %v672 = vsel %vm667, %v550, %v671
      %673 = vst [vmem:[%s434 + $0x18] sm:$0xff] %v672
      %v674 = vld [vmem:[%s434 + $0x30] sm:$0xff]
      %v675 = vsel %vm667, %v557, %v674
      %676 = vst [vmem:[%s434 + $0x30] sm:$0xff] %v675
      %v677 = vld [vmem:[%s434 + $0x48] sm:$0xff]
      %v678 = vsel %vm667, %v564, %v677
      %679 = vst [vmem:[%s434 + $0x48] sm:$0xff] %v678
      %v680 = vld [vmem:[%s434 + $0x60] sm:$0xff]
      %v681 = vsel %vm667, %v571, %v680
      %682 = vst [vmem:[%s434 + $0x60] sm:$0xff] %v681
      %v683 = vld [vmem:[%s434 + $0x78] sm:$0xff]
      %v684 = vsel %vm667, %v578, %v683
      %685 = vst [vmem:[%s434 + $0x78] sm:$0xff] %v684
      %v686 = vld [vmem:[%s434 + $0x90] sm:$0xff]
      %v687 = vsel %vm667, %v585, %v686
      %688 = vst [vmem:[%s434 + $0x90] sm:$0xff] %v687
      %v689 = vld [vmem:[%s434 + $0xa8] sm:$0xff]
      %v690 = vsel %vm667, %v592, %v689
      %691 = vst [vmem:[%s434 + $0xa8] sm:$0xff] %v690
      %v692 = vld [vmem:[%s434 + $0xc0] sm:$0xff]
      %v693 = vsel %vm667, %v599, %v692
      %694 = vst [vmem:[%s434 + $0xc0] sm:$0xff] %v693
      %v695 = vld [vmem:[%s434 + $0xd8] sm:$0xff]
      %v696 = vsel %vm667, %v606, %v695
      %697 = vst [vmem:[%s434 + $0xd8] sm:$0xff] %v696
      %v698 = vld [vmem:[%s434 + $0xf0] sm:$0xff]
      %v699 = vsel %vm667, %v613, %v698
      %700 = vst [vmem:[%s434 + $0xf0] sm:$0xff] %v699
      %v701 = vld [vmem:[%s434 + $0x108] sm:$0xff]
      %v702 = vsel %vm667, %v620, %v701
      %703 = vst [vmem:[%s434 + $0x108] sm:$0xff] %v702
      %v704 = vld [vmem:[%s434 + $0x120] sm:$0xff]
      %v705 = vsel %vm667, %v627, %v704
      %706 = vst [vmem:[%s434 + $0x120] sm:$0xff] %v705
      %v707 = vld [vmem:[%s434 + $0x138] sm:$0xff]
      %v708 = vsel %vm667, %v634, %v707
      %709 = vst [vmem:[%s434 + $0x138] sm:$0xff] %v708
      %v710 = vld [vmem:[%s434 + $0x150] sm:$0xff]
      %v711 = vsel %vm667, %v641, %v710
      %712 = vst [vmem:[%s434 + $0x150] sm:$0xff] %v711
      %v713 = vld [vmem:[%s434 + $0x168] sm:$0xff]
      %v714 = vsel %vm667, %v648, %v713
      %715 = vst [vmem:[%s434 + $0x168] sm:$0xff] %v714
      %716 = vst [vmem:[%s434 + $0x8] sm:$0xff] %v411
      %717 = vst [vmem:[%s434 + $0x20] sm:$0xff] %v412
      %718 = vst [vmem:[%s434 + $0x38] sm:$0xff] %v413
      %719 = vst [vmem:[%s434 + $0x50] sm:$0xff] %v414
      %720 = vst [vmem:[%s434 + $0x68] sm:$0xff] %v415
      %721 = vst [vmem:[%s434 + $0x80] sm:$0xff] %v416
      %722 = vst [vmem:[%s434 + $0x98] sm:$0xff] %v417
      %723 = vst [vmem:[%s434 + $0xb0] sm:$0xff] %v418
      %724 = vst [vmem:[%s434 + $0xc8] sm:$0xff] %v419
      %725 = vst [vmem:[%s434 + $0xe0] sm:$0xff] %v420
      %726 = vst [vmem:[%s434 + $0xf8] sm:$0xff] %v421
      %727 = vst [vmem:[%s434 + $0x110] sm:$0xff] %v422
      %728 = vst [vmem:[%s434 + $0x128] sm:$0xff] %v423
      %729 = vst [vmem:[%s434 + $0x140] sm:$0xff] %v424
      %730 = vst [vmem:[%s434 + $0x158] sm:$0xff] %v425
      %731 = vst [vmem:[%s434 + $0x170] sm:$0xff] %v426
      %v732 = vrot.slane %v541, 1
      %v733 = vor.u32 %v538, %v732
      %v734 = vrot.slane %v548, 1
      %v735 = vor.u32 %v545, %v734
      %v736 = vrot.slane %v555, 1
      %v737 = vor.u32 %v552, %v736
      %v738 = vrot.slane %v562, 1
      %v739 = vor.u32 %v559, %v738
      %v740 = vrot.slane %v569, 1
      %v741 = vor.u32 %v566, %v740
      %v742 = vrot.slane %v576, 1
      %v743 = vor.u32 %v573, %v742
      %v744 = vrot.slane %v583, 1
      %v745 = vor.u32 %v580, %v744
      %v746 = vrot.slane %v590, 1
      %v747 = vor.u32 %v587, %v746
      %v748 = vrot.slane %v597, 1
      %v749 = vor.u32 %v594, %v748
      %v750 = vrot.slane %v604, 1
      %v751 = vor.u32 %v601, %v750
      %v752 = vrot.slane %v611, 1
      %v753 = vor.u32 %v608, %v752
      %v754 = vrot.slane %v618, 1
      %v755 = vor.u32 %v615, %v754
      %v756 = vrot.slane %v625, 1
      %v757 = vor.u32 %v622, %v756
      %v758 = vrot.slane %v632, 1
      %v759 = vor.u32 %v629, %v758
      %v760 = vrot.slane %v639, 1
      %v761 = vor.u32 %v636, %v760
      %v762 = vrot.slane %v646, 1
      %v763 = vor.u32 %v643, %v762
      %vm780 = vsmask.f32 7424
      %vm781 = vmand %vm665, %vm780
      %v782 = vld [vmem:[%s434 + $0x10] sm:$0xff]
      %v783 = vsel %vm781, %v733, %v782
      %784 = vst [vmem:[%s434 + $0x10] sm:$0xff] %v783
      %v785 = vld [vmem:[%s434 + $0x28] sm:$0xff]
      %v786 = vsel %vm781, %v735, %v785
      %787 = vst [vmem:[%s434 + $0x28] sm:$0xff] %v786
      %v788 = vld [vmem:[%s434 + $0x40] sm:$0xff]
      %v789 = vsel %vm781, %v737, %v788
      %790 = vst [vmem:[%s434 + $0x40] sm:$0xff] %v789
      %v791 = vld [vmem:[%s434 + $0x58] sm:$0xff]
      %v792 = vsel %vm781, %v739, %v791
      %793 = vst [vmem:[%s434 + $0x58] sm:$0xff] %v792
      %v794 = vld [vmem:[%s434 + $0x70] sm:$0xff]
      %v795 = vsel %vm781, %v741, %v794
      %796 = vst [vmem:[%s434 + $0x70] sm:$0xff] %v795
      %v797 = vld [vmem:[%s434 + $0x88] sm:$0xff]
      %v798 = vsel %vm781, %v743, %v797
      %799 = vst [vmem:[%s434 + $0x88] sm:$0xff] %v798
      %v800 = vld [vmem:[%s434 + $0xa0] sm:$0xff]
      %v801 = vsel %vm781, %v745, %v800
      %802 = vst [vmem:[%s434 + $0xa0] sm:$0xff] %v801
      %v803 = vld [vmem:[%s434 + $0xb8] sm:$0xff]
      %v804 = vsel %vm781, %v747, %v803
      %805 = vst [vmem:[%s434 + $0xb8] sm:$0xff] %v804
      %v806 = vld [vmem:[%s434 + $0xd0] sm:$0xff]
      %v807 = vsel %vm781, %v749, %v806
      %808 = vst [vmem:[%s434 + $0xd0] sm:$0xff] %v807
      %v809 = vld [vmem:[%s434 + $0xe8] sm:$0xff]
      %v810 = vsel %vm781, %v751, %v809
      %811 = vst [vmem:[%s434 + $0xe8] sm:$0xff] %v810
      %v812 = vld [vmem:[%s434 + $0x100] sm:$0xff]
      %v813 = vsel %vm781, %v753, %v812
      %814 = vst [vmem:[%s434 + $0x100] sm:$0xff] %v813
      %v815 = vld [vmem:[%s434 + $0x118] sm:$0xff]
      %v816 = vsel %vm781, %v755, %v815
      %817 = vst [vmem:[%s434 + $0x118] sm:$0xff] %v816
      %v818 = vld [vmem:[%s434 + $0x130] sm:$0xff]
      %v819 = vsel %vm781, %v757, %v818
      %820 = vst [vmem:[%s434 + $0x130] sm:$0xff] %v819
      %v821 = vld [vmem:[%s434 + $0x148] sm:$0xff]
      %v822 = vsel %vm781, %v759, %v821
      %823 = vst [vmem:[%s434 + $0x148] sm:$0xff] %v822
      %v824 = vld [vmem:[%s434 + $0x160] sm:$0xff]
      %v825 = vsel %vm781, %v761, %v824
      %826 = vst [vmem:[%s434 + $0x160] sm:$0xff] %v825
      %v827 = vld [vmem:[%s434 + $0x178] sm:$0xff]
      %v828 = vsel %vm781, %v763, %v827
      %829 = vst [vmem:[%s434 + $0x178] sm:$0xff] %v828
      %v830 = vld [vmem:[#allocation2] sm:$0xff]
      %v831 = vld [vmem:[#allocation2 + $0x8] sm:$0xff]
      %v832 = vld [vmem:[#allocation2 + $0x10] sm:$0xff]
      %v833 = vld [vmem:[#allocation2 + $0x18] sm:$0xff]
      %v834 = vld [vmem:[#allocation2 + $0x20] sm:$0xff]
      %v835 = vld [vmem:[#allocation2 + $0x28] sm:$0xff]
      %v836 = vld [vmem:[#allocation2 + $0x30] sm:$0xff]
      %v837 = vld [vmem:[#allocation2 + $0x38] sm:$0xff]
      %v838 = vld [vmem:[#allocation2 + $0x40] sm:$0xff]
      %v839 = vld [vmem:[#allocation2 + $0x48] sm:$0xff]
      %v840 = vld [vmem:[#allocation2 + $0x50] sm:$0xff]
      %v841 = vld [vmem:[#allocation2 + $0x58] sm:$0xff]
      %v842 = vld [vmem:[#allocation2 + $0x60] sm:$0xff]
      %v843 = vld [vmem:[#allocation2 + $0x68] sm:$0xff]
      %v844 = vld [vmem:[#allocation2 + $0x70] sm:$0xff]
      %v845 = vld [vmem:[#allocation2 + $0x78] sm:$0xff]
      %v846 = vld [vmem:[#allocation2 + $0x80] sm:$0xff]
      %v847 = vld [vmem:[#allocation2 + $0x88] sm:$0xff]
      %v848 = vld [vmem:[#allocation2 + $0x90] sm:$0xff]
      %v849 = vld [vmem:[#allocation2 + $0x98] sm:$0xff]
      %v850 = vld [vmem:[#allocation2 + $0xa0] sm:$0xff]
      %v851 = vld [vmem:[#allocation2 + $0xa8] sm:$0xff]
      %v852 = vld [vmem:[#allocation2 + $0xb0] sm:$0xff]
      %v853 = vld [vmem:[#allocation2 + $0xb8] sm:$0xff]
      %v854 = vld [vmem:[#allocation2 + $0xc0] sm:$0xff]
      %v855 = vld [vmem:[#allocation2 + $0xc8] sm:$0xff]
      %v856 = vld [vmem:[#allocation2 + $0xd0] sm:$0xff]
      %v857 = vld [vmem:[#allocation2 + $0xd8] sm:$0xff]
      %v858 = vld [vmem:[#allocation2 + $0xe0] sm:$0xff]
      %v859 = vld [vmem:[#allocation2 + $0xe8] sm:$0xff]
      %v860 = vld [vmem:[#allocation2 + $0xf0] sm:$0xff]
      %v861 = vld [vmem:[#allocation2 + $0xf8] sm:$0xff]
      %v862 = vld [vmem:[#allocation2 + $0x100] sm:$0xff]
      %v863 = vld [vmem:[#allocation2 + $0x108] sm:$0xff]
      %v864 = vld [vmem:[#allocation2 + $0x110] sm:$0xff]
      %v865 = vld [vmem:[#allocation2 + $0x118] sm:$0xff]
      %v866 = vld [vmem:[#allocation2 + $0x120] sm:$0xff]
      %v867 = vld [vmem:[#allocation2 + $0x128] sm:$0xff]
      %v868 = vld [vmem:[#allocation2 + $0x130] sm:$0xff]
      %v869 = vld [vmem:[#allocation2 + $0x138] sm:$0xff]
      %v870 = vld [vmem:[#allocation2 + $0x140] sm:$0xff]
      %v871 = vld [vmem:[#allocation2 + $0x148] sm:$0xff]
      %v872 = vld [vmem:[#allocation2 + $0x150] sm:$0xff]
      %v873 = vld [vmem:[#allocation2 + $0x158] sm:$0xff]
      %v874 = vld [vmem:[#allocation2 + $0x160] sm:$0xff]
      %v875 = vld [vmem:[#allocation2 + $0x168] sm:$0xff]
      %v876 = vld [vmem:[#allocation2 + $0x170] sm:$0xff]
      %v877 = vld [vmem:[#allocation2 + $0x178] sm:$0xff]
      %v878 = vld [vmem:[%s3] sm:$0xf]
      %v879 = vld [vmem:[%s3 + $0x4] sm:$0xf]
      %v880 = vld [vmem:[%s3 + $0x8] sm:$0xf]
      %v881 = vld [vmem:[%s3 + $0xc] sm:$0xf]
      %v882 = vld [vmem:[%s3 + $0x10] sm:$0xf]
      %v883 = vld [vmem:[%s3 + $0x14] sm:$0xf]
      %v884 = vld [vmem:[%s3 + $0x18] sm:$0xf]
      %v885 = vld [vmem:[%s3 + $0x1c] sm:$0xf]
      %v886 = vld [vmem:[%s3 + $0x20] sm:$0xf]
      %v887 = vld [vmem:[%s3 + $0x24] sm:$0xf]
      %v888 = vld [vmem:[%s3 + $0x28] sm:$0xf]
      %v889 = vld [vmem:[%s3 + $0x2c] sm:$0xf]
      %v890 = vld [vmem:[%s3 + $0x30] sm:$0xf]
      %v891 = vld [vmem:[%s3 + $0x34] sm:$0xf]
      %v892 = vld [vmem:[%s3 + $0x38] sm:$0xf]
      %v893 = vld [vmem:[%s3 + $0x3c] sm:$0xf]
      %v894 = vld [vmem:[%s3 + $0x40] sm:$0xf]
      %v895 = vld [vmem:[%s3 + $0x44] sm:$0xf]
      %v896 = vld [vmem:[%s3 + $0x48] sm:$0xf]
      %v897 = vld [vmem:[%s3 + $0x4c] sm:$0xf]
      %v898 = vld [vmem:[%s3 + $0x50] sm:$0xf]
      %v899 = vld [vmem:[%s3 + $0x54] sm:$0xf]
      %v900 = vld [vmem:[%s3 + $0x58] sm:$0xf]
      %v901 = vld [vmem:[%s3 + $0x5c] sm:$0xf]
      %v902 = vld [vmem:[%s3 + $0x60] sm:$0xf]
      %v903 = vld [vmem:[%s3 + $0x64] sm:$0xf]
      %v904 = vld [vmem:[%s3 + $0x68] sm:$0xf]
      %v905 = vld [vmem:[%s3 + $0x6c] sm:$0xf]
      %v906 = vld [vmem:[%s3 + $0x70] sm:$0xf]
      %v907 = vld [vmem:[%s3 + $0x74] sm:$0xf]
      %v908 = vld [vmem:[%s3 + $0x78] sm:$0xf]
      %v909 = vld [vmem:[%s3 + $0x7c] sm:$0xf]
      %v910 = vld [vmem:[%s3 + $0x80] sm:$0xf]
      %v911 = vld [vmem:[%s3 + $0x84] sm:$0xf]
      %v912 = vld [vmem:[%s3 + $0x88] sm:$0xf]
      %v913 = vld [vmem:[%s3 + $0x8c] sm:$0xf]
      %v914 = vld [vmem:[%s3 + $0x90] sm:$0xf]
      %v915 = vld [vmem:[%s3 + $0x94] sm:$0xf]
      %v916 = vld [vmem:[%s3 + $0x98] sm:$0xf]
      %v917 = vld [vmem:[%s3 + $0x9c] sm:$0xf]
      %v918 = vld [vmem:[%s3 + $0xa0] sm:$0xf]
      %v919 = vld [vmem:[%s3 + $0xa4] sm:$0xf]
      %v920 = vld [vmem:[%s3 + $0xa8] sm:$0xf]
      %v921 = vld [vmem:[%s3 + $0xac] sm:$0xf]
      %v922 = vld [vmem:[%s3 + $0xb0] sm:$0xf]
      %v923 = vld [vmem:[%s3 + $0xb4] sm:$0xf]
      %v924 = vld [vmem:[%s3 + $0xb8] sm:$0xf]
      %v925 = vld [vmem:[%s3 + $0xbc] sm:$0xf]
      %v926 = vld [vmem:[%s434] sm:$0xff]
      %v927 = vld [vmem:[%s434 + $0x8] sm:$0xff]
      %v928 = vld [vmem:[%s434 + $0x10] sm:$0xff]
      %v929 = vld [vmem:[%s434 + $0x18] sm:$0xff]
      %v930 = vld [vmem:[%s434 + $0x20] sm:$0xff]
      %v931 = vld [vmem:[%s434 + $0x28] sm:$0xff]
      %v932 = vld [vmem:[%s434 + $0x30] sm:$0xff]
      %v933 = vld [vmem:[%s434 + $0x38] sm:$0xff]
      %v934 = vld [vmem:[%s434 + $0x40] sm:$0xff]
      %v935 = vld [vmem:[%s434 + $0x48] sm:$0xff]
      %v936 = vld [vmem:[%s434 + $0x50] sm:$0xff]
      %v937 = vld [vmem:[%s434 + $0x58] sm:$0xff]
      %v938 = vld [vmem:[%s434 + $0x60] sm:$0xff]
      %v939 = vld [vmem:[%s434 + $0x68] sm:$0xff]
      %v940 = vld [vmem:[%s434 + $0x70] sm:$0xff]
      %v941 = vld [vmem:[%s434 + $0x78] sm:$0xff]
      %v942 = vld [vmem:[%s434 + $0x80] sm:$0xff]
      %v943 = vld [vmem:[%s434 + $0x88] sm:$0xff]
      %v944 = vld [vmem:[%s434 + $0x90] sm:$0xff]
      %v945 = vld [vmem:[%s434 + $0x98] sm:$0xff]
      %v946 = vld [vmem:[%s434 + $0xa0] sm:$0xff]
      %v947 = vld [vmem:[%s434 + $0xa8] sm:$0xff]
      %v948 = vld [vmem:[%s434 + $0xb0] sm:$0xff]
      %v949 = vld [vmem:[%s434 + $0xb8] sm:$0xff]
      %v950 = vld [vmem:[%s434 + $0xc0] sm:$0xff]
      %v951 = vld [vmem:[%s434 + $0xc8] sm:$0xff]
      %v952 = vld [vmem:[%s434 + $0xd0] sm:$0xff]
      %v953 = vld [vmem:[%s434 + $0xd8] sm:$0xff]
      %v954 = vld [vmem:[%s434 + $0xe0] sm:$0xff]
      %v955 = vld [vmem:[%s434 + $0xe8] sm:$0xff]
      %v956 = vld [vmem:[%s434 + $0xf0] sm:$0xff]
      %v957 = vld [vmem:[%s434 + $0xf8] sm:$0xff]
      %v958 = vld [vmem:[%s434 + $0x100] sm:$0xff]
      %v959 = vld [vmem:[%s434 + $0x108] sm:$0xff]
      %v960 = vld [vmem:[%s434 + $0x110] sm:$0xff]
      %v961 = vld [vmem:[%s434 + $0x118] sm:$0xff]
      %v962 = vld [vmem:[%s434 + $0x120] sm:$0xff]
      %v963 = vld [vmem:[%s434 + $0x128] sm:$0xff]
      %v964 = vld [vmem:[%s434 + $0x130] sm:$0xff]
      %v965 = vld [vmem:[%s434 + $0x138] sm:$0xff]
      %v966 = vld [vmem:[%s434 + $0x140] sm:$0xff]
      %v967 = vld [vmem:[%s434 + $0x148] sm:$0xff]
      %v968 = vld [vmem:[%s434 + $0x150] sm:$0xff]
      %v969 = vld [vmem:[%s434 + $0x158] sm:$0xff]
      %v970 = vld [vmem:[%s434 + $0x160] sm:$0xff]
      %v971 = vld [vmem:[%s434 + $0x168] sm:$0xff]
      %v972 = vld [vmem:[%s434 + $0x170] sm:$0xff]
      %v973 = vld [vmem:[%s434 + $0x178] sm:$0xff]
      %s974 = scalar_lea.vmem %s3, 192
      %v975 = vld [vmem:[%s974] sm:$0xf]
      %v976 = vld [vmem:[%s974 + $0x4] sm:$0xf]
      %v977 = vld [vmem:[%s974 + $0x8] sm:$0xf]
      %v978 = vld [vmem:[%s974 + $0xc] sm:$0xf]
      %v979 = vld [vmem:[%s974 + $0x10] sm:$0xf]
      %v980 = vld [vmem:[%s974 + $0x14] sm:$0xf]
      %v981 = vld [vmem:[%s974 + $0x18] sm:$0xf]
      %v982 = vld [vmem:[%s974 + $0x1c] sm:$0xf]
      %v983 = vld [vmem:[%s974 + $0x20] sm:$0xf]
      %v984 = vld [vmem:[%s974 + $0x24] sm:$0xf]
      %v985 = vld [vmem:[%s974 + $0x28] sm:$0xf]
      %v986 = vld [vmem:[%s974 + $0x2c] sm:$0xf]
      %v987 = vld [vmem:[%s974 + $0x30] sm:$0xf]
      %v988 = vld [vmem:[%s974 + $0x34] sm:$0xf]
      %v989 = vld [vmem:[%s974 + $0x38] sm:$0xf]
      %v990 = vld [vmem:[%s974 + $0x3c] sm:$0xf]
      %v991 = vld [vmem:[%s974 + $0x40] sm:$0xf]
      %v992 = vld [vmem:[%s974 + $0x44] sm:$0xf]
      %v993 = vld [vmem:[%s974 + $0x48] sm:$0xf]
      %v994 = vld [vmem:[%s974 + $0x4c] sm:$0xf]
      %v995 = vld [vmem:[%s974 + $0x50] sm:$0xf]
      %v996 = vld [vmem:[%s974 + $0x54] sm:$0xf]
      %v997 = vld [vmem:[%s974 + $0x58] sm:$0xf]
      %v998 = vld [vmem:[%s974 + $0x5c] sm:$0xf]
      %v999 = vld [vmem:[%s974 + $0x60] sm:$0xf]
      %v1000 = vld [vmem:[%s974 + $0x64] sm:$0xf]
      %v1001 = vld [vmem:[%s974 + $0x68] sm:$0xf]
      %v1002 = vld [vmem:[%s974 + $0x6c] sm:$0xf]
      %v1003 = vld [vmem:[%s974 + $0x70] sm:$0xf]
      %v1004 = vld [vmem:[%s974 + $0x74] sm:$0xf]
      %v1005 = vld [vmem:[%s974 + $0x78] sm:$0xf]
      %v1006 = vld [vmem:[%s974 + $0x7c] sm:$0xf]
      %v1007 = vld [vmem:[%s974 + $0x80] sm:$0xf]
      %v1008 = vld [vmem:[%s974 + $0x84] sm:$0xf]
      %v1009 = vld [vmem:[%s974 + $0x88] sm:$0xf]
      %v1010 = vld [vmem:[%s974 + $0x8c] sm:$0xf]
      %v1011 = vld [vmem:[%s974 + $0x90] sm:$0xf]
      %v1012 = vld [vmem:[%s974 + $0x94] sm:$0xf]
      %v1013 = vld [vmem:[%s974 + $0x98] sm:$0xf]
      %v1014 = vld [vmem:[%s974 + $0x9c] sm:$0xf]
      %v1015 = vld [vmem:[%s974 + $0xa0] sm:$0xf]
      %v1016 = vld [vmem:[%s974 + $0xa4] sm:$0xf]
      %v1017 = vld [vmem:[%s974 + $0xa8] sm:$0xf]
      %v1018 = vld [vmem:[%s974 + $0xac] sm:$0xf]
      %v1019 = vld [vmem:[%s974 + $0xb0] sm:$0xf]
      %v1020 = vld [vmem:[%s974 + $0xb4] sm:$0xf]
      %v1021 = vld [vmem:[%s974 + $0xb8] sm:$0xf]
      %v1022 = vld [vmem:[%s974 + $0xbc] sm:$0xf]
      %v1071 = vunpack.c.l.b16 %v975
      %v1072 = vunpack.c.l.b16 %v976
      %v1073 = vunpack.c.l.b16 %v977
      %v1074 = vunpack.c.l.b16 %v978
      %v1075 = vunpack.c.l.b16 %v979
      %v1076 = vunpack.c.l.b16 %v980
      %v1077 = vunpack.c.l.b16 %v981
      %v1078 = vunpack.c.l.b16 %v982
      %v1079 = vunpack.c.l.b16 %v983
      %v1080 = vunpack.c.l.b16 %v984
      %v1081 = vunpack.c.l.b16 %v985
      %v1082 = vunpack.c.l.b16 %v986
      %v1083 = vunpack.c.l.b16 %v987
      %v1084 = vunpack.c.l.b16 %v988
      %v1085 = vunpack.c.l.b16 %v989
      %v1086 = vunpack.c.l.b16 %v990
      %v1087 = vunpack.c.l.b16 %v991
      %v1088 = vunpack.c.l.b16 %v992
      %v1089 = vunpack.c.l.b16 %v993
      %v1090 = vunpack.c.l.b16 %v994
      %v1091 = vunpack.c.l.b16 %v995
      %v1092 = vunpack.c.l.b16 %v996
      %v1093 = vunpack.c.l.b16 %v997
      %v1094 = vunpack.c.l.b16 %v998
      %v1095 = vunpack.c.l.b16 %v999
      %v1096 = vunpack.c.l.b16 %v1000
      %v1097 = vunpack.c.l.b16 %v1001
      %v1098 = vunpack.c.l.b16 %v1002
      %v1099 = vunpack.c.l.b16 %v1003
      %v1100 = vunpack.c.l.b16 %v1004
      %v1101 = vunpack.c.l.b16 %v1005
      %v1102 = vunpack.c.l.b16 %v1006
      %v1103 = vunpack.c.l.b16 %v1007
      %v1104 = vunpack.c.l.b16 %v1008
      %v1105 = vunpack.c.l.b16 %v1009
      %v1106 = vunpack.c.l.b16 %v1010
      %v1107 = vunpack.c.l.b16 %v1011
      %v1108 = vunpack.c.l.b16 %v1012
      %v1109 = vunpack.c.l.b16 %v1013
      %v1110 = vunpack.c.l.b16 %v1014
      %v1111 = vunpack.c.l.b16 %v1015
      %v1112 = vunpack.c.l.b16 %v1016
      %v1113 = vunpack.c.l.b16 %v1017
      %v1114 = vunpack.c.l.b16 %v1018
      %v1115 = vunpack.c.l.b16 %v1019
      %v1116 = vunpack.c.l.b16 %v1020
      %v1117 = vunpack.c.l.b16 %v1021
      %v1118 = vunpack.c.l.b16 %v1022
      %v1119 = vpack.c.b16 %v1072, %v1071
      %v1120 = vpack.c.b16 %v1074, %v1073
      %v1121 = vpack.c.b16 %v1076, %v1075
      %v1122 = vpack.c.b16 %v1078, %v1077
      %v1123 = vpack.c.b16 %v1080, %v1079
      %v1124 = vpack.c.b16 %v1082, %v1081
      %v1125 = vpack.c.b16 %v1084, %v1083
      %v1126 = vpack.c.b16 %v1086, %v1085
      %v1127 = vpack.c.b16 %v1088, %v1087
      %v1128 = vpack.c.b16 %v1090, %v1089
      %v1129 = vpack.c.b16 %v1092, %v1091
      %v1130 = vpack.c.b16 %v1094, %v1093
      %v1131 = vpack.c.b16 %v1096, %v1095
      %v1132 = vpack.c.b16 %v1098, %v1097
      %v1133 = vpack.c.b16 %v1100, %v1099
      %v1134 = vpack.c.b16 %v1102, %v1101
      %v1135 = vpack.c.b16 %v1104, %v1103
      %v1136 = vpack.c.b16 %v1106, %v1105
      %v1137 = vpack.c.b16 %v1108, %v1107
      %v1138 = vpack.c.b16 %v1110, %v1109
      %v1139 = vpack.c.b16 %v1112, %v1111
      %v1140 = vpack.c.b16 %v1114, %v1113
      %v1141 = vpack.c.b16 %v1116, %v1115
      %v1142 = vpack.c.b16 %v1118, %v1117
      %1167 = vmatprep.subr.bf16.mxu0 0
      %1168 = vmatpush1.bf16.msra.mxu0 %v1119
      %1169 = vmatprep.subr.bf16.mxu0 0
      %1170 = vmatpush1.bf16.msra.mxu0 %v1120
      %1171 = vmatprep.subr.bf16.mxu0 0
      %1172 = vmatpush1.bf16.msra.mxu0 %v1121
      %1173 = vmatprep.subr.bf16.mxu0 0
      %1174 = vmatpush1.bf16.msra.mxu0 %v1122
      %1175 = vmatprep.subr.bf16.mxu0 0
      %1176 = vmatpush1.bf16.msra.mxu0 %v1123
      %1177 = vmatprep.subr.bf16.mxu0 0
      %1178 = vmatpush1.bf16.msra.mxu0 %v1124
      %1179 = vmatprep.subr.bf16.mxu0 0
      %1180 = vmatpush1.bf16.msra.mxu0 %v1125
      %1181 = vmatprep.subr.bf16.mxu0 0
      %1182 = vmatpush1.bf16.msra.mxu0 %v1126
      %1183 = vmatprep.subr.bf16.mxu0 0
      %1184 = vmatpush1.bf16.msra.mxu0 %v1127
      %1185 = vmatprep.subr.bf16.mxu0 0
      %1186 = vmatpush1.bf16.msra.mxu0 %v1128
      %1187 = vmatprep.subr.bf16.mxu0 0
      %1188 = vmatpush1.bf16.msra.mxu0 %v1129
      %1189 = vmatprep.subr.bf16.mxu0 0
      %1190 = vmatpush1.bf16.msra.mxu0 %v1130
      %1191 = vmatprep.subr.bf16.mxu0 0
      %1192 = vmatpush1.bf16.msra.mxu0 %v1131
      %1193 = vmatprep.subr.bf16.mxu0 0
      %1194 = vmatpush1.bf16.msra.mxu0 %v1132
      %1195 = vmatprep.subr.bf16.mxu0 0
      %1196 = vmatpush1.bf16.msra.mxu0 %v1133
      %1197 = vmatprep.subr.bf16.mxu0 0
      %1198 = vmatpush1.bf16.msra.mxu0 %v1134
      %1199 = vmatprep.mubr.bf16.mxu0 %v927
      %1200 = vmatmul.mubr.bf16.gmra.mrb[0].mxu0 %v926
      %v1201 = vpop.f32.mrb[0].mxu0
      %v1202 = vadd.f32 0.0, %v1201
      %v1203 = vpop.f32.mrb[0].mxu0
      %v1204 = vpop.f32.mrb[0].mxu0
      %v1205 = vadd.f32 0.0, %v1204
      %v1206 = vpop.f32.mrb[0].mxu0
      %1207 = vmatprep.mubr.bf16.mxu0 %v930
      %1208 = vmatmul.mubr.bf16.gmra.mrb[0].mxu0 %v929
      %v1209 = vpop.f32.mrb[0].mxu0
      %v1210 = vadd.f32 0.0, %v1209
      %v1211 = vpop.f32.mrb[0].mxu0
      %v1212 = vpop.f32.mrb[0].mxu0
      %v1213 = vadd.f32 0.0, %v1212
      %v1214 = vpop.f32.mrb[0].mxu0
      %1215 = vmatprep.mubr.bf16.mxu0 %v933
      %1216 = vmatmul.mubr.bf16.gmra.mrb[0].mxu0 %v932
      %v1217 = vpop.f32.mrb[0].mxu0
      %v1218 = vadd.f32 0.0, %v1217
      %v1219 = vpop.f32.mrb[0].mxu0
      %v1220 = vpop.f32.mrb[0].mxu0
      %v1221 = vadd.f32 0.0, %v1220
      %v1222 = vpop.f32.mrb[0].mxu0
      %1223 = vmatprep.mubr.bf16.mxu0 %v936
      %1224 = vmatmul.mubr.bf16.gmra.mrb[0].mxu0 %v935
      %v1225 = vpop.f32.mrb[0].mxu0
      %v1226 = vadd.f32 0.0, %v1225
      %v1227 = vpop.f32.mrb[0].mxu0
      %v1228 = vpop.f32.mrb[0].mxu0
      %v1229 = vadd.f32 0.0, %v1228
      %v1230 = vpop.f32.mrb[0].mxu0
      %1231 = vmatprep.mubr.bf16.mxu0 %v939
      %1232 = vmatmul.mubr.bf16.gmra.mrb[0].mxu0 %v938
      %v1233 = vpop.f32.mrb[0].mxu0
      %v1234 = vadd.f32 0.0, %v1233
      %v1235 = vpop.f32.mrb[0].mxu0
      %v1236 = vpop.f32.mrb[0].mxu0
      %v1237 = vadd.f32 0.0, %v1236
      %v1238 = vpop.f32.mrb[0].mxu0
      %1239 = vmatprep.mubr.bf16.mxu0 %v942
      %1240 = vmatmul.mubr.bf16.gmra.mrb[0].mxu0 %v941
      %v1241 = vpop.f32.mrb[0].mxu0
      %v1242 = vadd.f32 0.0, %v1241
      %v1243 = vpop.f32.mrb[0].mxu0
      %v1244 = vpop.f32.mrb[0].mxu0
      %v1245 = vadd.f32 0.0, %v1244
      %v1246 = vpop.f32.mrb[0].mxu0
      %1247 = vmatprep.mubr.bf16.mxu0 %v945
      %1248 = vmatmul.mubr.bf16.gmra.mrb[0].mxu0 %v944
      %v1249 = vpop.f32.mrb[0].mxu0
      %v1250 = vadd.f32 0.0, %v1249
      %v1251 = vpop.f32.mrb[0].mxu0
      %v1252 = vpop.f32.mrb[0].mxu0
      %v1253 = vadd.f32 0.0, %v1252
      %v1254 = vpop.f32.mrb[0].mxu0
      %1255 = vmatprep.mubr.bf16.mxu0 %v948
      %1256 = vmatmul.mubr.bf16.gmra.mrb[0].mxu0 %v947
      %v1257 = vpop.f32.mrb[0].mxu0
      %v1258 = vadd.f32 0.0, %v1257
      %v1259 = vpop.f32.mrb[0].mxu0
      %v1260 = vpop.f32.mrb[0].mxu0
      %v1261 = vadd.f32 0.0, %v1260
      %v1262 = vpop.f32.mrb[0].mxu0
      %1263 = vmatprep.mubr.bf16.mxu0 %v951
      %1264 = vmatmul.mubr.bf16.gmra.mrb[0].mxu0 %v950
      %v1265 = vpop.f32.mrb[0].mxu0
      %v1266 = vadd.f32 0.0, %v1265
      %v1267 = vpop.f32.mrb[0].mxu0
      %v1268 = vpop.f32.mrb[0].mxu0
      %v1269 = vadd.f32 0.0, %v1268
      %v1270 = vpop.f32.mrb[0].mxu0
      %1271 = vmatprep.mubr.bf16.mxu0 %v954
      %1272 = vmatmul.mubr.bf16.gmra.mrb[0].mxu0 %v953
      %v1273 = vpop.f32.mrb[0].mxu0
      %v1274 = vadd.f32 0.0, %v1273
      %v1275 = vpop.f32.mrb[0].mxu0
      %v1276 = vpop.f32.mrb[0].mxu0
      %v1277 = vadd.f32 0.0, %v1276
      %v1278 = vpop.f32.mrb[0].mxu0
      %1279 = vmatprep.mubr.bf16.mxu0 %v957
      %1280 = vmatmul.mubr.bf16.gmra.mrb[0].mxu0 %v956
      %v1281 = vpop.f32.mrb[0].mxu0
      %v1282 = vadd.f32 0.0, %v1281
      %v1283 = vpop.f32.mrb[0].mxu0
      %v1284 = vpop.f32.mrb[0].mxu0
      %v1285 = vadd.f32 0.0, %v1284
      %v1286 = vpop.f32.mrb[0].mxu0
      %1287 = vmatprep.mubr.bf16.mxu0 %v960
      %1288 = vmatmul.mubr.bf16.gmra.mrb[0].mxu0 %v959
      %v1289 = vpop.f32.mrb[0].mxu0
      %v1290 = vadd.f32 0.0, %v1289
      %v1291 = vpop.f32.mrb[0].mxu0
      %v1292 = vpop.f32.mrb[0].mxu0
      %v1293 = vadd.f32 0.0, %v1292
      %v1294 = vpop.f32.mrb[0].mxu0
      %1295 = vmatprep.mubr.bf16.mxu0 %v963
      %1296 = vmatmul.mubr.bf16.gmra.mrb[0].mxu0 %v962
      %v1297 = vpop.f32.mrb[0].mxu0
      %v1298 = vadd.f32 0.0, %v1297
      %v1299 = vpop.f32.mrb[0].mxu0
      %v1300 = vpop.f32.mrb[0].mxu0
      %v1301 = vadd.f32 0.0, %v1300
      %v1302 = vpop.f32.mrb[0].mxu0
      %1303 = vmatprep.mubr.bf16.mxu0 %v966
      %1304 = vmatmul.mubr.bf16.gmra.mrb[0].mxu0 %v965
      %v1305 = vpop.f32.mrb[0].mxu0
      %v1306 = vadd.f32 0.0, %v1305
      %v1307 = vpop.f32.mrb[0].mxu0
      %v1308 = vpop.f32.mrb[0].mxu0
      %v1309 = vadd.f32 0.0, %v1308
      %v1310 = vpop.f32.mrb[0].mxu0
      %1311 = vmatprep.mubr.bf16.mxu0 %v969
      %1312 = vmatmul.mubr.bf16.gmra.mrb[0].mxu0 %v968
      %v1313 = vpop.f32.mrb[0].mxu0
      %v1314 = vadd.f32 0.0, %v1313
      %v1315 = vpop.f32.mrb[0].mxu0
      %v1316 = vpop.f32.mrb[0].mxu0
      %v1317 = vadd.f32 0.0, %v1316
      %v1318 = vpop.f32.mrb[0].mxu0
      %1319 = vmatprep.mubr.bf16.mxu0 %v972
      %1320 = vmatmul.mubr.bf16.gmra.mrb[0].mxu0 %v971
      %v1321 = vpop.f32.mrb[0].mxu0
      %v1322 = vadd.f32 0.0, %v1321
      %v1323 = vpop.f32.mrb[0].mxu0
      %v1324 = vpop.f32.mrb[0].mxu0
      %v1325 = vadd.f32 0.0, %v1324
      %v1326 = vpop.f32.mrb[0].mxu0
      %1327 = vdwg.mxu0
      %1328 = vmatprep.subr.bf16.mxu0 0
      %1329 = vmatpush1.bf16.msra.mxu0 %v1135
      %1330 = vmatprep.subr.bf16.mxu0 0
      %1331 = vmatpush1.bf16.msra.mxu0 %v1136
      %1332 = vmatprep.subr.bf16.mxu0 0
      %1333 = vmatpush1.bf16.msra.mxu0 %v1137
      %1334 = vmatprep.subr.bf16.mxu0 0
      %1335 = vmatpush1.bf16.msra.mxu0 %v1138
      %1336 = vmatprep.subr.bf16.mxu0 0
      %1337 = vmatpush1.bf16.msra.mxu0 %v1139
      %1338 = vmatprep.subr.bf16.mxu0 0
      %1339 = vmatpush1.bf16.msra.mxu0 %v1140
      %1340 = vmatprep.subr.bf16.mxu0 0
      %1341 = vmatpush1.bf16.msra.mxu0 %v1141
      %1342 = vmatprep.subr.bf16.mxu0 0
      %1343 = vmatpush1.bf16.msra.mxu0 %v1142
      %1344 = vmatprep.subr.bf16.mxu0 0
      %1345 = vmatpush1.bf16.msra.mxu0 0
      %1346 = vmatprep.subr.bf16.mxu0 0
      %1347 = vmatpush1.bf16.msra.mxu0 0
      %1348 = vmatprep.subr.bf16.mxu0 0
      %1349 = vmatpush1.bf16.msra.mxu0 0
      %1350 = vmatprep.subr.bf16.mxu0 0
      %1351 = vmatpush1.bf16.msra.mxu0 0
      %1352 = vmatprep.subr.bf16.mxu0 0
      %1353 = vmatpush1.bf16.msra.mxu0 0
      %1354 = vmatprep.subr.bf16.mxu0 0
      %1355 = vmatpush1.bf16.msra.mxu0 0
      %1356 = vmatprep.subr.bf16.mxu0 0
      %1357 = vmatpush1.bf16.msra.mxu0 0
      %1358 = vmatprep.subr.bf16.mxu0 0
      %1359 = vmatpush1.bf16.msra.mxu0 0
      %1360 = vmatprep.mubr.bf16.mxu0 0
      %1361 = vmatmul.mubr.bf16.gmra.mrb[0].mxu0 %v928
      %v1362 = vpop.f32.mrb[0].mxu0
      %v1363 = vadd.f32 %v1202, %v1362
      %v1364 = vpop.f32.mrb[0].mxu0
      %v1365 = vpop.f32.mrb[0].mxu0
      %v1366 = vadd.f32 %v1205, %v1365
      %v1367 = vpop.f32.mrb[0].mxu0
      %1368 = vmatprep.mubr.bf16.mxu0 0
      %1369 = vmatmul.mubr.bf16.gmra.mrb[0].mxu0 %v931
      %v1370 = vpop.f32.mrb[0].mxu0
      %v1371 = vadd.f32 %v1210, %v1370
      %v1372 = vpop.f32.mrb[0].mxu0
      %v1373 = vpop.f32.mrb[0].mxu0
      %v1374 = vadd.f32 %v1213, %v1373
      %v1375 = vpop.f32.mrb[0].mxu0
      %1376 = vmatprep.mubr.bf16.mxu0 0
      %1377 = vmatmul.mubr.bf16.gmra.mrb[0].mxu0 %v934
      %v1378 = vpop.f32.mrb[0].mxu0
      %v1379 = vadd.f32 %v1218, %v1378
      %v1380 = vpop.f32.mrb[0].mxu0
      %v1381 = vpop.f32.mrb[0].mxu0
      %v1382 = vadd.f32 %v1221, %v1381
      %v1383 = vpop.f32.mrb[0].mxu0
      %1384 = vmatprep.mubr.bf16.mxu0 0
      %1385 = vmatmul.mubr.bf16.gmra.mrb[0].mxu0 %v937
      %v1386 = vpop.f32.mrb[0].mxu0
      %v1387 = vadd.f32 %v1226, %v1386
      %v1388 = vpop.f32.mrb[0].mxu0
      %v1389 = vpop.f32.mrb[0].mxu0
      %v1390 = vadd.f32 %v1229, %v1389
      %v1391 = vpop.f32.mrb[0].mxu0
      %1392 = vmatprep.mubr.bf16.mxu0 0
      %1393 = vmatmul.mubr.bf16.gmra.mrb[0].mxu0 %v940
      %v1394 = vpop.f32.mrb[0].mxu0
      %v1395 = vadd.f32 %v1234, %v1394
      %v1396 = vpop.f32.mrb[0].mxu0
      %v1397 = vpop.f32.mrb[0].mxu0
      %v1398 = vadd.f32 %v1237, %v1397
      %v1399 = vpop.f32.mrb[0].mxu0
      %1400 = vmatprep.mubr.bf16.mxu0 0
      %1401 = vmatmul.mubr.bf16.gmra.mrb[0].mxu0 %v943
      %v1402 = vpop.f32.mrb[0].mxu0
      %v1403 = vadd.f32 %v1242, %v1402
      %v1404 = vpop.f32.mrb[0].mxu0
      %v1405 = vpop.f32.mrb[0].mxu0
      %v1406 = vadd.f32 %v1245, %v1405
      %v1407 = vpop.f32.mrb[0].mxu0
      %1408 = vmatprep.mubr.bf16.mxu0 0
      %1409 = vmatmul.mubr.bf16.gmra.mrb[0].mxu0 %v946
      %v1410 = vpop.f32.mrb[0].mxu0
      %v1411 = vadd.f32 %v1250, %v1410
      %v1412 = vpop.f32.mrb[0].mxu0
      %v1413 = vpop.f32.mrb[0].mxu0
      %v1414 = vadd.f32 %v1253, %v1413
      %v1415 = vpop.f32.mrb[0].mxu0
      %1416 = vmatprep.mubr.bf16.mxu0 0
      %1417 = vmatmul.mubr.bf16.gmra.mrb[0].mxu0 %v949
      %v1418 = vpop.f32.mrb[0].mxu0
      %v1419 = vadd.f32 %v1258, %v1418
      %v1420 = vpop.f32.mrb[0].mxu0
      %v1421 = vpop.f32.mrb[0].mxu0
      %v1422 = vadd.f32 %v1261, %v1421
      %v1423 = vpop.f32.mrb[0].mxu0
      %1424 = vmatprep.mubr.bf16.mxu0 0
      %1425 = vmatmul.mubr.bf16.gmra.mrb[0].mxu0 %v952
      %v1426 = vpop.f32.mrb[0].mxu0
      %v1427 = vadd.f32 %v1266, %v1426
      %v1428 = vpop.f32.mrb[0].mxu0
      %v1429 = vpop.f32.mrb[0].mxu0
      %v1430 = vadd.f32 %v1269, %v1429
      %v1431 = vpop.f32.mrb[0].mxu0
      %1432 = vmatprep.mubr.bf16.mxu0 0
      %1433 = vmatmul.mubr.bf16.gmra.mrb[0].mxu0 %v955
      %v1434 = vpop.f32.mrb[0].mxu0
      %v1435 = vadd.f32 %v1274, %v1434
      %v1436 = vpop.f32.mrb[0].mxu0
      %v1437 = vpop.f32.mrb[0].mxu0
      %v1438 = vadd.f32 %v1277, %v1437
      %v1439 = vpop.f32.mrb[0].mxu0
      %1440 = vmatprep.mubr.bf16.mxu0 0
      %1441 = vmatmul.mubr.bf16.gmra.mrb[0].mxu0 %v958
      %v1442 = vpop.f32.mrb[0].mxu0
      %v1443 = vadd.f32 %v1282, %v1442
      %v1444 = vpop.f32.mrb[0].mxu0
      %v1445 = vpop.f32.mrb[0].mxu0
      %v1446 = vadd.f32 %v1285, %v1445
      %v1447 = vpop.f32.mrb[0].mxu0
      %1448 = vmatprep.mubr.bf16.mxu0 0
      %1449 = vmatmul.mubr.bf16.gmra.mrb[0].mxu0 %v961
      %v1450 = vpop.f32.mrb[0].mxu0
      %v1451 = vadd.f32 %v1290, %v1450
      %v1452 = vpop.f32.mrb[0].mxu0
      %v1453 = vpop.f32.mrb[0].mxu0
      %v1454 = vadd.f32 %v1293, %v1453
      %v1455 = vpop.f32.mrb[0].mxu0
      %1456 = vmatprep.mubr.bf16.mxu0 0
      %1457 = vmatmul.mubr.bf16.gmra.mrb[0].mxu0 %v964
      %v1458 = vpop.f32.mrb[0].mxu0
      %v1459 = vadd.f32 %v1298, %v1458
      %v1460 = vpop.f32.mrb[0].mxu0
      %v1461 = vpop.f32.mrb[0].mxu0
      %v1462 = vadd.f32 %v1301, %v1461
      %v1463 = vpop.f32.mrb[0].mxu0
      %1464 = vmatprep.mubr.bf16.mxu0 0
      %1465 = vmatmul.mubr.bf16.gmra.mrb[0].mxu0 %v967
      %v1466 = vpop.f32.mrb[0].mxu0
      %v1467 = vadd.f32 %v1306, %v1466
      %v1468 = vpop.f32.mrb[0].mxu0
      %v1469 = vpop.f32.mrb[0].mxu0
      %v1470 = vadd.f32 %v1309, %v1469
      %v1471 = vpop.f32.mrb[0].mxu0
      %1472 = vmatprep.mubr.bf16.mxu0 0
      %1473 = vmatmul.mubr.bf16.gmra.mrb[0].mxu0 %v970
      %v1474 = vpop.f32.mrb[0].mxu0
      %v1475 = vadd.f32 %v1314, %v1474
      %v1476 = vpop.f32.mrb[0].mxu0
      %v1477 = vpop.f32.mrb[0].mxu0
      %v1478 = vadd.f32 %v1317, %v1477
      %v1479 = vpop.f32.mrb[0].mxu0
      %1480 = vmatprep.mubr.bf16.mxu0 0
      %1481 = vmatmul.mubr.bf16.gmra.mrb[0].mxu0 %v973
      %v1482 = vpop.f32.mrb[0].mxu0
      %v1483 = vadd.f32 %v1322, %v1482
      %v1484 = vpop.f32.mrb[0].mxu0
      %v1485 = vpop.f32.mrb[0].mxu0
      %v1486 = vadd.f32 %v1325, %v1485
      %v1487 = vpop.f32.mrb[0].mxu0
      %1488 = vdwg.mxu0
      %v1537 = vunpack.c.l.b16 %v878
      %v1538 = vunpack.c.l.b16 %v879
      %v1539 = vunpack.c.l.b16 %v880
      %v1540 = vunpack.c.l.b16 %v881
      %v1541 = vunpack.c.l.b16 %v882
      %v1542 = vunpack.c.l.b16 %v883
      %v1543 = vunpack.c.l.b16 %v884
      %v1544 = vunpack.c.l.b16 %v885
      %v1545 = vunpack.c.l.b16 %v886
      %v1546 = vunpack.c.l.b16 %v887
      %v1547 = vunpack.c.l.b16 %v888
      %v1548 = vunpack.c.l.b16 %v889
      %v1549 = vunpack.c.l.b16 %v890
      %v1550 = vunpack.c.l.b16 %v891
      %v1551 = vunpack.c.l.b16 %v892
      %v1552 = vunpack.c.l.b16 %v893
      %v1553 = vunpack.c.l.b16 %v894
      %v1554 = vunpack.c.l.b16 %v895
      %v1555 = vunpack.c.l.b16 %v896
      %v1556 = vunpack.c.l.b16 %v897
      %v1557 = vunpack.c.l.b16 %v898
      %v1558 = vunpack.c.l.b16 %v899
      %v1559 = vunpack.c.l.b16 %v900
      %v1560 = vunpack.c.l.b16 %v901
      %v1561 = vunpack.c.l.b16 %v902
      %v1562 = vunpack.c.l.b16 %v903
      %v1563 = vunpack.c.l.b16 %v904
      %v1564 = vunpack.c.l.b16 %v905
      %v1565 = vunpack.c.l.b16 %v906
      %v1566 = vunpack.c.l.b16 %v907
      %v1567 = vunpack.c.l.b16 %v908
      %v1568 = vunpack.c.l.b16 %v909
      %v1569 = vunpack.c.l.b16 %v910
      %v1570 = vunpack.c.l.b16 %v911
      %v1571 = vunpack.c.l.b16 %v912
      %v1572 = vunpack.c.l.b16 %v913
      %v1573 = vunpack.c.l.b16 %v914
      %v1574 = vunpack.c.l.b16 %v915
      %v1575 = vunpack.c.l.b16 %v916
      %v1576 = vunpack.c.l.b16 %v917
      %v1577 = vunpack.c.l.b16 %v918
      %v1578 = vunpack.c.l.b16 %v919
      %v1579 = vunpack.c.l.b16 %v920
      %v1580 = vunpack.c.l.b16 %v921
      %v1581 = vunpack.c.l.b16 %v922
      %v1582 = vunpack.c.l.b16 %v923
      %v1583 = vunpack.c.l.b16 %v924
      %v1584 = vunpack.c.l.b16 %v925
      %v1585 = vpack.c.b16 %v1538, %v1537
      %v1586 = vpack.c.b16 %v1540, %v1539
      %v1587 = vpack.c.b16 %v1542, %v1541
      %v1588 = vpack.c.b16 %v1544, %v1543
      %v1589 = vpack.c.b16 %v1546, %v1545
      %v1590 = vpack.c.b16 %v1548, %v1547
      %v1591 = vpack.c.b16 %v1550, %v1549
      %v1592 = vpack.c.b16 %v1552, %v1551
      %v1593 = vpack.c.b16 %v1554, %v1553
      %v1594 = vpack.c.b16 %v1556, %v1555
      %v1595 = vpack.c.b16 %v1558, %v1557
      %v1596 = vpack.c.b16 %v1560, %v1559
      %v1597 = vpack.c.b16 %v1562, %v1561
      %v1598 = vpack.c.b16 %v1564, %v1563
      %v1599 = vpack.c.b16 %v1566, %v1565
      %v1600 = vpack.c.b16 %v1568, %v1567
      %v1601 = vpack.c.b16 %v1570, %v1569
      %v1602 = vpack.c.b16 %v1572, %v1571
      %v1603 = vpack.c.b16 %v1574, %v1573
      %v1604 = vpack.c.b16 %v1576, %v1575
      %v1605 = vpack.c.b16 %v1578, %v1577
      %v1606 = vpack.c.b16 %v1580, %v1579
      %v1607 = vpack.c.b16 %v1582, %v1581
      %v1608 = vpack.c.b16 %v1584, %v1583
      %1633 = vmatprep.subr.bf16.mxu0 0
      %1634 = vmatpush1.bf16.msra.mxu0 %v1585
      %1635 = vmatprep.subr.bf16.mxu0 0
      %1636 = vmatpush1.bf16.msra.mxu0 %v1586
      %1637 = vmatprep.subr.bf16.mxu0 0
      %1638 = vmatpush1.bf16.msra.mxu0 %v1587
      %1639 = vmatprep.subr.bf16.mxu0 0
      %1640 = vmatpush1.bf16.msra.mxu0 %v1588
      %1641 = vmatprep.subr.bf16.mxu0 0
      %1642 = vmatpush1.bf16.msra.mxu0 %v1589
      %1643 = vmatprep.subr.bf16.mxu0 0
      %1644 = vmatpush1.bf16.msra.mxu0 %v1590
      %1645 = vmatprep.subr.bf16.mxu0 0
      %1646 = vmatpush1.bf16.msra.mxu0 %v1591
      %1647 = vmatprep.subr.bf16.mxu0 0
      %1648 = vmatpush1.bf16.msra.mxu0 %v1592
      %1649 = vmatprep.subr.bf16.mxu0 0
      %1650 = vmatpush1.bf16.msra.mxu0 %v1593
      %1651 = vmatprep.subr.bf16.mxu0 0
      %1652 = vmatpush1.bf16.msra.mxu0 %v1594
      %1653 = vmatprep.subr.bf16.mxu0 0
      %1654 = vmatpush1.bf16.msra.mxu0 %v1595
      %1655 = vmatprep.subr.bf16.mxu0 0
      %1656 = vmatpush1.bf16.msra.mxu0 %v1596
      %1657 = vmatprep.subr.bf16.mxu0 0
      %1658 = vmatpush1.bf16.msra.mxu0 %v1597
      %1659 = vmatprep.subr.bf16.mxu0 0
      %1660 = vmatpush1.bf16.msra.mxu0 %v1598
      %1661 = vmatprep.subr.bf16.mxu0 0
      %1662 = vmatpush1.bf16.msra.mxu0 %v1599
      %1663 = vmatprep.subr.bf16.mxu0 0
      %1664 = vmatpush1.bf16.msra.mxu0 %v1600
      %1665 = vmatprep.mubr.bf16.mxu0 %v831
      %1666 = vmatmul.mubr.bf16.gmra.mrb[0].mxu0 %v830
      %v1667 = vpop.f32.mrb[0].mxu0
      %v1668 = vadd.f32 %v1363, %v1667
      %v1669 = vpop.f32.mrb[0].mxu0
      %v1670 = vpop.f32.mrb[0].mxu0
      %v1671 = vadd.f32 %v1366, %v1670
      %v1672 = vpop.f32.mrb[0].mxu0
      %1673 = vmatprep.mubr.bf16.mxu0 %v834
      %1674 = vmatmul.mubr.bf16.gmra.mrb[0].mxu0 %v833
      %v1675 = vpop.f32.mrb[0].mxu0
      %v1676 = vadd.f32 %v1371, %v1675
      %v1677 = vpop.f32.mrb[0].mxu0
      %v1678 = vpop.f32.mrb[0].mxu0
      %v1679 = vadd.f32 %v1374, %v1678
      %v1680 = vpop.f32.mrb[0].mxu0
      %1681 = vmatprep.mubr.bf16.mxu0 %v837
      %1682 = vmatmul.mubr.bf16.gmra.mrb[0].mxu0 %v836
      %v1683 = vpop.f32.mrb[0].mxu0
      %v1684 = vadd.f32 %v1379, %v1683
      %v1685 = vpop.f32.mrb[0].mxu0
      %v1686 = vpop.f32.mrb[0].mxu0
      %v1687 = vadd.f32 %v1382, %v1686
      %v1688 = vpop.f32.mrb[0].mxu0
      %1689 = vmatprep.mubr.bf16.mxu0 %v840
      %1690 = vmatmul.mubr.bf16.gmra.mrb[0].mxu0 %v839
      %v1691 = vpop.f32.mrb[0].mxu0
      %v1692 = vadd.f32 %v1387, %v1691
      %v1693 = vpop.f32.mrb[0].mxu0
      %v1694 = vpop.f32.mrb[0].mxu0
      %v1695 = vadd.f32 %v1390, %v1694
      %v1696 = vpop.f32.mrb[0].mxu0
      %1697 = vmatprep.mubr.bf16.mxu0 %v843
      %1698 = vmatmul.mubr.bf16.gmra.mrb[0].mxu0 %v842
      %v1699 = vpop.f32.mrb[0].mxu0
      %v1700 = vadd.f32 %v1395, %v1699
      %v1701 = vpop.f32.mrb[0].mxu0
      %v1702 = vpop.f32.mrb[0].mxu0
      %v1703 = vadd.f32 %v1398, %v1702
      %v1704 = vpop.f32.mrb[0].mxu0
      %1705 = vmatprep.mubr.bf16.mxu0 %v846
      %1706 = vmatmul.mubr.bf16.gmra.mrb[0].mxu0 %v845
      %v1707 = vpop.f32.mrb[0].mxu0
      %v1708 = vadd.f32 %v1403, %v1707
      %v1709 = vpop.f32.mrb[0].mxu0
      %v1710 = vpop.f32.mrb[0].mxu0
      %v1711 = vadd.f32 %v1406, %v1710
      %v1712 = vpop.f32.mrb[0].mxu0
      %1713 = vmatprep.mubr.bf16.mxu0 %v849
      %1714 = vmatmul.mubr.bf16.gmra.mrb[0].mxu0 %v848
      %v1715 = vpop.f32.mrb[0].mxu0
      %v1716 = vadd.f32 %v1411, %v1715
      %v1717 = vpop.f32.mrb[0].mxu0
      %v1718 = vpop.f32.mrb[0].mxu0
      %v1719 = vadd.f32 %v1414, %v1718
      %v1720 = vpop.f32.mrb[0].mxu0
      %1721 = vmatprep.mubr.bf16.mxu0 %v852
      %1722 = vmatmul.mubr.bf16.gmra.mrb[0].mxu0 %v851
      %v1723 = vpop.f32.mrb[0].mxu0
      %v1724 = vadd.f32 %v1419, %v1723
      %v1725 = vpop.f32.mrb[0].mxu0
      %v1726 = vpop.f32.mrb[0].mxu0
      %v1727 = vadd.f32 %v1422, %v1726
      %v1728 = vpop.f32.mrb[0].mxu0
      %1729 = vmatprep.mubr.bf16.mxu0 %v855
      %1730 = vmatmul.mubr.bf16.gmra.mrb[0].mxu0 %v854
      %v1731 = vpop.f32.mrb[0].mxu0
      %v1732 = vadd.f32 %v1427, %v1731
      %v1733 = vpop.f32.mrb[0].mxu0
      %v1734 = vpop.f32.mrb[0].mxu0
      %v1735 = vadd.f32 %v1430, %v1734
      %v1736 = vpop.f32.mrb[0].mxu0
      %1737 = vmatprep.mubr.bf16.mxu0 %v858
      %1738 = vmatmul.mubr.bf16.gmra.mrb[0].mxu0 %v857
      %v1739 = vpop.f32.mrb[0].mxu0
      %v1740 = vadd.f32 %v1435, %v1739
      %v1741 = vpop.f32.mrb[0].mxu0
      %v1742 = vpop.f32.mrb[0].mxu0
      %v1743 = vadd.f32 %v1438, %v1742
      %v1744 = vpop.f32.mrb[0].mxu0
      %1745 = vmatprep.mubr.bf16.mxu0 %v861
      %1746 = vmatmul.mubr.bf16.gmra.mrb[0].mxu0 %v860
      %v1747 = vpop.f32.mrb[0].mxu0
      %v1748 = vadd.f32 %v1443, %v1747
      %v1749 = vpop.f32.mrb[0].mxu0
      %v1750 = vpop.f32.mrb[0].mxu0
      %v1751 = vadd.f32 %v1446, %v1750
      %v1752 = vpop.f32.mrb[0].mxu0
      %1753 = vmatprep.mubr.bf16.mxu0 %v864
      %1754 = vmatmul.mubr.bf16.gmra.mrb[0].mxu0 %v863
      %v1755 = vpop.f32.mrb[0].mxu0
      %v1756 = vadd.f32 %v1451, %v1755
      %v1757 = vpop.f32.mrb[0].mxu0
      %v1758 = vpop.f32.mrb[0].mxu0
      %v1759 = vadd.f32 %v1454, %v1758
      %v1760 = vpop.f32.mrb[0].mxu0
      %1761 = vmatprep.mubr.bf16.mxu0 %v867
      %1762 = vmatmul.mubr.bf16.gmra.mrb[0].mxu0 %v866
      %v1763 = vpop.f32.mrb[0].mxu0
      %v1764 = vadd.f32 %v1459, %v1763
      %v1765 = vpop.f32.mrb[0].mxu0
      %v1766 = vpop.f32.mrb[0].mxu0
      %v1767 = vadd.f32 %v1462, %v1766
      %v1768 = vpop.f32.mrb[0].mxu0
      %1769 = vmatprep.mubr.bf16.mxu0 %v870
      %1770 = vmatmul.mubr.bf16.gmra.mrb[0].mxu0 %v869
      %v1771 = vpop.f32.mrb[0].mxu0
      %v1772 = vadd.f32 %v1467, %v1771
      %v1773 = vpop.f32.mrb[0].mxu0
      %v1774 = vpop.f32.mrb[0].mxu0
      %v1775 = vadd.f32 %v1470, %v1774
      %v1776 = vpop.f32.mrb[0].mxu0
      %1777 = vmatprep.mubr.bf16.mxu0 %v873
      %1778 = vmatmul.mubr.bf16.gmra.mrb[0].mxu0 %v872
      %v1779 = vpop.f32.mrb[0].mxu0
      %v1780 = vadd.f32 %v1475, %v1779
      %v1781 = vpop.f32.mrb[0].mxu0
      %v1782 = vpop.f32.mrb[0].mxu0
      %v1783 = vadd.f32 %v1478, %v1782
      %v1784 = vpop.f32.mrb[0].mxu0
      %1785 = vmatprep.mubr.bf16.mxu0 %v876
      %1786 = vmatmul.mubr.bf16.gmra.mrb[0].mxu0 %v875
      %v1787 = vpop.f32.mrb[0].mxu0
      %v1788 = vadd.f32 %v1483, %v1787
      %v1789 = vpop.f32.mrb[0].mxu0
      %v1790 = vpop.f32.mrb[0].mxu0
      %v1791 = vadd.f32 %v1486, %v1790
      %v1792 = vpop.f32.mrb[0].mxu0
      %1793 = vdwg.mxu0
      %1794 = vmatprep.subr.bf16.mxu0 0
      %1795 = vmatpush1.bf16.msra.mxu0 %v1601
      %1796 = vmatprep.subr.bf16.mxu0 0
      %1797 = vmatpush1.bf16.msra.mxu0 %v1602
      %1798 = vmatprep.subr.bf16.mxu0 0
      %1799 = vmatpush1.bf16.msra.mxu0 %v1603
      %1800 = vmatprep.subr.bf16.mxu0 0
      %1801 = vmatpush1.bf16.msra.mxu0 %v1604
      %1802 = vmatprep.subr.bf16.mxu0 0
      %1803 = vmatpush1.bf16.msra.mxu0 %v1605
      %1804 = vmatprep.subr.bf16.mxu0 0
      %1805 = vmatpush1.bf16.msra.mxu0 %v1606
      %1806 = vmatprep.subr.bf16.mxu0 0
      %1807 = vmatpush1.bf16.msra.mxu0 %v1607
      %1808 = vmatprep.subr.bf16.mxu0 0
      %1809 = vmatpush1.bf16.msra.mxu0 %v1608
      %1810 = vmatprep.subr.bf16.mxu0 0
      %1811 = vmatpush1.bf16.msra.mxu0 0
      %1812 = vmatprep.subr.bf16.mxu0 0
      %1813 = vmatpush1.bf16.msra.mxu0 0
      %1814 = vmatprep.subr.bf16.mxu0 0
      %1815 = vmatpush1.bf16.msra.mxu0 0
      %1816 = vmatprep.subr.bf16.mxu0 0
      %1817 = vmatpush1.bf16.msra.mxu0 0
      %1818 = vmatprep.subr.bf16.mxu0 0
      %1819 = vmatpush1.bf16.msra.mxu0 0
      %1820 = vmatprep.subr.bf16.mxu0 0
      %1821 = vmatpush1.bf16.msra.mxu0 0
      %1822 = vmatprep.subr.bf16.mxu0 0
      %1823 = vmatpush1.bf16.msra.mxu0 0
      %1824 = vmatprep.subr.bf16.mxu0 0
      %1825 = vmatpush1.bf16.msra.mxu0 0
      %1826 = vmatprep.mubr.bf16.mxu0 0
      %1827 = vmatmul.mubr.bf16.gmra.mrb[0].mxu0 %v832
      %v1828 = vpop.f32.mrb[0].mxu0
      %v1829 = vadd.f32 %v1668, %v1828
      %v1830 = vpop.f32.mrb[0].mxu0
      %v1831 = vpop.f32.mrb[0].mxu0
      %v1832 = vadd.f32 %v1671, %v1831
      %v1833 = vpop.f32.mrb[0].mxu0
      %1834 = vmatprep.mubr.bf16.mxu0 0
      %1835 = vmatmul.mubr.bf16.gmra.mrb[0].mxu0 %v835
      %v1836 = vpop.f32.mrb[0].mxu0
      %v1837 = vadd.f32 %v1676, %v1836
      %v1838 = vpop.f32.mrb[0].mxu0
      %v1839 = vpop.f32.mrb[0].mxu0
      %v1840 = vadd.f32 %v1679, %v1839
      %v1841 = vpop.f32.mrb[0].mxu0
      %1842 = vmatprep.mubr.bf16.mxu0 0
      %1843 = vmatmul.mubr.bf16.gmra.mrb[0].mxu0 %v838
      %v1844 = vpop.f32.mrb[0].mxu0
      %v1845 = vadd.f32 %v1684, %v1844
      %v1846 = vpop.f32.mrb[0].mxu0
      %v1847 = vpop.f32.mrb[0].mxu0
      %v1848 = vadd.f32 %v1687, %v1847
      %v1849 = vpop.f32.mrb[0].mxu0
      %1850 = vmatprep.mubr.bf16.mxu0 0
      %1851 = vmatmul.mubr.bf16.gmra.mrb[0].mxu0 %v841
      %v1852 = vpop.f32.mrb[0].mxu0
      %v1853 = vadd.f32 %v1692, %v1852
      %v1854 = vpop.f32.mrb[0].mxu0
      %v1855 = vpop.f32.mrb[0].mxu0
      %v1856 = vadd.f32 %v1695, %v1855
      %v1857 = vpop.f32.mrb[0].mxu0
      %1858 = vmatprep.mubr.bf16.mxu0 0
      %1859 = vmatmul.mubr.bf16.gmra.mrb[0].mxu0 %v844
      %v1860 = vpop.f32.mrb[0].mxu0
      %v1861 = vadd.f32 %v1700, %v1860
      %v1862 = vpop.f32.mrb[0].mxu0
      %v1863 = vpop.f32.mrb[0].mxu0
      %v1864 = vadd.f32 %v1703, %v1863
      %v1865 = vpop.f32.mrb[0].mxu0
      %1866 = vmatprep.mubr.bf16.mxu0 0
      %1867 = vmatmul.mubr.bf16.gmra.mrb[0].mxu0 %v847
      %v1868 = vpop.f32.mrb[0].mxu0
      %v1869 = vadd.f32 %v1708, %v1868
      %v1870 = vpop.f32.mrb[0].mxu0
      %v1871 = vpop.f32.mrb[0].mxu0
      %v1872 = vadd.f32 %v1711, %v1871
      %v1873 = vpop.f32.mrb[0].mxu0
      %1874 = vmatprep.mubr.bf16.mxu0 0
      %1875 = vmatmul.mubr.bf16.gmra.mrb[0].mxu0 %v850
      %v1876 = vpop.f32.mrb[0].mxu0
      %v1877 = vadd.f32 %v1716, %v1876
      %v1878 = vpop.f32.mrb[0].mxu0
      %v1879 = vpop.f32.mrb[0].mxu0
      %v1880 = vadd.f32 %v1719, %v1879
      %v1881 = vpop.f32.mrb[0].mxu0
      %1882 = vmatprep.mubr.bf16.mxu0 0
      %1883 = vmatmul.mubr.bf16.gmra.mrb[0].mxu0 %v853
      %v1884 = vpop.f32.mrb[0].mxu0
      %v1885 = vadd.f32 %v1724, %v1884
      %v1886 = vpop.f32.mrb[0].mxu0
      %v1887 = vpop.f32.mrb[0].mxu0
      %v1888 = vadd.f32 %v1727, %v1887
      %v1889 = vpop.f32.mrb[0].mxu0
      %1890 = vmatprep.mubr.bf16.mxu0 0
      %1891 = vmatmul.mubr.bf16.gmra.mrb[0].mxu0 %v856
      %v1892 = vpop.f32.mrb[0].mxu0
      %v1893 = vadd.f32 %v1732, %v1892
      %v1894 = vpop.f32.mrb[0].mxu0
      %v1895 = vpop.f32.mrb[0].mxu0
      %v1896 = vadd.f32 %v1735, %v1895
      %v1897 = vpop.f32.mrb[0].mxu0
      %1898 = vmatprep.mubr.bf16.mxu0 0
      %1899 = vmatmul.mubr.bf16.gmra.mrb[0].mxu0 %v859
      %v1900 = vpop.f32.mrb[0].mxu0
      %v1901 = vadd.f32 %v1740, %v1900
      %v1902 = vpop.f32.mrb[0].mxu0
      %v1903 = vpop.f32.mrb[0].mxu0
      %v1904 = vadd.f32 %v1743, %v1903
      %v1905 = vpop.f32.mrb[0].mxu0
      %1906 = vmatprep.mubr.bf16.mxu0 0
      %1907 = vmatmul.mubr.bf16.gmra.mrb[0].mxu0 %v862
      %v1908 = vpop.f32.mrb[0].mxu0
      %v1909 = vadd.f32 %v1748, %v1908
      %v1910 = vpop.f32.mrb[0].mxu0
      %v1911 = vpop.f32.mrb[0].mxu0
      %v1912 = vadd.f32 %v1751, %v1911
      %v1913 = vpop.f32.mrb[0].mxu0
      %1914 = vmatprep.mubr.bf16.mxu0 0
      %1915 = vmatmul.mubr.bf16.gmra.mrb[0].mxu0 %v865
      %v1916 = vpop.f32.mrb[0].mxu0
      %v1917 = vadd.f32 %v1756, %v1916
      %v1918 = vpop.f32.mrb[0].mxu0
      %v1919 = vpop.f32.mrb[0].mxu0
      %v1920 = vadd.f32 %v1759, %v1919
      %v1921 = vpop.f32.mrb[0].mxu0
      %1922 = vmatprep.mubr.bf16.mxu0 0
      %1923 = vmatmul.mubr.bf16.gmra.mrb[0].mxu0 %v868
      %v1924 = vpop.f32.mrb[0].mxu0
      %v1925 = vadd.f32 %v1764, %v1924
      %v1926 = vpop.f32.mrb[0].mxu0
      %v1927 = vpop.f32.mrb[0].mxu0
      %v1928 = vadd.f32 %v1767, %v1927
      %v1929 = vpop.f32.mrb[0].mxu0
      %1930 = vmatprep.mubr.bf16.mxu0 0
      %1931 = vmatmul.mubr.bf16.gmra.mrb[0].mxu0 %v871
      %v1932 = vpop.f32.mrb[0].mxu0
      %v1933 = vadd.f32 %v1772, %v1932
      %v1934 = vpop.f32.mrb[0].mxu0
      %v1935 = vpop.f32.mrb[0].mxu0
      %v1936 = vadd.f32 %v1775, %v1935
      %v1937 = vpop.f32.mrb[0].mxu0
      %1938 = vmatprep.mubr.bf16.mxu0 0
      %1939 = vmatmul.mubr.bf16.gmra.mrb[0].mxu0 %v874
      %v1940 = vpop.f32.mrb[0].mxu0
      %v1941 = vadd.f32 %v1780, %v1940
      %v1942 = vpop.f32.mrb[0].mxu0
      %v1943 = vpop.f32.mrb[0].mxu0
      %v1944 = vadd.f32 %v1783, %v1943
      %v1945 = vpop.f32.mrb[0].mxu0
      %1946 = vmatprep.mubr.bf16.mxu0 0
      %1947 = vmatmul.mubr.bf16.gmra.mrb[0].mxu0 %v877
      %v1948 = vpop.f32.mrb[0].mxu0
      %v1949 = vadd.f32 %v1788, %v1948
      %v1950 = vpop.f32.mrb[0].mxu0
      %v1951 = vpop.f32.mrb[0].mxu0
      %v1952 = vadd.f32 %v1791, %v1951
      %v1953 = vpop.f32.mrb[0].mxu0
      %1954 = vdwg.mxu0
      %s1955 = scalar_lea.vmem [#allocation2], 48
      %v1956 = vld [vmem:[%s1955] sm:$0xff]
      %v1957 = vld [vmem:[%s1955 + $0x8] sm:$0xff]
      %v1958 = vld [vmem:[%s1955 + $0x10] sm:$0xff]
      %v1959 = vld [vmem:[%s1955 + $0x18] sm:$0xff]
      %v1960 = vld [vmem:[%s1955 + $0x20] sm:$0xff]
      %v1961 = vld [vmem:[%s1955 + $0x28] sm:$0xff]
      %v1962 = vld [vmem:[%s1955 + $0x30] sm:$0xff]
      %v1963 = vld [vmem:[%s1955 + $0x38] sm:$0xff]
      %v1964 = vld [vmem:[%s1955 + $0x40] sm:$0xff]
      %v1965 = vld [vmem:[%s1955 + $0x48] sm:$0xff]
      %v1966 = vld [vmem:[%s1955 + $0x50] sm:$0xff]
      %v1967 = vld [vmem:[%s1955 + $0x58] sm:$0xff]
      %v1968 = vld [vmem:[%s1955 + $0x60] sm:$0xff]
      %v1969 = vld [vmem:[%s1955 + $0x68] sm:$0xff]
      %v1970 = vld [vmem:[%s1955 + $0x70] sm:$0xff]
      %v1971 = vld [vmem:[%s1955 + $0x78] sm:$0xff]
      %v1972 = vld [vmem:[%s1955 + $0x80] sm:$0xff]
      %v1973 = vld [vmem:[%s1955 + $0x88] sm:$0xff]
      %v1974 = vld [vmem:[%s1955 + $0x90] sm:$0xff]
      %v1975 = vld [vmem:[%s1955 + $0x98] sm:$0xff]
      %v1976 = vld [vmem:[%s1955 + $0xa0] sm:$0xff]
      %v1977 = vld [vmem:[%s1955 + $0xa8] sm:$0xff]
      %v1978 = vld [vmem:[%s1955 + $0xb0] sm:$0xff]
      %v1979 = vld [vmem:[%s1955 + $0xb8] sm:$0xff]
      %v1980 = vld [vmem:[%s1955 + $0xc0] sm:$0xff]
      %v1981 = vld [vmem:[%s1955 + $0xc8] sm:$0xff]
      %v1982 = vld [vmem:[%s1955 + $0xd0] sm:$0xff]
      %v1983 = vld [vmem:[%s1955 + $0xd8] sm:$0xff]
      %v1984 = vld [vmem:[%s1955 + $0xe0] sm:$0xff]
      %v1985 = vld [vmem:[%s1955 + $0xe8] sm:$0xff]
      %v1986 = vld [vmem:[%s1955 + $0xf0] sm:$0xff]
      %v1987 = vld [vmem:[%s1955 + $0xf8] sm:$0xff]
      %v1988 = vld [vmem:[%s1955 + $0x100] sm:$0xff]
      %v1989 = vld [vmem:[%s1955 + $0x108] sm:$0xff]
      %v1990 = vld [vmem:[%s1955 + $0x110] sm:$0xff]
      %v1991 = vld [vmem:[%s1955 + $0x118] sm:$0xff]
      %v1992 = vld [vmem:[%s1955 + $0x120] sm:$0xff]
      %v1993 = vld [vmem:[%s1955 + $0x128] sm:$0xff]
      %v1994 = vld [vmem:[%s1955 + $0x130] sm:$0xff]
      %v1995 = vld [vmem:[%s1955 + $0x138] sm:$0xff]
      %v1996 = vld [vmem:[%s1955 + $0x140] sm:$0xff]
      %v1997 = vld [vmem:[%s1955 + $0x148] sm:$0xff]
      %v1998 = vld [vmem:[%s1955 + $0x150] sm:$0xff]
      %v1999 = vld [vmem:[%s1955 + $0x158] sm:$0xff]
      %v2000 = vld [vmem:[%s1955 + $0x160] sm:$0xff]
      %v2001 = vld [vmem:[%s1955 + $0x168] sm:$0xff]
      %v2002 = vld [vmem:[%s1955 + $0x170] sm:$0xff]
      %v2003 = vld [vmem:[%s1955 + $0x178] sm:$0xff]
      %s2004 = scalar_lea.vmem %s3, 384
      %v2005 = vld [vmem:[%s2004] sm:$0xf]
      %v2006 = vld [vmem:[%s2004 + $0x4] sm:$0xf]
      %v2007 = vld [vmem:[%s2004 + $0x8] sm:$0xf]
      %v2008 = vld [vmem:[%s2004 + $0xc] sm:$0xf]
      %v2009 = vld [vmem:[%s2004 + $0x10] sm:$0xf]
      %v2010 = vld [vmem:[%s2004 + $0x14] sm:$0xf]
      %v2011 = vld [vmem:[%s2004 + $0x18] sm:$0xf]
      %v2012 = vld [vmem:[%s2004 + $0x1c] sm:$0xf]
      %v2013 = vld [vmem:[%s2004 + $0x20] sm:$0xf]
      %v2014 = vld [vmem:[%s2004 + $0x24] sm:$0xf]
      %v2015 = vld [vmem:[%s2004 + $0x28] sm:$0xf]
      %v2016 = vld [vmem:[%s2004 + $0x2c] sm:$0xf]
      %v2017 = vld [vmem:[%s2004 + $0x30] sm:$0xf]
      %v2018 = vld [vmem:[%s2004 + $0x34] sm:$0xf]
      %v2019 = vld [vmem:[%s2004 + $0x38] sm:$0xf]
      %v2020 = vld [vmem:[%s2004 + $0x3c] sm:$0xf]
      %v2021 = vld [vmem:[%s2004 + $0x40] sm:$0xf]
      %v2022 = vld [vmem:[%s2004 + $0x44] sm:$0xf]
      %v2023 = vld [vmem:[%s2004 + $0x48] sm:$0xf]
      %v2024 = vld [vmem:[%s2004 + $0x4c] sm:$0xf]
      %v2025 = vld [vmem:[%s2004 + $0x50] sm:$0xf]
      %v2026 = vld [vmem:[%s2004 + $0x54] sm:$0xf]
      %v2027 = vld [vmem:[%s2004 + $0x58] sm:$0xf]
      %v2028 = vld [vmem:[%s2004 + $0x5c] sm:$0xf]
      %v2029 = vld [vmem:[%s2004 + $0x60] sm:$0xf]
      %v2030 = vld [vmem:[%s2004 + $0x64] sm:$0xf]
      %v2031 = vld [vmem:[%s2004 + $0x68] sm:$0xf]
      %v2032 = vld [vmem:[%s2004 + $0x6c] sm:$0xf]
      %v2033 = vld [vmem:[%s2004 + $0x70] sm:$0xf]
      %v2034 = vld [vmem:[%s2004 + $0x74] sm:$0xf]
      %v2035 = vld [vmem:[%s2004 + $0x78] sm:$0xf]
      %v2036 = vld [vmem:[%s2004 + $0x7c] sm:$0xf]
      %v2037 = vld [vmem:[%s2004 + $0x80] sm:$0xf]
      %v2038 = vld [vmem:[%s2004 + $0x84] sm:$0xf]
      %v2039 = vld [vmem:[%s2004 + $0x88] sm:$0xf]
      %v2040 = vld [vmem:[%s2004 + $0x8c] sm:$0xf]
      %v2041 = vld [vmem:[%s2004 + $0x90] sm:$0xf]
      %v2042 = vld [vmem:[%s2004 + $0x94] sm:$0xf]
      %v2043 = vld [vmem:[%s2004 + $0x98] sm:$0xf]
      %v2044 = vld [vmem:[%s2004 + $0x9c] sm:$0xf]
      %v2045 = vld [vmem:[%s2004 + $0xa0] sm:$0xf]
      %v2046 = vld [vmem:[%s2004 + $0xa4] sm:$0xf]
      %v2047 = vld [vmem:[%s2004 + $0xa8] sm:$0xf]
      %v2048 = vld [vmem:[%s2004 + $0xac] sm:$0xf]
      %v2049 = vld [vmem:[%s2004 + $0xb0] sm:$0xf]
      %v2050 = vld [vmem:[%s2004 + $0xb4] sm:$0xf]
      %v2051 = vld [vmem:[%s2004 + $0xb8] sm:$0xf]
      %v2052 = vld [vmem:[%s2004 + $0xbc] sm:$0xf]
      %v2101 = vunpack.c.l.b16 %v2005
      %v2102 = vunpack.c.l.b16 %v2006
      %v2103 = vunpack.c.l.b16 %v2007
      %v2104 = vunpack.c.l.b16 %v2008
      %v2105 = vunpack.c.l.b16 %v2009
      %v2106 = vunpack.c.l.b16 %v2010
      %v2107 = vunpack.c.l.b16 %v2011
      %v2108 = vunpack.c.l.b16 %v2012
      %v2109 = vunpack.c.l.b16 %v2013
      %v2110 = vunpack.c.l.b16 %v2014
      %v2111 = vunpack.c.l.b16 %v2015
      %v2112 = vunpack.c.l.b16 %v2016
      %v2113 = vunpack.c.l.b16 %v2017
      %v2114 = vunpack.c.l.b16 %v2018
      %v2115 = vunpack.c.l.b16 %v2019
      %v2116 = vunpack.c.l.b16 %v2020
      %v2117 = vunpack.c.l.b16 %v2021
      %v2118 = vunpack.c.l.b16 %v2022
      %v2119 = vunpack.c.l.b16 %v2023
      %v2120 = vunpack.c.l.b16 %v2024
      %v2121 = vunpack.c.l.b16 %v2025
      %v2122 = vunpack.c.l.b16 %v2026
      %v2123 = vunpack.c.l.b16 %v2027
      %v2124 = vunpack.c.l.b16 %v2028
      %v2125 = vunpack.c.l.b16 %v2029
      %v2126 = vunpack.c.l.b16 %v2030
      %v2127 = vunpack.c.l.b16 %v2031
      %v2128 = vunpack.c.l.b16 %v2032
      %v2129 = vunpack.c.l.b16 %v2033
      %v2130 = vunpack.c.l.b16 %v2034
      %v2131 = vunpack.c.l.b16 %v2035
      %v2132 = vunpack.c.l.b16 %v2036
      %v2133 = vunpack.c.l.b16 %v2037
      %v2134 = vunpack.c.l.b16 %v2038
      %v2135 = vunpack.c.l.b16 %v2039
      %v2136 = vunpack.c.l.b16 %v2040
      %v2137 = vunpack.c.l.b16 %v2041
      %v2138 = vunpack.c.l.b16 %v2042
      %v2139 = vunpack.c.l.b16 %v2043
      %v2140 = vunpack.c.l.b16 %v2044
      %v2141 = vunpack.c.l.b16 %v2045
      %v2142 = vunpack.c.l.b16 %v2046
      %v2143 = vunpack.c.l.b16 %v2047
      %v2144 = vunpack.c.l.b16 %v2048
      %v2145 = vunpack.c.l.b16 %v2049
      %v2146 = vunpack.c.l.b16 %v2050
      %v2147 = vunpack.c.l.b16 %v2051
      %v2148 = vunpack.c.l.b16 %v2052
      %v2149 = vpack.c.b16 %v2102, %v2101
      %v2150 = vpack.c.b16 %v2104, %v2103
      %v2151 = vpack.c.b16 %v2106, %v2105
      %v2152 = vpack.c.b16 %v2108, %v2107
      %v2153 = vpack.c.b16 %v2110, %v2109
      %v2154 = vpack.c.b16 %v2112, %v2111
      %v2155 = vpack.c.b16 %v2114, %v2113
      %v2156 = vpack.c.b16 %v2116, %v2115
      %v2157 = vpack.c.b16 %v2118, %v2117
      %v2158 = vpack.c.b16 %v2120, %v2119
      %v2159 = vpack.c.b16 %v2122, %v2121
      %v2160 = vpack.c.b16 %v2124, %v2123
      %v2161 = vpack.c.b16 %v2126, %v2125
      %v2162 = vpack.c.b16 %v2128, %v2127
      %v2163 = vpack.c.b16 %v2130, %v2129
      %v2164 = vpack.c.b16 %v2132, %v2131
      %v2165 = vpack.c.b16 %v2134, %v2133
      %v2166 = vpack.c.b16 %v2136, %v2135
      %v2167 = vpack.c.b16 %v2138, %v2137
      %v2168 = vpack.c.b16 %v2140, %v2139
      %v2169 = vpack.c.b16 %v2142, %v2141
      %v2170 = vpack.c.b16 %v2144, %v2143
      %v2171 = vpack.c.b16 %v2146, %v2145
      %v2172 = vpack.c.b16 %v2148, %v2147
      %2197 = vmatprep.subr.bf16.mxu0 0
      %2198 = vmatpush1.bf16.msra.mxu0 %v2149
      %2199 = vmatprep.subr.bf16.mxu0 0
      %2200 = vmatpush1.bf16.msra.mxu0 %v2150
      %2201 = vmatprep.subr.bf16.mxu0 0
      %2202 = vmatpush1.bf16.msra.mxu0 %v2151
      %2203 = vmatprep.subr.bf16.mxu0 0
      %2204 = vmatpush1.bf16.msra.mxu0 %v2152
      %2205 = vmatprep.subr.bf16.mxu0 0
      %2206 = vmatpush1.bf16.msra.mxu0 %v2153
      %2207 = vmatprep.subr.bf16.mxu0 0
      %2208 = vmatpush1.bf16.msra.mxu0 %v2154
      %2209 = vmatprep.subr.bf16.mxu0 0
      %2210 = vmatpush1.bf16.msra.mxu0 %v2155
      %2211 = vmatprep.subr.bf16.mxu0 0
      %2212 = vmatpush1.bf16.msra.mxu0 %v2156
      %2213 = vmatprep.subr.bf16.mxu0 0
      %2214 = vmatpush1.bf16.msra.mxu0 %v2157
      %2215 = vmatprep.subr.bf16.mxu0 0
      %2216 = vmatpush1.bf16.msra.mxu0 %v2158
      %2217 = vmatprep.subr.bf16.mxu0 0
      %2218 = vmatpush1.bf16.msra.mxu0 %v2159
      %2219 = vmatprep.subr.bf16.mxu0 0
      %2220 = vmatpush1.bf16.msra.mxu0 %v2160
      %2221 = vmatprep.subr.bf16.mxu0 0
      %2222 = vmatpush1.bf16.msra.mxu0 %v2161
      %2223 = vmatprep.subr.bf16.mxu0 0
      %2224 = vmatpush1.bf16.msra.mxu0 %v2162
      %2225 = vmatprep.subr.bf16.mxu0 0
      %2226 = vmatpush1.bf16.msra.mxu0 %v2163
      %2227 = vmatprep.subr.bf16.mxu0 0
      %2228 = vmatpush1.bf16.msra.mxu0 %v2164
      %2229 = vmatprep.mubr.bf16.mxu0 %v1957
      %2230 = vmatmul.mubr.bf16.gmra.mrb[0].mxu0 %v1956
      %v2231 = vpop.f32.mrb[0].mxu0
      %v2232 = vadd.f32 0.0, %v2231
      %v2233 = vpop.f32.mrb[0].mxu0
      %v2234 = vpop.f32.mrb[0].mxu0
      %v2235 = vadd.f32 0.0, %v2234
      %v2236 = vpop.f32.mrb[0].mxu0
      %2237 = vmatprep.mubr.bf16.mxu0 %v1960
      %2238 = vmatmul.mubr.bf16.gmra.mrb[0].mxu0 %v1959
      %v2239 = vpop.f32.mrb[0].mxu0
      %v2240 = vadd.f32 0.0, %v2239
      %v2241 = vpop.f32.mrb[0].mxu0
      %v2242 = vpop.f32.mrb[0].mxu0
      %v2243 = vadd.f32 0.0, %v2242
      %v2244 = vpop.f32.mrb[0].mxu0
      %2245 = vmatprep.mubr.bf16.mxu0 %v1963
      %2246 = vmatmul.mubr.bf16.gmra.mrb[0].mxu0 %v1962
      %v2247 = vpop.f32.mrb[0].mxu0
      %v2248 = vadd.f32 0.0, %v2247
      %v2249 = vpop.f32.mrb[0].mxu0
      %v2250 = vpop.f32.mrb[0].mxu0
      %v2251 = vadd.f32 0.0, %v2250
      %v2252 = vpop.f32.mrb[0].mxu0
      %2253 = vmatprep.mubr.bf16.mxu0 %v1966
      %2254 = vmatmul.mubr.bf16.gmra.mrb[0].mxu0 %v1965
      %v2255 = vpop.f32.mrb[0].mxu0
      %v2256 = vadd.f32 0.0, %v2255
      %v2257 = vpop.f32.mrb[0].mxu0
      %v2258 = vpop.f32.mrb[0].mxu0
      %v2259 = vadd.f32 0.0, %v2258
      %v2260 = vpop.f32.mrb[0].mxu0
      %2261 = vmatprep.mubr.bf16.mxu0 %v1969
      %2262 = vmatmul.mubr.bf16.gmra.mrb[0].mxu0 %v1968
      %v2263 = vpop.f32.mrb[0].mxu0
      %v2264 = vadd.f32 0.0, %v2263
      %v2265 = vpop.f32.mrb[0].mxu0
      %v2266 = vpop.f32.mrb[0].mxu0
      %v2267 = vadd.f32 0.0, %v2266
      %v2268 = vpop.f32.mrb[0].mxu0
      %2269 = vmatprep.mubr.bf16.mxu0 %v1972
      %2270 = vmatmul.mubr.bf16.gmra.mrb[0].mxu0 %v1971
      %v2271 = vpop.f32.mrb[0].mxu0
      %v2272 = vadd.f32 0.0, %v2271
      %v2273 = vpop.f32.mrb[0].mxu0
      %v2274 = vpop.f32.mrb[0].mxu0
      %v2275 = vadd.f32 0.0, %v2274
      %v2276 = vpop.f32.mrb[0].mxu0
      %2277 = vmatprep.mubr.bf16.mxu0 %v1975
      %2278 = vmatmul.mubr.bf16.gmra.mrb[0].mxu0 %v1974
      %v2279 = vpop.f32.mrb[0].mxu0
      %v2280 = vadd.f32 0.0, %v2279
      %v2281 = vpop.f32.mrb[0].mxu0
      %v2282 = vpop.f32.mrb[0].mxu0
      %v2283 = vadd.f32 0.0, %v2282
      %v2284 = vpop.f32.mrb[0].mxu0
      %2285 = vmatprep.mubr.bf16.mxu0 %v1978
      %2286 = vmatmul.mubr.bf16.gmra.mrb[0].mxu0 %v1977
      %v2287 = vpop.f32.mrb[0].mxu0
      %v2288 = vadd.f32 0.0, %v2287
      %v2289 = vpop.f32.mrb[0].mxu0
      %v2290 = vpop.f32.mrb[0].mxu0
      %v2291 = vadd.f32 0.0, %v2290
      %v2292 = vpop.f32.mrb[0].mxu0
      %2293 = vmatprep.mubr.bf16.mxu0 %v1981
      %2294 = vmatmul.mubr.bf16.gmra.mrb[0].mxu0 %v1980
      %v2295 = vpop.f32.mrb[0].mxu0
      %v2296 = vadd.f32 0.0, %v2295
      %v2297 = vpop.f32.mrb[0].mxu0
      %v2298 = vpop.f32.mrb[0].mxu0
      %v2299 = vadd.f32 0.0, %v2298
      %v2300 = vpop.f32.mrb[0].mxu0
      %2301 = vmatprep.mubr.bf16.mxu0 %v1984
      %2302 = vmatmul.mubr.bf16.gmra.mrb[0].mxu0 %v1983
      %v2303 = vpop.f32.mrb[0].mxu0
      %v2304 = vadd.f32 0.0, %v2303
      %v2305 = vpop.f32.mrb[0].mxu0
      %v2306 = vpop.f32.mrb[0].mxu0
      %v2307 = vadd.f32 0.0, %v2306
      %v2308 = vpop.f32.mrb[0].mxu0
      %2309 = vmatprep.mubr.bf16.mxu0 %v1987
      %2310 = vmatmul.mubr.bf16.gmra.mrb[0].mxu0 %v1986
      %v2311 = vpop.f32.mrb[0].mxu0
      %v2312 = vadd.f32 0.0, %v2311
      %v2313 = vpop.f32.mrb[0].mxu0
      %v2314 = vpop.f32.mrb[0].mxu0
      %v2315 = vadd.f32 0.0, %v2314
      %v2316 = vpop.f32.mrb[0].mxu0
      %2317 = vmatprep.mubr.bf16.mxu0 %v1990
      %2318 = vmatmul.mubr.bf16.gmra.mrb[0].mxu0 %v1989
      %v2319 = vpop.f32.mrb[0].mxu0
      %v2320 = vadd.f32 0.0, %v2319
      %v2321 = vpop.f32.mrb[0].mxu0
      %v2322 = vpop.f32.mrb[0].mxu0
      %v2323 = vadd.f32 0.0, %v2322
      %v2324 = vpop.f32.mrb[0].mxu0
      %2325 = vmatprep.mubr.bf16.mxu0 %v1993
      %2326 = vmatmul.mubr.bf16.gmra.mrb[0].mxu0 %v1992
      %v2327 = vpop.f32.mrb[0].mxu0
      %v2328 = vadd.f32 0.0, %v2327
      %v2329 = vpop.f32.mrb[0].mxu0
      %v2330 = vpop.f32.mrb[0].mxu0
      %v2331 = vadd.f32 0.0, %v2330
      %v2332 = vpop.f32.mrb[0].mxu0
      %2333 = vmatprep.mubr.bf16.mxu0 %v1996
      %2334 = vmatmul.mubr.bf16.gmra.mrb[0].mxu0 %v1995
      %v2335 = vpop.f32.mrb[0].mxu0
      %v2336 = vadd.f32 0.0, %v2335
      %v2337 = vpop.f32.mrb[0].mxu0
      %v2338 = vpop.f32.mrb[0].mxu0
      %v2339 = vadd.f32 0.0, %v2338
      %v2340 = vpop.f32.mrb[0].mxu0
      %2341 = vmatprep.mubr.bf16.mxu0 %v1999
      %2342 = vmatmul.mubr.bf16.gmra.mrb[0].mxu0 %v1998
      %v2343 = vpop.f32.mrb[0].mxu0
      %v2344 = vadd.f32 0.0, %v2343
      %v2345 = vpop.f32.mrb[0].mxu0
      %v2346 = vpop.f32.mrb[0].mxu0
      %v2347 = vadd.f32 0.0, %v2346
      %v2348 = vpop.f32.mrb[0].mxu0
      %2349 = vmatprep.mubr.bf16.mxu0 %v2002
      %2350 = vmatmul.mubr.bf16.gmra.mrb[0].mxu0 %v2001
      %v2351 = vpop.f32.mrb[0].mxu0
      %v2352 = vadd.f32 0.0, %v2351
      %v2353 = vpop.f32.mrb[0].mxu0
      %v2354 = vpop.f32.mrb[0].mxu0
      %v2355 = vadd.f32 0.0, %v2354
      %v2356 = vpop.f32.mrb[0].mxu0
      %2357 = vdwg.mxu0
      %2358 = vmatprep.subr.bf16.mxu0 0
      %2359 = vmatpush1.bf16.msra.mxu0 %v2165
      %2360 = vmatprep.subr.bf16.mxu0 0
      %2361 = vmatpush1.bf16.msra.mxu0 %v2166
      %2362 = vmatprep.subr.bf16.mxu0 0
      %2363 = vmatpush1.bf16.msra.mxu0 %v2167
      %2364 = vmatprep.subr.bf16.mxu0 0
      %2365 = vmatpush1.bf16.msra.mxu0 %v2168
      %2366 = vmatprep.subr.bf16.mxu0 0
      %2367 = vmatpush1.bf16.msra.mxu0 %v2169
      %2368 = vmatprep.subr.bf16.mxu0 0
      %2369 = vmatpush1.bf16.msra.mxu0 %v2170
      %2370 = vmatprep.subr.bf16.mxu0 0
      %2371 = vmatpush1.bf16.msra.mxu0 %v2171
      %2372 = vmatprep.subr.bf16.mxu0 0
      %2373 = vmatpush1.bf16.msra.mxu0 %v2172
      %2374 = vmatprep.subr.bf16.mxu0 0
      %2375 = vmatpush1.bf16.msra.mxu0 0
      %2376 = vmatprep.subr.bf16.mxu0 0
      %2377 = vmatpush1.bf16.msra.mxu0 0
      %2378 = vmatprep.subr.bf16.mxu0 0
      %2379 = vmatpush1.bf16.msra.mxu0 0
      %2380 = vmatprep.subr.bf16.mxu0 0
      %2381 = vmatpush1.bf16.msra.mxu0 0
      %2382 = vmatprep.subr.bf16.mxu0 0
      %2383 = vmatpush1.bf16.msra.mxu0 0
      %2384 = vmatprep.subr.bf16.mxu0 0
      %2385 = vmatpush1.bf16.msra.mxu0 0
      %2386 = vmatprep.subr.bf16.mxu0 0
      %2387 = vmatpush1.bf16.msra.mxu0 0
      %2388 = vmatprep.subr.bf16.mxu0 0
      %2389 = vmatpush1.bf16.msra.mxu0 0
      %2390 = vmatprep.mubr.bf16.mxu0 0
      %2391 = vmatmul.mubr.bf16.gmra.mrb[0].mxu0 %v1958
      %v2392 = vpop.f32.mrb[0].mxu0
      %v2393 = vadd.f32 %v2232, %v2392
      %v2394 = vpop.f32.mrb[0].mxu0
      %v2395 = vpop.f32.mrb[0].mxu0
      %v2396 = vadd.f32 %v2235, %v2395
      %v2397 = vpop.f32.mrb[0].mxu0
      %2398 = vmatprep.mubr.bf16.mxu0 0
      %2399 = vmatmul.mubr.bf16.gmra.mrb[0].mxu0 %v1961
      %v2400 = vpop.f32.mrb[0].mxu0
      %v2401 = vadd.f32 %v2240, %v2400
      %v2402 = vpop.f32.mrb[0].mxu0
      %v2403 = vpop.f32.mrb[0].mxu0
      %v2404 = vadd.f32 %v2243, %v2403
      %v2405 = vpop.f32.mrb[0].mxu0
      %2406 = vmatprep.mubr.bf16.mxu0 0
      %2407 = vmatmul.mubr.bf16.gmra.mrb[0].mxu0 %v1964
      %v2408 = vpop.f32.mrb[0].mxu0
      %v2409 = vadd.f32 %v2248, %v2408
      %v2410 = vpop.f32.mrb[0].mxu0
      %v2411 = vpop.f32.mrb[0].mxu0
      %v2412 = vadd.f32 %v2251, %v2411
      %v2413 = vpop.f32.mrb[0].mxu0
      %2414 = vmatprep.mubr.bf16.mxu0 0
      %2415 = vmatmul.mubr.bf16.gmra.mrb[0].mxu0 %v1967
      %v2416 = vpop.f32.mrb[0].mxu0
      %v2417 = vadd.f32 %v2256, %v2416
      %v2418 = vpop.f32.mrb[0].mxu0
      %v2419 = vpop.f32.mrb[0].mxu0
      %v2420 = vadd.f32 %v2259, %v2419
      %v2421 = vpop.f32.mrb[0].mxu0
      %2422 = vmatprep.mubr.bf16.mxu0 0
      %2423 = vmatmul.mubr.bf16.gmra.mrb[0].mxu0 %v1970
      %v2424 = vpop.f32.mrb[0].mxu0
      %v2425 = vadd.f32 %v2264, %v2424
      %v2426 = vpop.f32.mrb[0].mxu0
      %v2427 = vpop.f32.mrb[0].mxu0
      %v2428 = vadd.f32 %v2267, %v2427
      %v2429 = vpop.f32.mrb[0].mxu0
      %2430 = vmatprep.mubr.bf16.mxu0 0
      %2431 = vmatmul.mubr.bf16.gmra.mrb[0].mxu0 %v1973
      %v2432 = vpop.f32.mrb[0].mxu0
      %v2433 = vadd.f32 %v2272, %v2432
      %v2434 = vpop.f32.mrb[0].mxu0
      %v2435 = vpop.f32.mrb[0].mxu0
      %v2436 = vadd.f32 %v2275, %v2435
      %v2437 = vpop.f32.mrb[0].mxu0
      %2438 = vmatprep.mubr.bf16.mxu0 0
      %2439 = vmatmul.mubr.bf16.gmra.mrb[0].mxu0 %v1976
      %v2440 = vpop.f32.mrb[0].mxu0
      %v2441 = vadd.f32 %v2280, %v2440
      %v2442 = vpop.f32.mrb[0].mxu0
      %v2443 = vpop.f32.mrb[0].mxu0
      %v2444 = vadd.f32 %v2283, %v2443
      %v2445 = vpop.f32.mrb[0].mxu0
      %2446 = vmatprep.mubr.bf16.mxu0 0
      %2447 = vmatmul.mubr.bf16.gmra.mrb[0].mxu0 %v1979
      %v2448 = vpop.f32.mrb[0].mxu0
      %v2449 = vadd.f32 %v2288, %v2448
      %v2450 = vpop.f32.mrb[0].mxu0
      %v2451 = vpop.f32.mrb[0].mxu0
      %v2452 = vadd.f32 %v2291, %v2451
      %v2453 = vpop.f32.mrb[0].mxu0
      %2454 = vmatprep.mubr.bf16.mxu0 0
      %2455 = vmatmul.mubr.bf16.gmra.mrb[0].mxu0 %v1982
      %v2456 = vpop.f32.mrb[0].mxu0
      %v2457 = vadd.f32 %v2296, %v2456
      %v2458 = vpop.f32.mrb[0].mxu0
      %v2459 = vpop.f32.mrb[0].mxu0
      %v2460 = vadd.f32 %v2299, %v2459
      %v2461 = vpop.f32.mrb[0].mxu0
      %2462 = vmatprep.mubr.bf16.mxu0 0
      %2463 = vmatmul.mubr.bf16.gmra.mrb[0].mxu0 %v1985
      %v2464 = vpop.f32.mrb[0].mxu0
      %v2465 = vadd.f32 %v2304, %v2464
      %v2466 = vpop.f32.mrb[0].mxu0
      %v2467 = vpop.f32.mrb[0].mxu0
      %v2468 = vadd.f32 %v2307, %v2467
      %v2469 = vpop.f32.mrb[0].mxu0
      %2470 = vmatprep.mubr.bf16.mxu0 0
      %2471 = vmatmul.mubr.bf16.gmra.mrb[0].mxu0 %v1988
      %v2472 = vpop.f32.mrb[0].mxu0
      %v2473 = vadd.f32 %v2312, %v2472
      %v2474 = vpop.f32.mrb[0].mxu0
      %v2475 = vpop.f32.mrb[0].mxu0
      %v2476 = vadd.f32 %v2315, %v2475
      %v2477 = vpop.f32.mrb[0].mxu0
      %2478 = vmatprep.mubr.bf16.mxu0 0
      %2479 = vmatmul.mubr.bf16.gmra.mrb[0].mxu0 %v1991
      %v2480 = vpop.f32.mrb[0].mxu0
      %v2481 = vadd.f32 %v2320, %v2480
      %v2482 = vpop.f32.mrb[0].mxu0
      %v2483 = vpop.f32.mrb[0].mxu0
      %v2484 = vadd.f32 %v2323, %v2483
      %v2485 = vpop.f32.mrb[0].mxu0
      %2486 = vmatprep.mubr.bf16.mxu0 0
      %2487 = vmatmul.mubr.bf16.gmra.mrb[0].mxu0 %v1994
      %v2488 = vpop.f32.mrb[0].mxu0
      %v2489 = vadd.f32 %v2328, %v2488
      %v2490 = vpop.f32.mrb[0].mxu0
      %v2491 = vpop.f32.mrb[0].mxu0
      %v2492 = vadd.f32 %v2331, %v2491
      %v2493 = vpop.f32.mrb[0].mxu0
      %2494 = vmatprep.mubr.bf16.mxu0 0
      %2495 = vmatmul.mubr.bf16.gmra.mrb[0].mxu0 %v1997
      %v2496 = vpop.f32.mrb[0].mxu0
      %v2497 = vadd.f32 %v2336, %v2496
      %v2498 = vpop.f32.mrb[0].mxu0
      %v2499 = vpop.f32.mrb[0].mxu0
      %v2500 = vadd.f32 %v2339, %v2499
      %v2501 = vpop.f32.mrb[0].mxu0
      %2502 = vmatprep.mubr.bf16.mxu0 0
      %2503 = vmatmul.mubr.bf16.gmra.mrb[0].mxu0 %v2000
      %v2504 = vpop.f32.mrb[0].mxu0
      %v2505 = vadd.f32 %v2344, %v2504
      %v2506 = vpop.f32.mrb[0].mxu0
      %v2507 = vpop.f32.mrb[0].mxu0
      %v2508 = vadd.f32 %v2347, %v2507
      %v2509 = vpop.f32.mrb[0].mxu0
      %2510 = vmatprep.mubr.bf16.mxu0 0
      %2511 = vmatmul.mubr.bf16.gmra.mrb[0].mxu0 %v2003
      %v2512 = vpop.f32.mrb[0].mxu0
      %v2513 = vadd.f32 %v2352, %v2512
      %v2514 = vpop.f32.mrb[0].mxu0
      %v2515 = vpop.f32.mrb[0].mxu0
      %v2516 = vadd.f32 %v2355, %v2515
      %v2517 = vpop.f32.mrb[0].mxu0
      %2518 = vdwg.mxu0
      %v2519 = vadd.f32 %v1829, %v2393
      %v2520 = vadd.f32 %v1832, %v2396
      %v2521 = vadd.f32 %v1837, %v2401
      %v2522 = vadd.f32 %v1840, %v2404
      %v2523 = vadd.f32 %v1845, %v2409
      %v2524 = vadd.f32 %v1848, %v2412
      %v2525 = vadd.f32 %v1853, %v2417
      %v2526 = vadd.f32 %v1856, %v2420
      %v2527 = vadd.f32 %v1861, %v2425
      %v2528 = vadd.f32 %v1864, %v2428
      %v2529 = vadd.f32 %v1869, %v2433
      %v2530 = vadd.f32 %v1872, %v2436
      %v2531 = vadd.f32 %v1877, %v2441
      %v2532 = vadd.f32 %v1880, %v2444
      %v2533 = vadd.f32 %v1885, %v2449
      %v2534 = vadd.f32 %v1888, %v2452
      %v2535 = vadd.f32 %v1893, %v2457
      %v2536 = vadd.f32 %v1896, %v2460
      %v2537 = vadd.f32 %v1901, %v2465
      %v2538 = vadd.f32 %v1904, %v2468
      %v2539 = vadd.f32 %v1909, %v2473
      %v2540 = vadd.f32 %v1912, %v2476
      %v2541 = vadd.f32 %v1917, %v2481
      %v2542 = vadd.f32 %v1920, %v2484
      %v2543 = vadd.f32 %v1925, %v2489
      %v2544 = vadd.f32 %v1928, %v2492
      %v2545 = vadd.f32 %v1933, %v2497
      %v2546 = vadd.f32 %v1936, %v2500
      %v2547 = vadd.f32 %v1941, %v2505
      %v2548 = vadd.f32 %v1944, %v2508
      %v2549 = vadd.f32 %v1949, %v2513
      %v2550 = vadd.f32 %v1952, %v2516
      %v2551 = vpack.c.bf16 %v2520, %v2519
      %v2552 = vpack.c.bf16 %v2522, %v2521
      %v2553 = vpack.c.bf16 %v2524, %v2523
      %v2554 = vpack.c.bf16 %v2526, %v2525
      %v2555 = vpack.c.bf16 %v2528, %v2527
      %v2556 = vpack.c.bf16 %v2530, %v2529
      %v2557 = vpack.c.bf16 %v2532, %v2531
      %v2558 = vpack.c.bf16 %v2534, %v2533
      %v2559 = vpack.c.bf16 %v2536, %v2535
      %v2560 = vpack.c.bf16 %v2538, %v2537
      %v2561 = vpack.c.bf16 %v2540, %v2539
      %v2562 = vpack.c.bf16 %v2542, %v2541
      %v2563 = vpack.c.bf16 %v2544, %v2543
      %v2564 = vpack.c.bf16 %v2546, %v2545
      %v2565 = vpack.c.bf16 %v2548, %v2547
      %v2566 = vpack.c.bf16 %v2550, %v2549
      %v2583 = vunpack.c.l.b16 %v2551
      %v2584 = vunpack.c.h.b16 %v2551
      %v2585 = vunpack.c.l.b16 %v2552
      %v2586 = vunpack.c.h.b16 %v2552
      %v2587 = vunpack.c.l.b16 %v2553
      %v2588 = vunpack.c.h.b16 %v2553
      %v2589 = vunpack.c.l.b16 %v2554
      %v2590 = vunpack.c.h.b16 %v2554
      %v2591 = vunpack.c.l.b16 %v2555
      %v2592 = vunpack.c.h.b16 %v2555
      %v2593 = vunpack.c.l.b16 %v2556
      %v2594 = vunpack.c.h.b16 %v2556
      %v2595 = vunpack.c.l.b16 %v2557
      %v2596 = vunpack.c.h.b16 %v2557
      %v2597 = vunpack.c.l.b16 %v2558
      %v2598 = vunpack.c.h.b16 %v2558
      %v2599 = vunpack.c.l.b16 %v2559
      %v2600 = vunpack.c.h.b16 %v2559
      %v2601 = vunpack.c.l.b16 %v2560
      %v2602 = vunpack.c.h.b16 %v2560
      %v2603 = vunpack.c.l.b16 %v2561
      %v2604 = vunpack.c.h.b16 %v2561
      %v2605 = vunpack.c.l.b16 %v2562
      %v2606 = vunpack.c.h.b16 %v2562
      %v2607 = vunpack.c.l.b16 %v2563
      %v2608 = vunpack.c.h.b16 %v2563
      %v2609 = vunpack.c.l.b16 %v2564
      %v2610 = vunpack.c.h.b16 %v2564
      %v2611 = vunpack.c.l.b16 %v2565
      %v2612 = vunpack.c.h.b16 %v2565
      %v2613 = vunpack.c.l.b16 %v2566
      %v2614 = vunpack.c.h.b16 %v2566
      %v2615 = vpack.c.b16 %v2583, %v2583
      %v2616 = vpack.c.b16 %v2584, %v2584
      %v2617 = vpack.c.b16 %v2585, %v2585
      %v2618 = vpack.c.b16 %v2586, %v2586
      %v2619 = vpack.c.b16 %v2587, %v2587
      %v2620 = vpack.c.b16 %v2588, %v2588
      %v2621 = vpack.c.b16 %v2589, %v2589
      %v2622 = vpack.c.b16 %v2590, %v2590
      %v2623 = vpack.c.b16 %v2591, %v2591
      %v2624 = vpack.c.b16 %v2592, %v2592
      %v2625 = vpack.c.b16 %v2593, %v2593
      %v2626 = vpack.c.b16 %v2594, %v2594
      %v2627 = vpack.c.b16 %v2595, %v2595
      %v2628 = vpack.c.b16 %v2596, %v2596
      %v2629 = vpack.c.b16 %v2597, %v2597
      %v2630 = vpack.c.b16 %v2598, %v2598
      %v2631 = vpack.c.b16 %v2599, %v2599
      %v2632 = vpack.c.b16 %v2600, %v2600
      %v2633 = vpack.c.b16 %v2601, %v2601
      %v2634 = vpack.c.b16 %v2602, %v2602
      %v2635 = vpack.c.b16 %v2603, %v2603
      %v2636 = vpack.c.b16 %v2604, %v2604
      %v2637 = vpack.c.b16 %v2605, %v2605
      %v2638 = vpack.c.b16 %v2606, %v2606
      %v2639 = vpack.c.b16 %v2607, %v2607
      %v2640 = vpack.c.b16 %v2608, %v2608
      %v2641 = vpack.c.b16 %v2609, %v2609
      %v2642 = vpack.c.b16 %v2610, %v2610
      %v2643 = vpack.c.b16 %v2611, %v2611
      %v2644 = vpack.c.b16 %v2612, %v2612
      %v2645 = vpack.c.b16 %v2613, %v2613
      %v2646 = vpack.c.b16 %v2614, %v2614
      %2679 = vst [vmem:[%s231] sm:$0xf] %v2615
      %2680 = vst [vmem:[%s231 + $0x4] sm:$0xf] %v2616
      %2681 = vst [vmem:[%s231 + $0x8] sm:$0xf] %v2617
      %2682 = vst [vmem:[%s231 + $0xc] sm:$0xf] %v2618
      %2683 = vst [vmem:[%s231 + $0x10] sm:$0xf] %v2619
      %2684 = vst [vmem:[%s231 + $0x14] sm:$0xf] %v2620
      %2685 = vst [vmem:[%s231 + $0x18] sm:$0xf] %v2621
      %2686 = vst [vmem:[%s231 + $0x1c] sm:$0xf] %v2622
      %2687 = vst [vmem:[%s231 + $0x20] sm:$0xf] %v2623
      %2688 = vst [vmem:[%s231 + $0x24] sm:$0xf] %v2624
      %2689 = vst [vmem:[%s231 + $0x28] sm:$0xf] %v2625
      %2690 = vst [vmem:[%s231 + $0x2c] sm:$0xf] %v2626
      %2691 = vst [vmem:[%s231 + $0x30] sm:$0xf] %v2627
      %2692 = vst [vmem:[%s231 + $0x34] sm:$0xf] %v2628
      %2693 = vst [vmem:[%s231 + $0x38] sm:$0xf] %v2629
      %2694 = vst [vmem:[%s231 + $0x3c] sm:$0xf] %v2630
      %2695 = vst [vmem:[%s231 + $0x40] sm:$0xf] %v2631
      %2696 = vst [vmem:[%s231 + $0x44] sm:$0xf] %v2632
      %2697 = vst [vmem:[%s231 + $0x48] sm:$0xf] %v2633
      %2698 = vst [vmem:[%s231 + $0x4c] sm:$0xf] %v2634
      %2699 = vst [vmem:[%s231 + $0x50] sm:$0xf] %v2635
      %2700 = vst [vmem:[%s231 + $0x54] sm:$0xf] %v2636
      %2701 = vst [vmem:[%s231 + $0x58] sm:$0xf] %v2637
      %2702 = vst [vmem:[%s231 + $0x5c] sm:$0xf] %v2638
      %2703 = vst [vmem:[%s231 + $0x60] sm:$0xf] %v2639
      %2704 = vst [vmem:[%s231 + $0x64] sm:$0xf] %v2640
      %2705 = vst [vmem:[%s231 + $0x68] sm:$0xf] %v2641
      %2706 = vst [vmem:[%s231 + $0x6c] sm:$0xf] %v2642
      %2707 = vst [vmem:[%s231 + $0x70] sm:$0xf] %v2643
      %2708 = vst [vmem:[%s231 + $0x74] sm:$0xf] %v2644
      %2709 = vst [vmem:[%s231 + $0x78] sm:$0xf] %v2645
      %2710 = vst [vmem:[%s231 + $0x7c] sm:$0xf] %v2646
      %v2711 = vadd.f32 %v2519, %v2520
      %v2712 = vadd.f32 %v2711, %v2521
      %v2713 = vadd.f32 %v2712, %v2522
      %v2714 = vadd.f32 %v2713, %v2523
      %v2715 = vadd.f32 %v2714, %v2524
      %v2716 = vadd.f32 %v2715, %v2525
      %v2717 = vadd.f32 %v2716, %v2526
      %v2718 = vadd.f32 %v2717, %v2527
      %v2719 = vadd.f32 %v2718, %v2528
      %v2720 = vadd.f32 %v2719, %v2529
      %v2721 = vadd.f32 %v2720, %v2530
      %v2722 = vadd.f32 %v2721, %v2531
      %v2723 = vadd.f32 %v2722, %v2532
      %v2724 = vadd.f32 %v2723, %v2533
      %v2725 = vadd.f32 %v2724, %v2534
      %v2726 = vadd.f32 %v2725, %v2535
      %v2727 = vadd.f32 %v2726, %v2536
      %v2728 = vadd.f32 %v2727, %v2537
      %v2729 = vadd.f32 %v2728, %v2538
      %v2730 = vadd.f32 %v2729, %v2539
      %v2731 = vadd.f32 %v2730, %v2540
      %v2732 = vadd.f32 %v2731, %v2541
      %v2733 = vadd.f32 %v2732, %v2542
      %v2734 = vadd.f32 %v2733, %v2543
      %v2735 = vadd.f32 %v2734, %v2544
      %v2736 = vadd.f32 %v2735, %v2545
      %v2737 = vadd.f32 %v2736, %v2546
      %v2738 = vadd.f32 %v2737, %v2547
      %v2739 = vadd.f32 %v2738, %v2548
      %v2740 = vadd.f32 %v2739, %v2549
      %v2741 = vadd.f32 %v2740, %v2550
      %v2742 = vrot.slane %v2741, 4
      %v2743 = vadd.f32 %v2741, %v2742
      %v2744 = vrot.slane %v2743, 2
      %v2745 = vadd.f32 %v2743, %v2744
      %v2746 = vrot.slane %v2745, 1
      %v2747 = vadd.f32 %v2745, %v2746
      %v2748 = vmul.f32 %v2519, %v2519
      %v2749 = vmul.f32 %v2520, %v2520
      %v2750 = vmul.f32 %v2521, %v2521
      %v2751 = vmul.f32 %v2522, %v2522
      %v2752 = vmul.f32 %v2523, %v2523
      %v2753 = vmul.f32 %v2524, %v2524
      %v2754 = vmul.f32 %v2525, %v2525
      %v2755 = vmul.f32 %v2526, %v2526
      %v2756 = vmul.f32 %v2527, %v2527
      %v2757 = vmul.f32 %v2528, %v2528
      %v2758 = vmul.f32 %v2529, %v2529
      %v2759 = vmul.f32 %v2530, %v2530
      %v2760 = vmul.f32 %v2531, %v2531
      %v2761 = vmul.f32 %v2532, %v2532
      %v2762 = vmul.f32 %v2533, %v2533
      %v2763 = vmul.f32 %v2534, %v2534
      %v2764 = vmul.f32 %v2535, %v2535
      %v2765 = vmul.f32 %v2536, %v2536
      %v2766 = vmul.f32 %v2537, %v2537
      %v2767 = vmul.f32 %v2538, %v2538
      %v2768 = vmul.f32 %v2539, %v2539
      %v2769 = vmul.f32 %v2540, %v2540
      %v2770 = vmul.f32 %v2541, %v2541
      %v2771 = vmul.f32 %v2542, %v2542
      %v2772 = vmul.f32 %v2543, %v2543
      %v2773 = vmul.f32 %v2544, %v2544
      %v2774 = vmul.f32 %v2545, %v2545
      %v2775 = vmul.f32 %v2546, %v2546
      %v2776 = vmul.f32 %v2547, %v2547
      %v2777 = vmul.f32 %v2548, %v2548
      %v2778 = vmul.f32 %v2549, %v2549
      %v2779 = vmul.f32 %v2550, %v2550
      %v2780 = vadd.f32 %v2748, %v2749
      %v2781 = vadd.f32 %v2780, %v2750
      %v2782 = vadd.f32 %v2781, %v2751
      %v2783 = vadd.f32 %v2782, %v2752
      %v2784 = vadd.f32 %v2783, %v2753
      %v2785 = vadd.f32 %v2784, %v2754
      %v2786 = vadd.f32 %v2785, %v2755
      %v2787 = vadd.f32 %v2786, %v2756
      %v2788 = vadd.f32 %v2787, %v2757
      %v2789 = vadd.f32 %v2788, %v2758
      %v2790 = vadd.f32 %v2789, %v2759
      %v2791 = vadd.f32 %v2790, %v2760
      %v2792 = vadd.f32 %v2791, %v2761
      %v2793 = vadd.f32 %v2792, %v2762
      %v2794 = vadd.f32 %v2793, %v2763
      %v2795 = vadd.f32 %v2794, %v2764
      %v2796 = vadd.f32 %v2795, %v2765
      %v2797 = vadd.f32 %v2796, %v2766
      %v2798 = vadd.f32 %v2797, %v2767
      %v2799 = vadd.f32 %v2798, %v2768
      %v2800 = vadd.f32 %v2799, %v2769
      %v2801 = vadd.f32 %v2800, %v2770
      %v2802 = vadd.f32 %v2801, %v2771
      %v2803 = vadd.f32 %v2802, %v2772
      %v2804 = vadd.f32 %v2803, %v2773
      %v2805 = vadd.f32 %v2804, %v2774
      %v2806 = vadd.f32 %v2805, %v2775
      %v2807 = vadd.f32 %v2806, %v2776
      %v2808 = vadd.f32 %v2807, %v2777
      %v2809 = vadd.f32 %v2808, %v2778
      %v2810 = vadd.f32 %v2809, %v2779
      %v2811 = vrot.slane %v2810, 4
      %v2812 = vadd.f32 %v2810, %v2811
      %v2813 = vrot.slane %v2812, 2
      %v2814 = vadd.f32 %v2812, %v2813
      %v2815 = vrot.slane %v2814, 1
      %v2816 = vadd.f32 %v2814, %v2815
      %vm2817 = vcmask 1040384
      %v2818 = vsel %vm2817, %v2747, %v2816
      %2819 = vst [vmem:[%s235] sm:$0x3] %v2818
      %p2820 = scmp.lt.s32.totalorder %s17, 1
      %s2821 = scalar_select %p2820, %s17, 1
      %s2822 = smul.addr %s2821, 32
      %s2823 = smul.addr %s2822, 4
      %s2824 = scalar_lea.vmem %s4, %s2823
      %p2825 = scmp.lt.s32.totalorder %s17, 1
      %s2826 = scalar_select %p2825, %s17, 1
      %s2827 = smul.addr %s2826, 2
      %s2828 = scalar_lea.vmem %s5, %s2827
      // Predicated region
      $region37: #{bottleneck_forward.5} parent=35 // pred_check
        %p2829 = pneg %p124
      $region38: #{bottleneck_forward.5} parent=35 // pred_check_branch
        %2831 = sbr.rel (%p2829) target = $region40
      $region39: #{bottleneck_forward.5} parent=35 // pred_region
        _
      $region40: #{bottleneck_forward.5} parent=35 // pred_fallthru
        _
      // Predicated region
      $region41: #{bottleneck_forward.5} parent=35 // pred_check
        %p2832 = pneg %p150
      $region42: #{bottleneck_forward.5} parent=35 // pred_check_branch
        %2834 = sbr.rel (%p2832) target = $region44
      $region43: #{bottleneck_forward.5} parent=35 // pred_region
        _
      $region44: #{bottleneck_forward.5} parent=35 // pred_fallthru
        _
    $region36: #{bottleneck_forward.5} parent=5 // pred_fallthru
      _
    %p2835 = scmp.le.s32.totalorder 2, %s12
    // Predicated region
    $region45: #{bottleneck_forward.5} parent=5 // pred_check
      %p2836 = pneg %p2835
    $region46: #{bottleneck_forward.5} parent=5 // pred_check_branch
      %2838 = sbr.rel (%p2836) target = $region48
    $region47: #{bottleneck_forward.5} parent=5 // pred_region
      %s2839 = ssub.s32 %s12, 2
      // Predicated region
      $region49: #{bottleneck_forward.5} parent=47 // pred_check
        %p2840 = pneg %p130
      $region50: #{bottleneck_forward.5} parent=47 // pred_check_branch
        %2842 = sbr.rel (%p2840) target = $region52
      $region51: #{bottleneck_forward.5} parent=47 // pred_region
        %p2843 = scmp.lt.s32.totalorder %s18, 1
        %s2844 = scalar_select %p2843, %s18, 1
        %s2845 = smul.addr %s2844, 32
        %s2846 = smul.addr %s2845, 4
        %s2847 = scalar_lea.vmem %s4, %s2846
      $region52: #{bottleneck_forward.5} parent=47 // pred_fallthru
        _
      // Predicated region
      $region53: #{bottleneck_forward.5} parent=47 // pred_check
        %p2848 = pneg %p156
      $region54: #{bottleneck_forward.5} parent=47 // pred_check_branch
        %2850 = sbr.rel (%p2848) target = $region56
      $region55: #{bottleneck_forward.5} parent=47 // pred_region
        %p2851 = scmp.lt.s32.totalorder %s18, 1
        %s2852 = scalar_select %p2851, %s18, 1
        %s2853 = smul.addr %s2852, 2
        %s2854 = scalar_lea.vmem %s5, %s2853
      $region56: #{bottleneck_forward.5} parent=47 // pred_fallthru
        _
    $region48: #{bottleneck_forward.5} parent=5 // pred_fallthru
      _
  $region6: #{bottleneck_forward.5} parent=0 // loop_footer
    %s16 = sadd.s32 1, %s12
  $region7: #{bottleneck_forward.5} parent=0 // loop_footer_branch
    %11 = sbr.rel target = $region3
  $region8: #{bottleneck_forward.5} parent=0 // loop_exit
    _

</llo_original>
